<compile_context>
chip_gen: v6e
topology: v6e:2x2x1
jax: 0.10.0
libtpu: 0.0.40
codegen_flags: <defaults>
</compile_context>

<pallas_src>
import jax
import jax.numpy as jnp
from jax.experimental import pallas as pl
from jax.experimental.pallas import tpu as pltpu

EPS = 1e-5


def dqn_conv_kernel(x_ref, ml_ref, mr_ref,
                    w1_ref, s1_ref, t1_ref,
                    w2_ref, s2_ref, t2_ref,
                    w3_ref, s3_ref, t3_ref,
                    wfc_ref, mfc_ref, col_ref, red_ref, bfc_ref,
                    o_ref, scr64_ref, scr128_ref):
    """One batch tile (B_TILE samples) per grid step.

    x_ref   : (R, 2)        R = B_TILE * W rows (sample-major, width-minor)
    ml/mr   : (R, 1)        0. at rows where w==0 / w==W-1 (sample edges)
    w1_ref  : (2, 64)       conv1 (1x1) weight
    w2_ref  : (3, 64, 128)  conv2 (1x3) weight, tap-major
    w3_ref  : (3, 128, 64)  conv3 (1x3) weight, tap-major
    s*/t*   : (1, C)        fused BN(eval)+bias scale / shift
    wfc_ref : (64, W*A)     fc weight stacked as [c, w*A + a]
    mfc_ref : (R, W*A)      1. where w == r % W else 0.
    col_ref : (W*A, A_pad)  collapses column w*A+a -> action a (zero padded)
    red_ref : (B_TILE, R)   1. where r // W == b   (per-sample row sum)
    bfc_ref : (1, A_pad)
    o_ref   : (B_TILE, A_pad)
    scr64_ref / scr128_ref : (R+2, 64) / (R+2, 128) shift scratch buffers
    """
    f32 = jnp.float32
    R = x_ref.shape[0]

    # Boundary masks as booleans; used with jnp.where so the (never written)
    # scratch pad rows may hold arbitrary bits without polluting results.
    ml = ml_ref[...] != 0.0                       # (R, 1)
    mr = mr_ref[...] != 0.0                       # (R, 1)

    def conv1x3(h, scr_ref, wk_ref):
        """(1,3) conv with padding (0,1) as three shifted large-M matmuls."""
        scr_ref[pl.ds(1, R), :] = h                                 # rows 1..R
        left = jnp.where(ml, scr_ref[pl.ds(0, R), :], 0.0)          # h[r-1]
        right = jnp.where(mr, scr_ref[pl.ds(2, R), :], 0.0)         # h[r+1]
        acc = jnp.dot(left, wk_ref[0], preferred_element_type=f32)
        acc = acc + jnp.dot(h, wk_ref[1], preferred_element_type=f32)
        acc = acc + jnp.dot(right, wk_ref[2], preferred_element_type=f32)
        return acc

    # conv1 (1x1) + BN + ReLU                                    -> (R, 64)
    h = jnp.dot(x_ref[...], w1_ref[...], preferred_element_type=f32)
    h = jnp.maximum(h * s1_ref[...] + t1_ref[...], 0.0)

    # conv2 (1x3, pad 1) + BN + ReLU                             -> (R, 128)
    h = conv1x3(h, scr64_ref, w2_ref)
    h = jnp.maximum(h * s2_ref[...] + t2_ref[...], 0.0)

    # conv3 (1x3, pad 1) + BN + ReLU                             -> (R, 64)
    h = conv1x3(h, scr128_ref, w3_ref)
    h = jnp.maximum(h * s3_ref[...] + t3_ref[...], 0.0)

    # FC over the torch channel-major flatten, as large-M matmuls:
    #   p[r, w*A + a] = h[r, :] . Wfc[w, :, a]
    # keep only entries with w == r % W, collapse over w, then sum the W rows
    # of each sample with a 0/1 reduction matmul (all on the MXU).
    p = jnp.dot(h, wfc_ref[...], preferred_element_type=f32)        # (R, W*A)
    p = p * mfc_ref[...]
    q = jnp.dot(p, col_ref[...], preferred_element_type=f32)        # (R, A_pad)
    out = jnp.dot(red_ref[...], q, preferred_element_type=f32)      # (B_T, A_pad)
    o_ref[...] = out + bfc_ref[...]


def dqn_conv_forward(x_nchw, kparams, *, b_tile=16):
    """x_nchw: (B, 2, 1, W) float32 -> (B, n_actions)."""
    B, Cin, H, W = x_nchw.shape
    assert Cin == 2 and H == 1
    (w1, s1, t1, w2, s2, t2, w3, s3, t3, wfc_stack, fcb) = kparams
    A = int(fcb.shape[-1])
    WA = W * A
    A_pad = -(-A // 128) * 128                    # lane-dense output slab
    nt = -(-B // b_tile)                          # number of grid tiles
    Bp = nt * b_tile
    R = b_tile * W                                # rows (matmul M dim) per step

    # NCHW -> rows (Bp*W, 2); pad the ragged batch tile with zeros.
    # (Tiny transpose; fuses with the pad/reshape on the XLA side.)
    x = jnp.transpose(x_nchw[:, :, 0, :], (0, 2, 1)).astype(jnp.float32)
    if Bp != B:
        x = jnp.concatenate([x, jnp.zeros((Bp - B, W, 2), jnp.float32)], axis=0)
    x_rows = x.reshape(Bp * W, 2)

    # Per-tile constants (identical for every grid step -> stay VMEM-resident).
    rw = jnp.arange(R, dtype=jnp.int32) % W
    mask_l = (rw != 0).astype(jnp.float32)[:, None]           # (R, 1)
    mask_r = (rw != W - 1).astype(jnp.float32)[:, None]       # (R, 1)
    mfc = jnp.repeat(
        (rw[:, None] == jnp.arange(W)[None, :]).astype(jnp.float32),
        A, axis=1)                                            # (R, W*A)
    collapse = jnp.zeros((WA, A_pad), jnp.float32).at[:, :A].set(
        jnp.tile(jnp.eye(A, dtype=jnp.float32), (W, 1)))      # (W*A, A_pad)
    red = (jnp.arange(R, dtype=jnp.int32)[None, :] // W
           == jnp.arange(b_tile, dtype=jnp.int32)[:, None]
           ).astype(jnp.float32)                              # (b_tile, R)
    bfc_p = jnp.zeros((1, A_pad), jnp.float32).at[:, :A].set(fcb.reshape(1, A))

    consts = (mask_l, mask_r, w1, s1, t1, w2, s2, t2, w3, s3, t3,
              wfc_stack, mfc, collapse, red, bfc_p)

    def full_spec(a):
        nd = a.ndim
        return pl.BlockSpec(a.shape, lambda i, _nd=nd: (0,) * _nd)

    in_specs = [pl.BlockSpec((R, 2), lambda i: (i, 0))]
    in_specs += [full_spec(a) for a in consts]

    out = pl.pallas_call(
        dqn_conv_kernel,
        out_shape=jax.ShapeDtypeStruct((Bp, A_pad), jnp.float32),
        grid_spec=pltpu.PrefetchScalarGridSpec(
            num_scalar_prefetch=0,
            grid=(nt,),
            in_specs=in_specs,
            out_specs=pl.BlockSpec((b_tile, A_pad), lambda i: (i, 0)),
            scratch_shapes=[pltpu.VMEM((R + 2, 64), jnp.float32),
                            pltpu.VMEM((R + 2, 128), jnp.float32)],
        ),
        compiler_params=pltpu.CompilerParams(
            dimension_semantics=("parallel",)),
    )(x_rows, *consts)

    return out[:B, :A]


# ----------------------------- parameter setup -----------------------------

def init_raw_params(key, n_obs, n_actions):
    ks = jax.random.split(key, 24)
    nrm = lambda k, s, sc=0.1: jax.random.normal(k, s, jnp.float32) * sc
    uni = lambda k, s: jax.random.uniform(k, s, jnp.float32, 0.5, 1.5)
    return dict(
        w1=nrm(ks[0], (64, 2, 1, 1)), b1=nrm(ks[1], (64,)),
        g1=uni(ks[2], (64,)), be1=nrm(ks[3], (64,)),
        m1=nrm(ks[4], (64,)), v1=uni(ks[5], (64,)),
        w2=nrm(ks[6], (128, 64, 1, 3)), b2=nrm(ks[7], (128,)),
        g2=uni(ks[8], (128,)), be2=nrm(ks[9], (128,)),
        m2=nrm(ks[10], (128,)), v2=uni(ks[11], (128,)),
        w3=nrm(ks[12], (64, 128, 1, 3)), b3=nrm(ks[13], (64,)),
        g3=uni(ks[14], (64,)), be3=nrm(ks[15], (64,)),
        m3=nrm(ks[16], (64,)), v3=uni(ks[17], (64,)),
        fcw=nrm(ks[18], (n_actions, 64 * n_obs)), fcb=nrm(ks[19], (n_actions,)),
    )


def to_kernel_params(p, n_obs, n_actions):
    def fold(w, b, g, be, m, v):
        s = g / jnp.sqrt(v + EPS)                       # (O,)
        wk = jnp.transpose(w[:, :, 0, :], (2, 1, 0))    # (K, I, O)
        return wk, s[None, :], ((b - m) * s + be)[None, :]

    w1k, s1, t1 = fold(p["w1"], p["b1"], p["g1"], p["be1"], p["m1"], p["v1"])
    w2k, s2, t2 = fold(p["w2"], p["b2"], p["g2"], p["be2"], p["m2"], p["v2"])
    w3k, s3, t3 = fold(p["w3"], p["b3"], p["g3"], p["be3"], p["m3"], p["v3"])
    # torch flatten index = c*W + w  ->  stacked fc weight index [c, w*A + a]
    wfc_stack = jnp.transpose(
        p["fcw"].reshape(n_actions, 64, n_obs), (1, 2, 0)
    ).reshape(64, n_obs * n_actions)
    return (w1k[0], s1, t1, w2k, s2, t2, w3k, s3, t3, wfc_stack, p["fcb"])


# ------------------------------ reference ----------------------------------

def torch_reference(x, p):
    def conv(h, w, b, pad):
        y = jax.lax.conv_general_dilated(
            h, w, window_strides=(1, 1),
            padding=((0, 0), (pad, pad)),
            dimension_numbers=("NCHW", "OIHW", "NCHW"))
        return y + b[None, :, None, None]

    def bn(h, g, be, m, v):
        return (h - m[None, :, None, None]) * (
            g[None, :, None, None] / jnp.sqrt(v[None, :, None, None] + EPS)
        ) + be[None, :, None, None]

    h = jax.nn.relu(bn(conv(x, p["w1"], p["b1"], 0),
                       p["g1"], p["be1"], p["m1"], p["v1"]))
    h = jax.nn.relu(bn(conv(h, p["w2"], p["b2"], 1),
                       p["g2"], p["be2"], p["m2"], p["v2"]))
    h = jax.nn.relu(bn(conv(h, p["w3"], p["b3"], 1),
                       p["g3"], p["be3"], p["m3"], p["v3"]))
    flat = h.reshape(h.shape[0], -1)                     # torch NCHW flatten
    return flat @ p["fcw"].T + p["fcb"][None, :]


if __name__ == "__main__":
    key = jax.random.PRNGKey(0)
    kx1, kx2, kp = jax.random.split(key, 3)

    n_obs, n_actions = 16, 4                    # input (B, 2, 1, n_obs)
    raw = init_raw_params(kp, n_obs, n_actions)
    kparams = to_kernel_params(raw, n_obs, n_actions)

    # Case 1: small batch, padded up to a single B_TILE=16 tile.
    x1 = jax.random.normal(kx1, (2, 2, 1, n_obs), jnp.float32)
    out1 = jax.block_until_ready(dqn_conv_forward(x1, kparams, b_tile=16))
    ref1 = torch_reference(x1, raw)
    assert out1.shape == (2, n_actions)
    assert jnp.allclose(out1, ref1, rtol=1e-3, atol=2e-3), (out1, ref1)

    # Case 2: ragged batch over several grid tiles (exercises padding + grid).
    x2 = jax.random.normal(kx2, (19, 2, 1, n_obs), jnp.float32)
    out2 = jax.block_until_ready(dqn_conv_forward(x2, kparams, b_tile=8))
    ref2 = torch_reference(x2, raw)
    assert out2.shape == (19, n_actions)
    assert jnp.allclose(out2, ref2, rtol=1e-3, atol=2e-3), (out2, ref2)

    print("KERNEL_OK")
</pallas_src>

<mosaic_0001>
module attributes {stable_mosaic.version = 11 : i64} {
  func.func @dqn_conv_kernel(%arg0: i32, %arg1: memref<256x2xf32, #tpu.memory_space<vmem>>, %arg2: memref<256x1xf32, #tpu.memory_space<vmem>>, %arg3: memref<256x1xf32, #tpu.memory_space<vmem>>, %arg4: memref<2x64xf32, #tpu.memory_space<vmem>>, %arg5: memref<1x64xf32, #tpu.memory_space<vmem>>, %arg6: memref<1x64xf32, #tpu.memory_space<vmem>>, %arg7: memref<3x64x128xf32, #tpu.memory_space<vmem>>, %arg8: memref<1x128xf32, #tpu.memory_space<vmem>>, %arg9: memref<1x128xf32, #tpu.memory_space<vmem>>, %arg10: memref<3x128x64xf32, #tpu.memory_space<vmem>>, %arg11: memref<1x64xf32, #tpu.memory_space<vmem>>, %arg12: memref<1x64xf32, #tpu.memory_space<vmem>>, %arg13: memref<64x64xf32, #tpu.memory_space<vmem>>, %arg14: memref<256x64xf32, #tpu.memory_space<vmem>>, %arg15: memref<64x128xf32, #tpu.memory_space<vmem>>, %arg16: memref<16x256xf32, #tpu.memory_space<vmem>>, %arg17: memref<1x128xf32, #tpu.memory_space<vmem>>, %arg18: memref<16x128xf32, #tpu.memory_space<vmem>>, %arg19: memref<258x64xf32, #tpu.memory_space<vmem>>, %arg20: memref<258x128xf32, #tpu.memory_space<vmem>>) attributes {dimension_semantics = [#tpu.dimension_semantics<parallel>], iteration_bounds = array<i64: 1>, scalar_prefetch = 0 : i64, scratch_operands = 2 : i64, tpu.core_type = #tpu.core_type<tc>, window_params = [{transform_indices = @transform_0, window_bounds = array<i64: 256, 2>}, {pipeline_mode = #tpu.pipeline_mode<synchronous>, transform_indices = @transform_1, window_bounds = array<i64: 256, 1>}, {pipeline_mode = #tpu.pipeline_mode<synchronous>, transform_indices = @transform_2, window_bounds = array<i64: 256, 1>}, {pipeline_mode = #tpu.pipeline_mode<synchronous>, transform_indices = @transform_3, window_bounds = array<i64: 2, 64>}, {pipeline_mode = #tpu.pipeline_mode<synchronous>, transform_indices = @transform_4, window_bounds = array<i64: 1, 64>}, {pipeline_mode = #tpu.pipeline_mode<synchronous>, transform_indices = @transform_5, window_bounds = array<i64: 1, 64>}, {pipeline_mode = #tpu.pipeline_mode<synchronous>, transform_indices = @transform_6, window_bounds = array<i64: 3, 64, 128>}, {pipeline_mode = #tpu.pipeline_mode<synchronous>, transform_indices = @transform_7, window_bounds = array<i64: 1, 128>}, {pipeline_mode = #tpu.pipeline_mode<synchronous>, transform_indices = @transform_8, window_bounds = array<i64: 1, 128>}, {pipeline_mode = #tpu.pipeline_mode<synchronous>, transform_indices = @transform_9, window_bounds = array<i64: 3, 128, 64>}, {pipeline_mode = #tpu.pipeline_mode<synchronous>, transform_indices = @transform_10, window_bounds = array<i64: 1, 64>}, {pipeline_mode = #tpu.pipeline_mode<synchronous>, transform_indices = @transform_11, window_bounds = array<i64: 1, 64>}, {pipeline_mode = #tpu.pipeline_mode<synchronous>, transform_indices = @transform_12, window_bounds = array<i64: 64, 64>}, {pipeline_mode = #tpu.pipeline_mode<synchronous>, transform_indices = @transform_13, window_bounds = array<i64: 256, 64>}, {pipeline_mode = #tpu.pipeline_mode<synchronous>, transform_indices = @transform_14, window_bounds = array<i64: 64, 128>}, {pipeline_mode = #tpu.pipeline_mode<synchronous>, transform_indices = @transform_15, window_bounds = array<i64: 16, 256>}, {pipeline_mode = #tpu.pipeline_mode<synchronous>, transform_indices = @transform_16, window_bounds = array<i64: 1, 128>}, {transform_indices = @transform_17, window_bounds = array<i64: 16, 128>}]} {
    %c0 = arith.constant 0 : index
    %c0_0 = arith.constant 0 : index
    %0 = vector.load %arg2[%c0, %c0_0] : memref<256x1xf32, #tpu.memory_space<vmem>>, vector<256x1xf32>
    %cst = arith.constant 0.000000e+00 : f32
    %1 = vector.broadcast %cst : f32 to vector<256x1xf32>
    %2 = arith.cmpf one, %0, %1 : vector<256x1xf32>
    %c0_1 = arith.constant 0 : index
    %c0_2 = arith.constant 0 : index
    %3 = vector.load %arg3[%c0_1, %c0_2] : memref<256x1xf32, #tpu.memory_space<vmem>>, vector<256x1xf32>
    %cst_3 = arith.constant 0.000000e+00 : f32
    %4 = vector.broadcast %cst_3 : f32 to vector<256x1xf32>
    %5 = arith.cmpf one, %3, %4 : vector<256x1xf32>
    %c0_4 = arith.constant 0 : index
    %c0_5 = arith.constant 0 : index
    %6 = vector.load %arg1[%c0_4, %c0_5] : memref<256x2xf32, #tpu.memory_space<vmem>>, vector<256x2xf32>
    %c0_6 = arith.constant 0 : index
    %c0_7 = arith.constant 0 : index
    %7 = vector.load %arg4[%c0_6, %c0_7] : memref<2x64xf32, #tpu.memory_space<vmem>>, vector<2x64xf32>
    %cst_8 = arith.constant dense<0.000000e+00> : vector<256x64xf32>
    %8 = tpu.matmul %6, %7, %cst_8 {dimension_numbers = #tpu.dot_dimension_numbers<[1], [0], [0], [1], [0, 0, 1, 1], [], []>} : vector<256x2xf32>, vector<2x64xf32>, vector<256x64xf32> -> vector<256x64xf32>
    %c0_9 = arith.constant 0 : index
    %c0_10 = arith.constant 0 : index
    %9 = vector.load %arg5[%c0_9, %c0_10] : memref<1x64xf32, #tpu.memory_space<vmem>>, vector<1x64xf32>
    %10 = vector.broadcast %9 : vector<1x64xf32> to vector<256x64xf32>
    %11 = arith.mulf %8, %10 : vector<256x64xf32>
    %c0_11 = arith.constant 0 : index
    %c0_12 = arith.constant 0 : index
    %12 = vector.load %arg6[%c0_11, %c0_12] : memref<1x64xf32, #tpu.memory_space<vmem>>, vector<1x64xf32>
    %13 = vector.broadcast %12 : vector<1x64xf32> to vector<256x64xf32>
    %14 = arith.addf %11, %13 : vector<256x64xf32>
    %cst_13 = arith.constant 0.000000e+00 : f32
    %15 = vector.broadcast %cst_13 : f32 to vector<256x64xf32>
    %16 = arith.maximumf %14, %15 : vector<256x64xf32>
    %c1 = arith.constant 1 : index
    %c0_14 = arith.constant 0 : index
    %17 = vector.load %arg19[%c1, %c0_14] : memref<258x64xf32, #tpu.memory_space<vmem>>, vector<256x64xf32>
    tpu.vector_store %arg19[%c1, %c0_14], %16 {strides = array<i32>} : memref<258x64xf32, #tpu.memory_space<vmem>>, vector<256x64xf32>,
    %c0_15 = arith.constant 0 : index
    %c0_16 = arith.constant 0 : index
    %18 = vector.load %arg19[%c0_15, %c0_16] : memref<258x64xf32, #tpu.memory_space<vmem>>, vector<256x64xf32>
    %cst_17 = arith.constant 0.000000e+00 : f32
    %19 = vector.shape_cast %2 : vector<256x1xi1> to vector<256x1xi1>
    %20 = vector.broadcast %19 : vector<256x1xi1> to vector<256x64xi1>
    %21 = vector.broadcast %cst_17 : f32 to vector<256x64xf32>
    %22 = arith.select %20, %18, %21 : vector<256x64xi1>, vector<256x64xf32>
    %c2 = arith.constant 2 : index
    %c0_18 = arith.constant 0 : index
    %23 = vector.load %arg19[%c2, %c0_18] : memref<258x64xf32, #tpu.memory_space<vmem>>, vector<256x64xf32>
    %cst_19 = arith.constant 0.000000e+00 : f32
    %24 = vector.shape_cast %5 : vector<256x1xi1> to vector<256x1xi1>
    %25 = vector.broadcast %24 : vector<256x1xi1> to vector<256x64xi1>
    %26 = vector.broadcast %cst_19 : f32 to vector<256x64xf32>
    %27 = arith.select %25, %23, %26 : vector<256x64xi1>, vector<256x64xf32>
    %c0_20 = arith.constant 0 : index
    %c0_21 = arith.constant 0 : index
    %c0_22 = arith.constant 0 : index
    %28 = vector.load %arg7[%c0_20, %c0_21, %c0_22] : memref<3x64x128xf32, #tpu.memory_space<vmem>>, vector<1x64x128xf32>
    %29 = vector.shape_cast %28 : vector<1x64x128xf32> to vector<64x128xf32>
    %cst_23 = arith.constant dense<0.000000e+00> : vector<256x128xf32>
    %30 = tpu.matmul %22, %29, %cst_23 {dimension_numbers = #tpu.dot_dimension_numbers<[1], [0], [0], [1], [0, 0, 1, 1], [], []>} : vector<256x64xf32>, vector<64x128xf32>, vector<256x128xf32> -> vector<256x128xf32>
    %c1_24 = arith.constant 1 : index
    %c0_25 = arith.constant 0 : index
    %c0_26 = arith.constant 0 : index
    %31 = vector.load %arg7[%c1_24, %c0_25, %c0_26] : memref<3x64x128xf32, #tpu.memory_space<vmem>>, vector<1x64x128xf32>
    %32 = vector.shape_cast %31 : vector<1x64x128xf32> to vector<64x128xf32>
    %cst_27 = arith.constant dense<0.000000e+00> : vector<256x128xf32>
    %33 = tpu.matmul %16, %32, %cst_27 {dimension_numbers = #tpu.dot_dimension_numbers<[1], [0], [0], [1], [0, 0, 1, 1], [], []>} : vector<256x64xf32>, vector<64x128xf32>, vector<256x128xf32> -> vector<256x128xf32>
    %34 = arith.addf %30, %33 : vector<256x128xf32>
    %c2_28 = arith.constant 2 : index
    %c0_29 = arith.constant 0 : index
    %c0_30 = arith.constant 0 : index
    %35 = vector.load %arg7[%c2_28, %c0_29, %c0_30] : memref<3x64x128xf32, #tpu.memory_space<vmem>>, vector<1x64x128xf32>
    %36 = vector.shape_cast %35 : vector<1x64x128xf32> to vector<64x128xf32>
    %cst_31 = arith.constant dense<0.000000e+00> : vector<256x128xf32>
    %37 = tpu.matmul %27, %36, %cst_31 {dimension_numbers = #tpu.dot_dimension_numbers<[1], [0], [0], [1], [0, 0, 1, 1], [], []>} : vector<256x64xf32>, vector<64x128xf32>, vector<256x128xf32> -> vector<256x128xf32>
    %38 = arith.addf %34, %37 : vector<256x128xf32>
    %c0_32 = arith.constant 0 : index
    %c0_33 = arith.constant 0 : index
    %39 = vector.load %arg8[%c0_32, %c0_33] : memref<1x128xf32, #tpu.memory_space<vmem>>, vector<1x128xf32>
    %40 = vector.broadcast %39 : vector<1x128xf32> to vector<256x128xf32>
    %41 = arith.mulf %38, %40 : vector<256x128xf32>
    %c0_34 = arith.constant 0 : index
    %c0_35 = arith.constant 0 : index
    %42 = vector.load %arg9[%c0_34, %c0_35] : memref<1x128xf32, #tpu.memory_space<vmem>>, vector<1x128xf32>
    %43 = vector.broadcast %42 : vector<1x128xf32> to vector<256x128xf32>
    %44 = arith.addf %41, %43 : vector<256x128xf32>
    %cst_36 = arith.constant 0.000000e+00 : f32
    %45 = vector.broadcast %cst_36 : f32 to vector<256x128xf32>
    %46 = arith.maximumf %44, %45 : vector<256x128xf32>
    %c1_37 = arith.constant 1 : index
    %c0_38 = arith.constant 0 : index
    %47 = vector.load %arg20[%c1_37, %c0_38] : memref<258x128xf32, #tpu.memory_space<vmem>>, vector<256x128xf32>
    tpu.vector_store %arg20[%c1_37, %c0_38], %46 {strides = array<i32>} : memref<258x128xf32, #tpu.memory_space<vmem>>, vector<256x128xf32>,
    %c0_39 = arith.constant 0 : index
    %c0_40 = arith.constant 0 : index
    %48 = vector.load %arg20[%c0_39, %c0_40] : memref<258x128xf32, #tpu.memory_space<vmem>>, vector<256x128xf32>
    %cst_41 = arith.constant 0.000000e+00 : f32
    %49 = vector.shape_cast %2 : vector<256x1xi1> to vector<256x1xi1>
    %50 = vector.broadcast %49 : vector<256x1xi1> to vector<256x128xi1>
    %51 = vector.broadcast %cst_41 : f32 to vector<256x128xf32>
    %52 = arith.select %50, %48, %51 : vector<256x128xi1>, vector<256x128xf32>
    %c2_42 = arith.constant 2 : index
    %c0_43 = arith.constant 0 : index
    %53 = vector.load %arg20[%c2_42, %c0_43] : memref<258x128xf32, #tpu.memory_space<vmem>>, vector<256x128xf32>
    %cst_44 = arith.constant 0.000000e+00 : f32
    %54 = vector.shape_cast %5 : vector<256x1xi1> to vector<256x1xi1>
    %55 = vector.broadcast %54 : vector<256x1xi1> to vector<256x128xi1>
    %56 = vector.broadcast %cst_44 : f32 to vector<256x128xf32>
    %57 = arith.select %55, %53, %56 : vector<256x128xi1>, vector<256x128xf32>
    %c0_45 = arith.constant 0 : index
    %c0_46 = arith.constant 0 : index
    %c0_47 = arith.constant 0 : index
    %58 = vector.load %arg10[%c0_45, %c0_46, %c0_47] : memref<3x128x64xf32, #tpu.memory_space<vmem>>, vector<1x128x64xf32>
    %59 = vector.shape_cast %58 : vector<1x128x64xf32> to vector<128x64xf32>
    %cst_48 = arith.constant dense<0.000000e+00> : vector<256x64xf32>
    %60 = tpu.matmul %52, %59, %cst_48 {dimension_numbers = #tpu.dot_dimension_numbers<[1], [0], [0], [1], [0, 0, 1, 1], [], []>} : vector<256x128xf32>, vector<128x64xf32>, vector<256x64xf32> -> vector<256x64xf32>
    %c1_49 = arith.constant 1 : index
    %c0_50 = arith.constant 0 : index
    %c0_51 = arith.constant 0 : index
    %61 = vector.load %arg10[%c1_49, %c0_50, %c0_51] : memref<3x128x64xf32, #tpu.memory_space<vmem>>, vector<1x128x64xf32>
    %62 = vector.shape_cast %61 : vector<1x128x64xf32> to vector<128x64xf32>
    %cst_52 = arith.constant dense<0.000000e+00> : vector<256x64xf32>
    %63 = tpu.matmul %46, %62, %cst_52 {dimension_numbers = #tpu.dot_dimension_numbers<[1], [0], [0], [1], [0, 0, 1, 1], [], []>} : vector<256x128xf32>, vector<128x64xf32>, vector<256x64xf32> -> vector<256x64xf32>
    %64 = arith.addf %60, %63 : vector<256x64xf32>
    %c2_53 = arith.constant 2 : index
    %c0_54 = arith.constant 0 : index
    %c0_55 = arith.constant 0 : index
    %65 = vector.load %arg10[%c2_53, %c0_54, %c0_55] : memref<3x128x64xf32, #tpu.memory_space<vmem>>, vector<1x128x64xf32>
    %66 = vector.shape_cast %65 : vector<1x128x64xf32> to vector<128x64xf32>
    %cst_56 = arith.constant dense<0.000000e+00> : vector<256x64xf32>
    %67 = tpu.matmul %57, %66, %cst_56 {dimension_numbers = #tpu.dot_dimension_numbers<[1], [0], [0], [1], [0, 0, 1, 1], [], []>} : vector<256x128xf32>, vector<128x64xf32>, vector<256x64xf32> -> vector<256x64xf32>
    %68 = arith.addf %64, %67 : vector<256x64xf32>
    %c0_57 = arith.constant 0 : index
    %c0_58 = arith.constant 0 : index
    %69 = vector.load %arg11[%c0_57, %c0_58] : memref<1x64xf32, #tpu.memory_space<vmem>>, vector<1x64xf32>
    %70 = vector.broadcast %69 : vector<1x64xf32> to vector<256x64xf32>
    %71 = arith.mulf %68, %70 : vector<256x64xf32>
    %c0_59 = arith.constant 0 : index
    %c0_60 = arith.constant 0 : index
    %72 = vector.load %arg12[%c0_59, %c0_60] : memref<1x64xf32, #tpu.memory_space<vmem>>, vector<1x64xf32>
    %73 = vector.broadcast %72 : vector<1x64xf32> to vector<256x64xf32>
    %74 = arith.addf %71, %73 : vector<256x64xf32>
    %cst_61 = arith.constant 0.000000e+00 : f32
    %75 = vector.broadcast %cst_61 : f32 to vector<256x64xf32>
    %76 = arith.maximumf %74, %75 : vector<256x64xf32>
    %c0_62 = arith.constant 0 : index
    %c0_63 = arith.constant 0 : index
    %77 = vector.load %arg13[%c0_62, %c0_63] : memref<64x64xf32, #tpu.memory_space<vmem>>, vector<64x64xf32>
    %cst_64 = arith.constant dense<0.000000e+00> : vector<256x64xf32>
    %78 = tpu.matmul %76, %77, %cst_64 {dimension_numbers = #tpu.dot_dimension_numbers<[1], [0], [0], [1], [0, 0, 1, 1], [], []>} : vector<256x64xf32>, vector<64x64xf32>, vector<256x64xf32> -> vector<256x64xf32>
    %c0_65 = arith.constant 0 : index
    %c0_66 = arith.constant 0 : index
    %79 = vector.load %arg14[%c0_65, %c0_66] : memref<256x64xf32, #tpu.memory_space<vmem>>, vector<256x64xf32>
    %80 = arith.mulf %78, %79 : vector<256x64xf32>
    %c0_67 = arith.constant 0 : index
    %c0_68 = arith.constant 0 : index
    %81 = vector.load %arg15[%c0_67, %c0_68] : memref<64x128xf32, #tpu.memory_space<vmem>>, vector<64x128xf32>
    %cst_69 = arith.constant dense<0.000000e+00> : vector<256x128xf32>
    %82 = tpu.matmul %80, %81, %cst_69 {dimension_numbers = #tpu.dot_dimension_numbers<[1], [0], [0], [1], [0, 0, 1, 1], [], []>} : vector<256x64xf32>, vector<64x128xf32>, vector<256x128xf32> -> vector<256x128xf32>
    %c0_70 = arith.constant 0 : index
    %c0_71 = arith.constant 0 : index
    %83 = vector.load %arg16[%c0_70, %c0_71] : memref<16x256xf32, #tpu.memory_space<vmem>>, vector<16x256xf32>
    %cst_72 = arith.constant dense<0.000000e+00> : vector<16x128xf32>
    %84 = tpu.matmul %83, %82, %cst_72 {dimension_numbers = #tpu.dot_dimension_numbers<[1], [0], [0], [1], [0, 0, 1, 1], [], []>} : vector<16x256xf32>, vector<256x128xf32>, vector<16x128xf32> -> vector<16x128xf32>
    %c0_73 = arith.constant 0 : index
    %c0_74 = arith.constant 0 : index
    %85 = vector.load %arg17[%c0_73, %c0_74] : memref<1x128xf32, #tpu.memory_space<vmem>>, vector<1x128xf32>
    %86 = vector.broadcast %85 : vector<1x128xf32> to vector<16x128xf32>
    %87 = arith.addf %84, %86 : vector<16x128xf32>
    %c0_75 = arith.constant 0 : index
    %c0_76 = arith.constant 0 : index
    %88 = vector.load %arg18[%c0_75, %c0_76] : memref<16x128xf32, #tpu.memory_space<vmem>>, vector<16x128xf32>
    tpu.vector_store %arg18[%c0_75, %c0_76], %87 {strides = array<i32>} : memref<16x128xf32, #tpu.memory_space<vmem>>, vector<16x128xf32>,
    return
  }
  func.func @transform_0(%arg0: i32) -> (i32, i32) {
    %c0_i32 = arith.constant 0 : i32
    %c0_i32_0 = arith.constant 0 : i32
    return %arg0, %c0_i32 : i32, i32
  }
  func.func @transform_1(%arg0: i32) -> (i32, i32) {
    %c0_i32 = arith.constant 0 : i32
    %c0_i32_0 = arith.constant 0 : i32
    %c0_i32_1 = arith.constant 0 : i32
    return %c0_i32, %c0_i32_0 : i32, i32
  }
  func.func @transform_2(%arg0: i32) -> (i32, i32) {
    %c0_i32 = arith.constant 0 : i32
    %c0_i32_0 = arith.constant 0 : i32
    %c0_i32_1 = arith.constant 0 : i32
    return %c0_i32, %c0_i32_0 : i32, i32
  }
  func.func @transform_3(%arg0: i32) -> (i32, i32) {
    %c0_i32 = arith.constant 0 : i32
    %c0_i32_0 = arith.constant 0 : i32
    %c0_i32_1 = arith.constant 0 : i32
    return %c0_i32, %c0_i32_0 : i32, i32
  }
  func.func @transform_4(%arg0: i32) -> (i32, i32) {
    %c0_i32 = arith.constant 0 : i32
    %c0_i32_0 = arith.constant 0 : i32
    %c0_i32_1 = arith.constant 0 : i32
    return %c0_i32, %c0_i32_0 : i32, i32
  }
  func.func @transform_5(%arg0: i32) -> (i32, i32) {
    %c0_i32 = arith.constant 0 : i32
    %c0_i32_0 = arith.constant 0 : i32
    %c0_i32_1 = arith.constant 0 : i32
    return %c0_i32, %c0_i32_0 : i32, i32
  }
  func.func @transform_6(%arg0: i32) -> (i32, i32, i32) {
    %c0_i32 = arith.constant 0 : i32
    %c0_i32_0 = arith.constant 0 : i32
    %c0_i32_1 = arith.constant 0 : i32
    %c0_i32_2 = arith.constant 0 : i32
    return %c0_i32, %c0_i32_0, %c0_i32_1 : i32, i32, i32
  }
  func.func @transform_7(%arg0: i32) -> (i32, i32) {
    %c0_i32 = arith.constant 0 : i32
    %c0_i32_0 = arith.constant 0 : i32
    %c0_i32_1 = arith.constant 0 : i32
    return %c0_i32, %c0_i32_0 : i32, i32
  }
  func.func @transform_8(%arg0: i32) -> (i32, i32) {
    %c0_i32 = arith.constant 0 : i32
    %c0_i32_0 = arith.constant 0 : i32
    %c0_i32_1 = arith.constant 0 : i32
    return %c0_i32, %c0_i32_0 : i32, i32
  }
  func.func @transform_9(%arg0: i32) -> (i32, i32, i32) {
    %c0_i32 = arith.constant 0 : i32
    %c0_i32_0 = arith.constant 0 : i32
    %c0_i32_1 = arith.constant 0 : i32
    %c0_i32_2 = arith.constant 0 : i32
    return %c0_i32, %c0_i32_0, %c0_i32_1 : i32, i32, i32
  }
  func.func @transform_10(%arg0: i32) -> (i32, i32) {
    %c0_i32 = arith.constant 0 : i32
    %c0_i32_0 = arith.constant 0 : i32
    %c0_i32_1 = arith.constant 0 : i32
    return %c0_i32, %c0_i32_0 : i32, i32
  }
  func.func @transform_11(%arg0: i32) -> (i32, i32) {
    %c0_i32 = arith.constant 0 : i32
    %c0_i32_0 = arith.constant 0 : i32
    %c0_i32_1 = arith.constant 0 : i32
    return %c0_i32, %c0_i32_0 : i32, i32
  }
  func.func @transform_12(%arg0: i32) -> (i32, i32) {
    %c0_i32 = arith.constant 0 : i32
    %c0_i32_0 = arith.constant 0 : i32
    %c0_i32_1 = arith.constant 0 : i32
    return %c0_i32, %c0_i32_0 : i32, i32
  }
  func.func @transform_13(%arg0: i32) -> (i32, i32) {
    %c0_i32 = arith.constant 0 : i32
    %c0_i32_0 = arith.constant 0 : i32
    %c0_i32_1 = arith.constant 0 : i32
    return %c0_i32, %c0_i32_0 : i32, i32
  }
  func.func @transform_14(%arg0: i32) -> (i32, i32) {
    %c0_i32 = arith.constant 0 : i32
    %c0_i32_0 = arith.constant 0 : i32
    %c0_i32_1 = arith.constant 0 : i32
    return %c0_i32, %c0_i32_0 : i32, i32
  }
  func.func @transform_15(%arg0: i32) -> (i32, i32) {
    %c0_i32 = arith.constant 0 : i32
    %c0_i32_0 = arith.constant 0 : i32
    %c0_i32_1 = arith.constant 0 : i32
    return %c0_i32, %c0_i32_0 : i32, i32
  }
  func.func @transform_16(%arg0: i32) -> (i32, i32) {
    %c0_i32 = arith.constant 0 : i32
    %c0_i32_0 = arith.constant 0 : i32
    %c0_i32_1 = arith.constant 0 : i32
    return %c0_i32, %c0_i32_0 : i32, i32
  }
  func.func @transform_17(%arg0: i32) -> (i32, i32) {
    %c0_i32 = arith.constant 0 : i32
    %c0_i32_0 = arith.constant 0 : i32
    return %arg0, %c0_i32 : i32, i32
  }
}

</mosaic_0001>

<llo_original>
// kernel: tpu_custom_call.1
$region0: #{tpu_custom_call.1}
  #allocation0 [shape = 'u32[]', space=smem, size = 0x4, offset = 0x4, fixed_abs, tag = 'smem constant byte address 0x4 - core index']
  #allocation1 [shape = 'u32[144,128]{1,0:T(1,128)}', space=vmem, size = 0x12000, scoped, tag = 'internal scratch']
  #allocation2 [shape = 'f32[258,64]{1,0:T(8,128)}', space=vmem, size = 0x21000, scoped, tag = 'scratch operand']
  #allocation3 [shape = 'f32[258,128]{1,0:T(8,128)}', space=vmem, size = 0x21000, scoped, tag = 'scratch operand']
  %s0 = inlined_call_operand.vmem [shape: f32[256,2], index: 0, kind: input, shape index: {}]
  %s1 = inlined_call_operand.vmem [shape: f32[256,1], index: 1, kind: input, shape index: {}]
  %s2 = inlined_call_operand.vmem [shape: f32[256,1], index: 2, kind: input, shape index: {}]
  %s3 = inlined_call_operand.vmem [shape: f32[2,64], index: 3, kind: input, shape index: {}]
  %s4 = inlined_call_operand.vmem [shape: f32[1,64], index: 4, kind: input, shape index: {}]
  %s5 = inlined_call_operand.vmem [shape: f32[1,64], index: 5, kind: input, shape index: {}]
  %s6 = inlined_call_operand.vmem [shape: f32[3,64,128], index: 6, kind: input, shape index: {}]
  %s7 = inlined_call_operand.vmem [shape: f32[1,128], index: 7, kind: input, shape index: {}]
  %s8 = inlined_call_operand.vmem [shape: f32[1,128], index: 8, kind: input, shape index: {}]
  %s9 = inlined_call_operand.vmem [shape: f32[3,128,64], index: 9, kind: input, shape index: {}]
  %s10 = inlined_call_operand.vmem [shape: f32[1,64], index: 10, kind: input, shape index: {}]
  %s11 = inlined_call_operand.vmem [shape: f32[1,64], index: 11, kind: input, shape index: {}]
  %s12 = inlined_call_operand.vmem [shape: f32[64,64], index: 12, kind: input, shape index: {}]
  %s13 = inlined_call_operand.vmem [shape: f32[256,64], index: 13, kind: input, shape index: {}]
  %s14 = inlined_call_operand.vmem [shape: f32[64,128], index: 14, kind: input, shape index: {}]
  %s15 = inlined_call_operand.vmem [shape: f32[16,256], index: 15, kind: input, shape index: {}]
  %s16 = inlined_call_operand.vmem [shape: f32[1,128], index: 16, kind: input, shape index: {}]
  %s17 = inlined_call_operand.hbm [shape: f32[16,128], index: 17, kind: output, shape index: {}]
  %s18 = sld [smem:[#allocation0]]
  $region78: #{tpu_custom_call.1} parent=0
    _
  %s20 = ssub.s32 1, %s18
  %s21 = scalar_select 0, %s20, %s18
  $region1: #{tpu_custom_call.1} parent=0
    #allocation4 [shape = 'u8[8192]{0}', space=vmem, size = 0x2000, scoped, tag = 'output window, operand 0, single buffered']
    #allocation5 [shape = 's32[1]{0}', space=sflag, size = 0x4, scoped, tag = 'scoped memory for tpu_custom_call.1']
    %22 = vsyncpa [#allocation5], 0
    // Predicated region
    $region2: #{tpu_custom_call.1} parent=1 // pred_check
      _
    $region3: #{tpu_custom_call.1} parent=1 // pred_check_branch
      %24 = sbr.rel (0) target = $region5
    $region4: #{tpu_custom_call.1} parent=1 // pred_region
      _
    $region5: #{tpu_custom_call.1} parent=1 // pred_fallthru
      _
    // Predicated region
    $region6: #{tpu_custom_call.1} parent=1 // pred_check
      _
    $region7: #{tpu_custom_call.1} parent=1 // pred_check_branch
      %26 = sbr.rel (0) target = $region9
    $region8: #{tpu_custom_call.1} parent=1 // pred_region
      _
    $region9: #{tpu_custom_call.1} parent=1 // pred_fallthru
      _
    // Predicated region
    $region10: #{tpu_custom_call.1} parent=1 // pred_check
      _
    $region11: #{tpu_custom_call.1} parent=1 // pred_check_branch
      %28 = sbr.rel (0) target = $region13
    $region12: #{tpu_custom_call.1} parent=1 // pred_region
      _
    $region13: #{tpu_custom_call.1} parent=1 // pred_fallthru
      _
    // Predicated region
    $region14: #{tpu_custom_call.1} parent=1 // pred_check
      _
    $region15: #{tpu_custom_call.1} parent=1 // pred_check_branch
      %30 = sbr.rel (0) target = $region17
    $region16: #{tpu_custom_call.1} parent=1 // pred_region
      _
    $region17: #{tpu_custom_call.1} parent=1 // pred_fallthru
      _
    // Predicated region
    $region18: #{tpu_custom_call.1} parent=1 // pred_check
      _
    $region19: #{tpu_custom_call.1} parent=1 // pred_check_branch
      %32 = sbr.rel (0) target = $region21
    $region20: #{tpu_custom_call.1} parent=1 // pred_region
      _
    $region21: #{tpu_custom_call.1} parent=1 // pred_fallthru
      _
    // Predicated region
    $region22: #{tpu_custom_call.1} parent=1 // pred_check
      _
    $region23: #{tpu_custom_call.1} parent=1 // pred_check_branch
      %34 = sbr.rel (0) target = $region25
    $region24: #{tpu_custom_call.1} parent=1 // pred_region
      _
    $region25: #{tpu_custom_call.1} parent=1 // pred_fallthru
      _
    // Predicated region
    $region26: #{tpu_custom_call.1} parent=1 // pred_check
      _
    $region27: #{tpu_custom_call.1} parent=1 // pred_check_branch
      %36 = sbr.rel (0) target = $region29
    $region28: #{tpu_custom_call.1} parent=1 // pred_region
      _
    $region29: #{tpu_custom_call.1} parent=1 // pred_fallthru
      _
    // Predicated region
    $region30: #{tpu_custom_call.1} parent=1 // pred_check
      _
    $region31: #{tpu_custom_call.1} parent=1 // pred_check_branch
      %38 = sbr.rel (0) target = $region33
    $region32: #{tpu_custom_call.1} parent=1 // pred_region
      _
    $region33: #{tpu_custom_call.1} parent=1 // pred_fallthru
      _
    // Predicated region
    $region34: #{tpu_custom_call.1} parent=1 // pred_check
      _
    $region35: #{tpu_custom_call.1} parent=1 // pred_check_branch
      %40 = sbr.rel (0) target = $region37
    $region36: #{tpu_custom_call.1} parent=1 // pred_region
      _
    $region37: #{tpu_custom_call.1} parent=1 // pred_fallthru
      _
    // Predicated region
    $region38: #{tpu_custom_call.1} parent=1 // pred_check
      _
    $region39: #{tpu_custom_call.1} parent=1 // pred_check_branch
      %42 = sbr.rel (0) target = $region41
    $region40: #{tpu_custom_call.1} parent=1 // pred_region
      _
    $region41: #{tpu_custom_call.1} parent=1 // pred_fallthru
      _
    // Predicated region
    $region42: #{tpu_custom_call.1} parent=1 // pred_check
      _
    $region43: #{tpu_custom_call.1} parent=1 // pred_check_branch
      %44 = sbr.rel (0) target = $region45
    $region44: #{tpu_custom_call.1} parent=1 // pred_region
      _
    $region45: #{tpu_custom_call.1} parent=1 // pred_fallthru
      _
    // Predicated region
    $region46: #{tpu_custom_call.1} parent=1 // pred_check
      _
    $region47: #{tpu_custom_call.1} parent=1 // pred_check_branch
      %46 = sbr.rel (0) target = $region49
    $region48: #{tpu_custom_call.1} parent=1 // pred_region
      _
    $region49: #{tpu_custom_call.1} parent=1 // pred_fallthru
      _
    // Predicated region
    $region50: #{tpu_custom_call.1} parent=1 // pred_check
      _
    $region51: #{tpu_custom_call.1} parent=1 // pred_check_branch
      %48 = sbr.rel (0) target = $region53
    $region52: #{tpu_custom_call.1} parent=1 // pred_region
      _
    $region53: #{tpu_custom_call.1} parent=1 // pred_fallthru
      _
    // Predicated region
    $region54: #{tpu_custom_call.1} parent=1 // pred_check
      _
    $region55: #{tpu_custom_call.1} parent=1 // pred_check_branch
      %50 = sbr.rel (0) target = $region57
    $region56: #{tpu_custom_call.1} parent=1 // pred_region
      _
    $region57: #{tpu_custom_call.1} parent=1 // pred_fallthru
      _
    // Predicated region
    $region58: #{tpu_custom_call.1} parent=1 // pred_check
      _
    $region59: #{tpu_custom_call.1} parent=1 // pred_check_branch
      %52 = sbr.rel (0) target = $region61
    $region60: #{tpu_custom_call.1} parent=1 // pred_region
      _
    $region61: #{tpu_custom_call.1} parent=1 // pred_fallthru
      _
    // Predicated region
    $region62: #{tpu_custom_call.1} parent=1 // pred_check
      _
    $region63: #{tpu_custom_call.1} parent=1 // pred_check_branch
      %54 = sbr.rel (0) target = $region65
    $region64: #{tpu_custom_call.1} parent=1 // pred_region
      _
    $region65: #{tpu_custom_call.1} parent=1 // pred_fallthru
      _
    // Predicated region
    $region66: #{tpu_custom_call.1} parent=1 // pred_check
      _
    $region67: #{tpu_custom_call.1} parent=1 // pred_check_branch
      %56 = sbr.rel (0) target = $region69
    $region68: #{tpu_custom_call.1} parent=1 // pred_region
      _
    $region69: #{tpu_custom_call.1} parent=1 // pred_fallthru
      _
    %v57 = vld [vmem:[%s1] sm:$0xff]
    %v58 = vld [vmem:[%s1 + $0x8] sm:$0xff]
    %v59 = vld [vmem:[%s1 + $0x10] sm:$0xff]
    %v60 = vld [vmem:[%s1 + $0x18] sm:$0xff]
    %v61 = vld [vmem:[%s1 + $0x20] sm:$0xff]
    %v62 = vld [vmem:[%s1 + $0x28] sm:$0xff]
    %v63 = vld [vmem:[%s1 + $0x30] sm:$0xff]
    %v64 = vld [vmem:[%s1 + $0x38] sm:$0xff]
    %v65 = vld [vmem:[%s1 + $0x40] sm:$0xff]
    %v66 = vld [vmem:[%s1 + $0x48] sm:$0xff]
    %v67 = vld [vmem:[%s1 + $0x50] sm:$0xff]
    %v68 = vld [vmem:[%s1 + $0x58] sm:$0xff]
    %v69 = vld [vmem:[%s1 + $0x60] sm:$0xff]
    %v70 = vld [vmem:[%s1 + $0x68] sm:$0xff]
    %v71 = vld [vmem:[%s1 + $0x70] sm:$0xff]
    %v72 = vld [vmem:[%s1 + $0x78] sm:$0xff]
    %v73 = vld [vmem:[%s1 + $0x80] sm:$0xff]
    %v74 = vld [vmem:[%s1 + $0x88] sm:$0xff]
    %v75 = vld [vmem:[%s1 + $0x90] sm:$0xff]
    %v76 = vld [vmem:[%s1 + $0x98] sm:$0xff]
    %v77 = vld [vmem:[%s1 + $0xa0] sm:$0xff]
    %v78 = vld [vmem:[%s1 + $0xa8] sm:$0xff]
    %v79 = vld [vmem:[%s1 + $0xb0] sm:$0xff]
    %v80 = vld [vmem:[%s1 + $0xb8] sm:$0xff]
    %v81 = vld [vmem:[%s1 + $0xc0] sm:$0xff]
    %v82 = vld [vmem:[%s1 + $0xc8] sm:$0xff]
    %v83 = vld [vmem:[%s1 + $0xd0] sm:$0xff]
    %v84 = vld [vmem:[%s1 + $0xd8] sm:$0xff]
    %v85 = vld [vmem:[%s1 + $0xe0] sm:$0xff]
    %v86 = vld [vmem:[%s1 + $0xe8] sm:$0xff]
    %v87 = vld [vmem:[%s1 + $0xf0] sm:$0xff]
    %v88 = vld [vmem:[%s1 + $0xf8] sm:$0xff]
    %vm89 = vcmp.ne.f32.partialorder %v57, 0.0
    %vm90 = vcmp.ne.f32.partialorder %v58, 0.0
    %vm91 = vcmp.ne.f32.partialorder %v59, 0.0
    %vm92 = vcmp.ne.f32.partialorder %v60, 0.0
    %vm93 = vcmp.ne.f32.partialorder %v61, 0.0
    %vm94 = vcmp.ne.f32.partialorder %v62, 0.0
    %vm95 = vcmp.ne.f32.partialorder %v63, 0.0
    %vm96 = vcmp.ne.f32.partialorder %v64, 0.0
    %vm97 = vcmp.ne.f32.partialorder %v65, 0.0
    %vm98 = vcmp.ne.f32.partialorder %v66, 0.0
    %vm99 = vcmp.ne.f32.partialorder %v67, 0.0
    %vm100 = vcmp.ne.f32.partialorder %v68, 0.0
    %vm101 = vcmp.ne.f32.partialorder %v69, 0.0
    %vm102 = vcmp.ne.f32.partialorder %v70, 0.0
    %vm103 = vcmp.ne.f32.partialorder %v71, 0.0
    %vm104 = vcmp.ne.f32.partialorder %v72, 0.0
    %vm105 = vcmp.ne.f32.partialorder %v73, 0.0
    %vm106 = vcmp.ne.f32.partialorder %v74, 0.0
    %vm107 = vcmp.ne.f32.partialorder %v75, 0.0
    %vm108 = vcmp.ne.f32.partialorder %v76, 0.0
    %vm109 = vcmp.ne.f32.partialorder %v77, 0.0
    %vm110 = vcmp.ne.f32.partialorder %v78, 0.0
    %vm111 = vcmp.ne.f32.partialorder %v79, 0.0
    %vm112 = vcmp.ne.f32.partialorder %v80, 0.0
    %vm113 = vcmp.ne.f32.partialorder %v81, 0.0
    %vm114 = vcmp.ne.f32.partialorder %v82, 0.0
    %vm115 = vcmp.ne.f32.partialorder %v83, 0.0
    %vm116 = vcmp.ne.f32.partialorder %v84, 0.0
    %vm117 = vcmp.ne.f32.partialorder %v85, 0.0
    %vm118 = vcmp.ne.f32.partialorder %v86, 0.0
    %vm119 = vcmp.ne.f32.partialorder %v87, 0.0
    %vm120 = vcmp.ne.f32.partialorder %v88, 0.0
    %v121 = vld [vmem:[%s2] sm:$0xff]
    %v122 = vld [vmem:[%s2 + $0x8] sm:$0xff]
    %v123 = vld [vmem:[%s2 + $0x10] sm:$0xff]
    %v124 = vld [vmem:[%s2 + $0x18] sm:$0xff]
    %v125 = vld [vmem:[%s2 + $0x20] sm:$0xff]
    %v126 = vld [vmem:[%s2 + $0x28] sm:$0xff]
    %v127 = vld [vmem:[%s2 + $0x30] sm:$0xff]
    %v128 = vld [vmem:[%s2 + $0x38] sm:$0xff]
    %v129 = vld [vmem:[%s2 + $0x40] sm:$0xff]
    %v130 = vld [vmem:[%s2 + $0x48] sm:$0xff]
    %v131 = vld [vmem:[%s2 + $0x50] sm:$0xff]
    %v132 = vld [vmem:[%s2 + $0x58] sm:$0xff]
    %v133 = vld [vmem:[%s2 + $0x60] sm:$0xff]
    %v134 = vld [vmem:[%s2 + $0x68] sm:$0xff]
    %v135 = vld [vmem:[%s2 + $0x70] sm:$0xff]
    %v136 = vld [vmem:[%s2 + $0x78] sm:$0xff]
    %v137 = vld [vmem:[%s2 + $0x80] sm:$0xff]
    %v138 = vld [vmem:[%s2 + $0x88] sm:$0xff]
    %v139 = vld [vmem:[%s2 + $0x90] sm:$0xff]
    %v140 = vld [vmem:[%s2 + $0x98] sm:$0xff]
    %v141 = vld [vmem:[%s2 + $0xa0] sm:$0xff]
    %v142 = vld [vmem:[%s2 + $0xa8] sm:$0xff]
    %v143 = vld [vmem:[%s2 + $0xb0] sm:$0xff]
    %v144 = vld [vmem:[%s2 + $0xb8] sm:$0xff]
    %v145 = vld [vmem:[%s2 + $0xc0] sm:$0xff]
    %v146 = vld [vmem:[%s2 + $0xc8] sm:$0xff]
    %v147 = vld [vmem:[%s2 + $0xd0] sm:$0xff]
    %v148 = vld [vmem:[%s2 + $0xd8] sm:$0xff]
    %v149 = vld [vmem:[%s2 + $0xe0] sm:$0xff]
    %v150 = vld [vmem:[%s2 + $0xe8] sm:$0xff]
    %v151 = vld [vmem:[%s2 + $0xf0] sm:$0xff]
    %v152 = vld [vmem:[%s2 + $0xf8] sm:$0xff]
    %vm153 = vcmp.ne.f32.partialorder %v121, 0.0
    %vm154 = vcmp.ne.f32.partialorder %v122, 0.0
    %vm155 = vcmp.ne.f32.partialorder %v123, 0.0
    %vm156 = vcmp.ne.f32.partialorder %v124, 0.0
    %vm157 = vcmp.ne.f32.partialorder %v125, 0.0
    %vm158 = vcmp.ne.f32.partialorder %v126, 0.0
    %vm159 = vcmp.ne.f32.partialorder %v127, 0.0
    %vm160 = vcmp.ne.f32.partialorder %v128, 0.0
    %vm161 = vcmp.ne.f32.partialorder %v129, 0.0
    %vm162 = vcmp.ne.f32.partialorder %v130, 0.0
    %vm163 = vcmp.ne.f32.partialorder %v131, 0.0
    %vm164 = vcmp.ne.f32.partialorder %v132, 0.0
    %vm165 = vcmp.ne.f32.partialorder %v133, 0.0
    %vm166 = vcmp.ne.f32.partialorder %v134, 0.0
    %vm167 = vcmp.ne.f32.partialorder %v135, 0.0
    %vm168 = vcmp.ne.f32.partialorder %v136, 0.0
    %vm169 = vcmp.ne.f32.partialorder %v137, 0.0
    %vm170 = vcmp.ne.f32.partialorder %v138, 0.0
    %vm171 = vcmp.ne.f32.partialorder %v139, 0.0
    %vm172 = vcmp.ne.f32.partialorder %v140, 0.0
    %vm173 = vcmp.ne.f32.partialorder %v141, 0.0
    %vm174 = vcmp.ne.f32.partialorder %v142, 0.0
    %vm175 = vcmp.ne.f32.partialorder %v143, 0.0
    %vm176 = vcmp.ne.f32.partialorder %v144, 0.0
    %vm177 = vcmp.ne.f32.partialorder %v145, 0.0
    %vm178 = vcmp.ne.f32.partialorder %v146, 0.0
    %vm179 = vcmp.ne.f32.partialorder %v147, 0.0
    %vm180 = vcmp.ne.f32.partialorder %v148, 0.0
    %vm181 = vcmp.ne.f32.partialorder %v149, 0.0
    %vm182 = vcmp.ne.f32.partialorder %v150, 0.0
    %vm183 = vcmp.ne.f32.partialorder %v151, 0.0
    %vm184 = vcmp.ne.f32.partialorder %v152, 0.0
    %v185 = vld [vmem:[%s0] sm:$0xff]
    %v186 = vld [vmem:[%s0 + $0x8] sm:$0xff]
    %v187 = vld [vmem:[%s0 + $0x10] sm:$0xff]
    %v188 = vld [vmem:[%s0 + $0x18] sm:$0xff]
    %v189 = vld [vmem:[%s0 + $0x20] sm:$0xff]
    %v190 = vld [vmem:[%s0 + $0x28] sm:$0xff]
    %v191 = vld [vmem:[%s0 + $0x30] sm:$0xff]
    %v192 = vld [vmem:[%s0 + $0x38] sm:$0xff]
    %v193 = vld [vmem:[%s0 + $0x40] sm:$0xff]
    %v194 = vld [vmem:[%s0 + $0x48] sm:$0xff]
    %v195 = vld [vmem:[%s0 + $0x50] sm:$0xff]
    %v196 = vld [vmem:[%s0 + $0x58] sm:$0xff]
    %v197 = vld [vmem:[%s0 + $0x60] sm:$0xff]
    %v198 = vld [vmem:[%s0 + $0x68] sm:$0xff]
    %v199 = vld [vmem:[%s0 + $0x70] sm:$0xff]
    %v200 = vld [vmem:[%s0 + $0x78] sm:$0xff]
    %v201 = vld [vmem:[%s0 + $0x80] sm:$0xff]
    %v202 = vld [vmem:[%s0 + $0x88] sm:$0xff]
    %v203 = vld [vmem:[%s0 + $0x90] sm:$0xff]
    %v204 = vld [vmem:[%s0 + $0x98] sm:$0xff]
    %v205 = vld [vmem:[%s0 + $0xa0] sm:$0xff]
    %v206 = vld [vmem:[%s0 + $0xa8] sm:$0xff]
    %v207 = vld [vmem:[%s0 + $0xb0] sm:$0xff]
    %v208 = vld [vmem:[%s0 + $0xb8] sm:$0xff]
    %v209 = vld [vmem:[%s0 + $0xc0] sm:$0xff]
    %v210 = vld [vmem:[%s0 + $0xc8] sm:$0xff]
    %v211 = vld [vmem:[%s0 + $0xd0] sm:$0xff]
    %v212 = vld [vmem:[%s0 + $0xd8] sm:$0xff]
    %v213 = vld [vmem:[%s0 + $0xe0] sm:$0xff]
    %v214 = vld [vmem:[%s0 + $0xe8] sm:$0xff]
    %v215 = vld [vmem:[%s0 + $0xf0] sm:$0xff]
    %v216 = vld [vmem:[%s0 + $0xf8] sm:$0xff]
    %v217 = vld [vmem:[%s3] sm:$0x3]
    %vm218 = vcmask 15360
    %v220 = vsel %vm218, %v185, 0
    %v223 = vsel %vm218, %v186, 0
    %v226 = vsel %vm218, %v187, 0
    %v229 = vsel %vm218, %v188, 0
    %v232 = vsel %vm218, %v189, 0
    %v235 = vsel %vm218, %v190, 0
    %v238 = vsel %vm218, %v191, 0
    %v241 = vsel %vm218, %v192, 0
    %v244 = vsel %vm218, %v193, 0
    %v247 = vsel %vm218, %v194, 0
    %v250 = vsel %vm218, %v195, 0
    %v253 = vsel %vm218, %v196, 0
    %v256 = vsel %vm218, %v197, 0
    %v259 = vsel %vm218, %v198, 0
    %v262 = vsel %vm218, %v199, 0
    %v265 = vsel %vm218, %v200, 0
    %v268 = vsel %vm218, %v201, 0
    %v271 = vsel %vm218, %v202, 0
    %v274 = vsel %vm218, %v203, 0
    %v277 = vsel %vm218, %v204, 0
    %v280 = vsel %vm218, %v205, 0
    %v283 = vsel %vm218, %v206, 0
    %v286 = vsel %vm218, %v207, 0
    %v289 = vsel %vm218, %v208, 0
    %v292 = vsel %vm218, %v209, 0
    %v295 = vsel %vm218, %v210, 0
    %v298 = vsel %vm218, %v211, 0
    %v301 = vsel %vm218, %v212, 0
    %v304 = vsel %vm218, %v213, 0
    %v307 = vsel %vm218, %v214, 0
    %v310 = vsel %vm218, %v215, 0
    %v313 = vsel %vm218, %v216, 0
    %vm315 = vcmask 1041408
    %v317 = vsel %vm315, %v217, 0
    %319 = vmatprep.subr.mxu0 0.0
    %320 = vmatpush1.msra.mxu0 0.0
    %321 = vmatprep.subr.mxu0 0.0
    %322 = vmatpush1.msra.mxu0 0.0
    %323 = vmatprep.subr.mxu0 0.0
    %324 = vmatpush1.msra.mxu0 0.0
    %325 = vmatprep.subr.mxu0 0.0
    %326 = vmatpush1.msra.mxu0 0.0
    %327 = vmatprep.subr.mxu0 0.0
    %328 = vmatpush1.msra.mxu0 0.0
    %329 = vmatprep.subr.mxu0 0.0
    %330 = vmatpush1.msra.mxu0 0.0
    %331 = vmatprep.subr.mxu0 0.0
    %332 = vmatpush1.msra.mxu0 0.0
    %333 = vmatprep.subr.mxu0 0.0
    %334 = vmatpush1.msra.mxu0 0.0
    %335 = vmatprep.subr.mxu0 0.0
    %336 = vmatpush1.msra.mxu0 0.0
    %337 = vmatprep.subr.mxu0 0.0
    %338 = vmatpush1.msra.mxu0 0.0
    %339 = vmatprep.subr.mxu0 0.0
    %340 = vmatpush1.msra.mxu0 0.0
    %341 = vmatprep.subr.mxu0 0.0
    %342 = vmatpush1.msra.mxu0 0.0
    %343 = vmatprep.subr.mxu0 0.0
    %344 = vmatpush1.msra.mxu0 0.0
    %345 = vmatprep.subr.mxu0 0.0
    %346 = vmatpush1.msra.mxu0 0.0
    %347 = vmatprep.subr.mxu0 0.0
    %348 = vmatpush1.msra.mxu0 0.0
    %349 = vmatprep.subr.mxu0 0.0
    %350 = vmatpush1.msra.mxu0 %v317
    %351 = vmatprep.subr.mxu0 0.0
    %352 = vmatpush2.msra.mxu0 0.0
    %353 = vmatprep.subr.mxu0 0.0
    %354 = vmatpush2.msra.mxu0 0.0
    %355 = vmatprep.subr.mxu0 0.0
    %356 = vmatpush2.msra.mxu0 0.0
    %357 = vmatprep.subr.mxu0 0.0
    %358 = vmatpush2.msra.mxu0 0.0
    %359 = vmatprep.subr.mxu0 0.0
    %360 = vmatpush2.msra.mxu0 0.0
    %361 = vmatprep.subr.mxu0 0.0
    %362 = vmatpush2.msra.mxu0 0.0
    %363 = vmatprep.subr.mxu0 0.0
    %364 = vmatpush2.msra.mxu0 0.0
    %365 = vmatprep.subr.mxu0 0.0
    %366 = vmatpush2.msra.mxu0 0.0
    %367 = vmatprep.subr.mxu0 0.0
    %368 = vmatpush2.msra.mxu0 0.0
    %369 = vmatprep.subr.mxu0 0.0
    %370 = vmatpush2.msra.mxu0 0.0
    %371 = vmatprep.subr.mxu0 0.0
    %372 = vmatpush2.msra.mxu0 0.0
    %373 = vmatprep.subr.mxu0 0.0
    %374 = vmatpush2.msra.mxu0 0.0
    %375 = vmatprep.subr.mxu0 0.0
    %376 = vmatpush2.msra.mxu0 0.0
    %377 = vmatprep.subr.mxu0 0.0
    %378 = vmatpush2.msra.mxu0 0.0
    %379 = vmatprep.subr.mxu0 0.0
    %380 = vmatpush2.msra.mxu0 0.0
    %381 = vmatprep.subr.mxu0 0.0
    %382 = vmatpush2.msra.mxu0 0.0
    %383 = vmatprep.mubr.f32.mxu0 0.0
    %384 = vmatmul.mubr.f32.gmra.mxu0 %v220
    %v385 = vpop.f32.mrf.mxu0
    %v386 = vadd.f32 0.0, %v385
    %v387 = vpop.f32.mrf.mxu0
    %388 = vmatprep.mubr.f32.mxu0 0.0
    %389 = vmatmul.mubr.f32.gmra.mxu0 %v223
    %v390 = vpop.f32.mrf.mxu0
    %v391 = vadd.f32 0.0, %v390
    %v392 = vpop.f32.mrf.mxu0
    %393 = vmatprep.mubr.f32.mxu0 0.0
    %394 = vmatmul.mubr.f32.gmra.mxu0 %v226
    %v395 = vpop.f32.mrf.mxu0
    %v396 = vadd.f32 0.0, %v395
    %v397 = vpop.f32.mrf.mxu0
    %398 = vmatprep.mubr.f32.mxu0 0.0
    %399 = vmatmul.mubr.f32.gmra.mxu0 %v229
    %v400 = vpop.f32.mrf.mxu0
    %v401 = vadd.f32 0.0, %v400
    %v402 = vpop.f32.mrf.mxu0
    %403 = vmatprep.mubr.f32.mxu0 0.0
    %404 = vmatmul.mubr.f32.gmra.mxu0 %v232
    %v405 = vpop.f32.mrf.mxu0
    %v406 = vadd.f32 0.0, %v405
    %v407 = vpop.f32.mrf.mxu0
    %408 = vmatprep.mubr.f32.mxu0 0.0
    %409 = vmatmul.mubr.f32.gmra.mxu0 %v235
    %v410 = vpop.f32.mrf.mxu0
    %v411 = vadd.f32 0.0, %v410
    %v412 = vpop.f32.mrf.mxu0
    %413 = vmatprep.mubr.f32.mxu0 0.0
    %414 = vmatmul.mubr.f32.gmra.mxu0 %v238
    %v415 = vpop.f32.mrf.mxu0
    %v416 = vadd.f32 0.0, %v415
    %v417 = vpop.f32.mrf.mxu0
    %418 = vmatprep.mubr.f32.mxu0 0.0
    %419 = vmatmul.mubr.f32.gmra.mxu0 %v241
    %v420 = vpop.f32.mrf.mxu0
    %v421 = vadd.f32 0.0, %v420
    %v422 = vpop.f32.mrf.mxu0
    %423 = vmatprep.mubr.f32.mxu0 0.0
    %424 = vmatmul.mubr.f32.gmra.mxu0 %v244
    %v425 = vpop.f32.mrf.mxu0
    %v426 = vadd.f32 0.0, %v425
    %v427 = vpop.f32.mrf.mxu0
    %428 = vmatprep.mubr.f32.mxu0 0.0
    %429 = vmatmul.mubr.f32.gmra.mxu0 %v247
    %v430 = vpop.f32.mrf.mxu0
    %v431 = vadd.f32 0.0, %v430
    %v432 = vpop.f32.mrf.mxu0
    %433 = vmatprep.mubr.f32.mxu0 0.0
    %434 = vmatmul.mubr.f32.gmra.mxu0 %v250
    %v435 = vpop.f32.mrf.mxu0
    %v436 = vadd.f32 0.0, %v435
    %v437 = vpop.f32.mrf.mxu0
    %438 = vmatprep.mubr.f32.mxu0 0.0
    %439 = vmatmul.mubr.f32.gmra.mxu0 %v253
    %v440 = vpop.f32.mrf.mxu0
    %v441 = vadd.f32 0.0, %v440
    %v442 = vpop.f32.mrf.mxu0
    %443 = vmatprep.mubr.f32.mxu0 0.0
    %444 = vmatmul.mubr.f32.gmra.mxu0 %v256
    %v445 = vpop.f32.mrf.mxu0
    %v446 = vadd.f32 0.0, %v445
    %v447 = vpop.f32.mrf.mxu0
    %448 = vmatprep.mubr.f32.mxu0 0.0
    %449 = vmatmul.mubr.f32.gmra.mxu0 %v259
    %v450 = vpop.f32.mrf.mxu0
    %v451 = vadd.f32 0.0, %v450
    %v452 = vpop.f32.mrf.mxu0
    %453 = vmatprep.mubr.f32.mxu0 0.0
    %454 = vmatmul.mubr.f32.gmra.mxu0 %v262
    %v455 = vpop.f32.mrf.mxu0
    %v456 = vadd.f32 0.0, %v455
    %v457 = vpop.f32.mrf.mxu0
    %458 = vmatprep.mubr.f32.mxu0 0.0
    %459 = vmatmul.mubr.f32.gmra.mxu0 %v265
    %v460 = vpop.f32.mrf.mxu0
    %v461 = vadd.f32 0.0, %v460
    %v462 = vpop.f32.mrf.mxu0
    %463 = vmatprep.mubr.f32.mxu0 0.0
    %464 = vmatmul.mubr.f32.gmra.mxu0 %v268
    %v465 = vpop.f32.mrf.mxu0
    %v466 = vadd.f32 0.0, %v465
    %v467 = vpop.f32.mrf.mxu0
    %468 = vmatprep.mubr.f32.mxu0 0.0
    %469 = vmatmul.mubr.f32.gmra.mxu0 %v271
    %v470 = vpop.f32.mrf.mxu0
    %v471 = vadd.f32 0.0, %v470
    %v472 = vpop.f32.mrf.mxu0
    %473 = vmatprep.mubr.f32.mxu0 0.0
    %474 = vmatmul.mubr.f32.gmra.mxu0 %v274
    %v475 = vpop.f32.mrf.mxu0
    %v476 = vadd.f32 0.0, %v475
    %v477 = vpop.f32.mrf.mxu0
    %478 = vmatprep.mubr.f32.mxu0 0.0
    %479 = vmatmul.mubr.f32.gmra.mxu0 %v277
    %v480 = vpop.f32.mrf.mxu0
    %v481 = vadd.f32 0.0, %v480
    %v482 = vpop.f32.mrf.mxu0
    %483 = vmatprep.mubr.f32.mxu0 0.0
    %484 = vmatmul.mubr.f32.gmra.mxu0 %v280
    %v485 = vpop.f32.mrf.mxu0
    %v486 = vadd.f32 0.0, %v485
    %v487 = vpop.f32.mrf.mxu0
    %488 = vmatprep.mubr.f32.mxu0 0.0
    %489 = vmatmul.mubr.f32.gmra.mxu0 %v283
    %v490 = vpop.f32.mrf.mxu0
    %v491 = vadd.f32 0.0, %v490
    %v492 = vpop.f32.mrf.mxu0
    %493 = vmatprep.mubr.f32.mxu0 0.0
    %494 = vmatmul.mubr.f32.gmra.mxu0 %v286
    %v495 = vpop.f32.mrf.mxu0
    %v496 = vadd.f32 0.0, %v495
    %v497 = vpop.f32.mrf.mxu0
    %498 = vmatprep.mubr.f32.mxu0 0.0
    %499 = vmatmul.mubr.f32.gmra.mxu0 %v289
    %v500 = vpop.f32.mrf.mxu0
    %v501 = vadd.f32 0.0, %v500
    %v502 = vpop.f32.mrf.mxu0
    %503 = vmatprep.mubr.f32.mxu0 0.0
    %504 = vmatmul.mubr.f32.gmra.mxu0 %v292
    %v505 = vpop.f32.mrf.mxu0
    %v506 = vadd.f32 0.0, %v505
    %v507 = vpop.f32.mrf.mxu0
    %508 = vmatprep.mubr.f32.mxu0 0.0
    %509 = vmatmul.mubr.f32.gmra.mxu0 %v295
    %v510 = vpop.f32.mrf.mxu0
    %v511 = vadd.f32 0.0, %v510
    %v512 = vpop.f32.mrf.mxu0
    %513 = vmatprep.mubr.f32.mxu0 0.0
    %514 = vmatmul.mubr.f32.gmra.mxu0 %v298
    %v515 = vpop.f32.mrf.mxu0
    %v516 = vadd.f32 0.0, %v515
    %v517 = vpop.f32.mrf.mxu0
    %518 = vmatprep.mubr.f32.mxu0 0.0
    %519 = vmatmul.mubr.f32.gmra.mxu0 %v301
    %v520 = vpop.f32.mrf.mxu0
    %v521 = vadd.f32 0.0, %v520
    %v522 = vpop.f32.mrf.mxu0
    %523 = vmatprep.mubr.f32.mxu0 0.0
    %524 = vmatmul.mubr.f32.gmra.mxu0 %v304
    %v525 = vpop.f32.mrf.mxu0
    %v526 = vadd.f32 0.0, %v525
    %v527 = vpop.f32.mrf.mxu0
    %528 = vmatprep.mubr.f32.mxu0 0.0
    %529 = vmatmul.mubr.f32.gmra.mxu0 %v307
    %v530 = vpop.f32.mrf.mxu0
    %v531 = vadd.f32 0.0, %v530
    %v532 = vpop.f32.mrf.mxu0
    %533 = vmatprep.mubr.f32.mxu0 0.0
    %534 = vmatmul.mubr.f32.gmra.mxu0 %v310
    %v535 = vpop.f32.mrf.mxu0
    %v536 = vadd.f32 0.0, %v535
    %v537 = vpop.f32.mrf.mxu0
    %538 = vmatprep.mubr.f32.mxu0 0.0
    %539 = vmatmul.mubr.f32.gmra.mxu0 %v313
    %v540 = vpop.f32.mrf.mxu0
    %v541 = vadd.f32 0.0, %v540
    %v542 = vpop.f32.mrf.mxu0
    %543 = vdwg.mxu0
    %v544 = vld [vmem:[%s4] sm:$0x1]
    %v546 = vlaneseq
    %v547 = vshrl.u32 %v546, 7
    %v548 = vsub.s32 0, %v547
    %v549 = vrot.slane %v544, %v548
    %v551 = vmul.f32 %v386, %v549
    %v552 = vmul.f32 %v391, %v549
    %v553 = vmul.f32 %v396, %v549
    %v554 = vmul.f32 %v401, %v549
    %v555 = vmul.f32 %v406, %v549
    %v556 = vmul.f32 %v411, %v549
    %v557 = vmul.f32 %v416, %v549
    %v558 = vmul.f32 %v421, %v549
    %v559 = vmul.f32 %v426, %v549
    %v560 = vmul.f32 %v431, %v549
    %v561 = vmul.f32 %v436, %v549
    %v562 = vmul.f32 %v441, %v549
    %v563 = vmul.f32 %v446, %v549
    %v564 = vmul.f32 %v451, %v549
    %v565 = vmul.f32 %v456, %v549
    %v566 = vmul.f32 %v461, %v549
    %v567 = vmul.f32 %v466, %v549
    %v568 = vmul.f32 %v471, %v549
    %v569 = vmul.f32 %v476, %v549
    %v570 = vmul.f32 %v481, %v549
    %v571 = vmul.f32 %v486, %v549
    %v572 = vmul.f32 %v491, %v549
    %v573 = vmul.f32 %v496, %v549
    %v574 = vmul.f32 %v501, %v549
    %v575 = vmul.f32 %v506, %v549
    %v576 = vmul.f32 %v511, %v549
    %v577 = vmul.f32 %v516, %v549
    %v578 = vmul.f32 %v521, %v549
    %v579 = vmul.f32 %v526, %v549
    %v580 = vmul.f32 %v531, %v549
    %v581 = vmul.f32 %v536, %v549
    %v582 = vmul.f32 %v541, %v549
    %v583 = vld [vmem:[%s5] sm:$0x1]
    %v585 = vlaneseq
    %v586 = vshrl.u32 %v585, 7
    %v587 = vsub.s32 0, %v586
    %v588 = vrot.slane %v583, %v587
    %v590 = vadd.f32 %v551, %v588
    %v591 = vadd.f32 %v552, %v588
    %v592 = vadd.f32 %v553, %v588
    %v593 = vadd.f32 %v554, %v588
    %v594 = vadd.f32 %v555, %v588
    %v595 = vadd.f32 %v556, %v588
    %v596 = vadd.f32 %v557, %v588
    %v597 = vadd.f32 %v558, %v588
    %v598 = vadd.f32 %v559, %v588
    %v599 = vadd.f32 %v560, %v588
    %v600 = vadd.f32 %v561, %v588
    %v601 = vadd.f32 %v562, %v588
    %v602 = vadd.f32 %v563, %v588
    %v603 = vadd.f32 %v564, %v588
    %v604 = vadd.f32 %v565, %v588
    %v605 = vadd.f32 %v566, %v588
    %v606 = vadd.f32 %v567, %v588
    %v607 = vadd.f32 %v568, %v588
    %v608 = vadd.f32 %v569, %v588
    %v609 = vadd.f32 %v570, %v588
    %v610 = vadd.f32 %v571, %v588
    %v611 = vadd.f32 %v572, %v588
    %v612 = vadd.f32 %v573, %v588
    %v613 = vadd.f32 %v574, %v588
    %v614 = vadd.f32 %v575, %v588
    %v615 = vadd.f32 %v576, %v588
    %v616 = vadd.f32 %v577, %v588
    %v617 = vadd.f32 %v578, %v588
    %v618 = vadd.f32 %v579, %v588
    %v619 = vadd.f32 %v580, %v588
    %v620 = vadd.f32 %v581, %v588
    %v621 = vadd.f32 %v582, %v588
    %v622 = vmax.f32 %v590, 0.0
    %v623 = vmax.f32 %v591, 0.0
    %v624 = vmax.f32 %v592, 0.0
    %v625 = vmax.f32 %v593, 0.0
    %v626 = vmax.f32 %v594, 0.0
    %v627 = vmax.f32 %v595, 0.0
    %v628 = vmax.f32 %v596, 0.0
    %v629 = vmax.f32 %v597, 0.0
    %v630 = vmax.f32 %v598, 0.0
    %v631 = vmax.f32 %v599, 0.0
    %v632 = vmax.f32 %v600, 0.0
    %v633 = vmax.f32 %v601, 0.0
    %v634 = vmax.f32 %v602, 0.0
    %v635 = vmax.f32 %v603, 0.0
    %v636 = vmax.f32 %v604, 0.0
    %v637 = vmax.f32 %v605, 0.0
    %v638 = vmax.f32 %v606, 0.0
    %v639 = vmax.f32 %v607, 0.0
    %v640 = vmax.f32 %v608, 0.0
    %v641 = vmax.f32 %v609, 0.0
    %v642 = vmax.f32 %v610, 0.0
    %v643 = vmax.f32 %v611, 0.0
    %v644 = vmax.f32 %v612, 0.0
    %v645 = vmax.f32 %v613, 0.0
    %v646 = vmax.f32 %v614, 0.0
    %v647 = vmax.f32 %v615, 0.0
    %v648 = vmax.f32 %v616, 0.0
    %v649 = vmax.f32 %v617, 0.0
    %v650 = vmax.f32 %v618, 0.0
    %v651 = vmax.f32 %v619, 0.0
    %v652 = vmax.f32 %v620, 0.0
    %v653 = vmax.f32 %v621, 0.0
    %vm654 = vcmask 523264
    %655 = vst.msk [vmem:[#allocation2 + $0x1] sm:$0xff] %vm654, %v622
    %656 = vst.msk [vmem:[#allocation2 + $0x9] sm:$0xff] %vm654, %v623
    %657 = vst.msk [vmem:[#allocation2 + $0x11] sm:$0xff] %vm654, %v624
    %658 = vst.msk [vmem:[#allocation2 + $0x19] sm:$0xff] %vm654, %v625
    %659 = vst.msk [vmem:[#allocation2 + $0x21] sm:$0xff] %vm654, %v626
    %660 = vst.msk [vmem:[#allocation2 + $0x29] sm:$0xff] %vm654, %v627
    %661 = vst.msk [vmem:[#allocation2 + $0x31] sm:$0xff] %vm654, %v628
    %662 = vst.msk [vmem:[#allocation2 + $0x39] sm:$0xff] %vm654, %v629
    %663 = vst.msk [vmem:[#allocation2 + $0x41] sm:$0xff] %vm654, %v630
    %664 = vst.msk [vmem:[#allocation2 + $0x49] sm:$0xff] %vm654, %v631
    %665 = vst.msk [vmem:[#allocation2 + $0x51] sm:$0xff] %vm654, %v632
    %666 = vst.msk [vmem:[#allocation2 + $0x59] sm:$0xff] %vm654, %v633
    %667 = vst.msk [vmem:[#allocation2 + $0x61] sm:$0xff] %vm654, %v634
    %668 = vst.msk [vmem:[#allocation2 + $0x69] sm:$0xff] %vm654, %v635
    %669 = vst.msk [vmem:[#allocation2 + $0x71] sm:$0xff] %vm654, %v636
    %670 = vst.msk [vmem:[#allocation2 + $0x79] sm:$0xff] %vm654, %v637
    %671 = vst.msk [vmem:[#allocation2 + $0x81] sm:$0xff] %vm654, %v638
    %672 = vst.msk [vmem:[#allocation2 + $0x89] sm:$0xff] %vm654, %v639
    %673 = vst.msk [vmem:[#allocation2 + $0x91] sm:$0xff] %vm654, %v640
    %674 = vst.msk [vmem:[#allocation2 + $0x99] sm:$0xff] %vm654, %v641
    %675 = vst.msk [vmem:[#allocation2 + $0xa1] sm:$0xff] %vm654, %v642
    %676 = vst.msk [vmem:[#allocation2 + $0xa9] sm:$0xff] %vm654, %v643
    %677 = vst.msk [vmem:[#allocation2 + $0xb1] sm:$0xff] %vm654, %v644
    %678 = vst.msk [vmem:[#allocation2 + $0xb9] sm:$0xff] %vm654, %v645
    %679 = vst.msk [vmem:[#allocation2 + $0xc1] sm:$0xff] %vm654, %v646
    %680 = vst.msk [vmem:[#allocation2 + $0xc9] sm:$0xff] %vm654, %v647
    %681 = vst.msk [vmem:[#allocation2 + $0xd1] sm:$0xff] %vm654, %v648
    %682 = vst.msk [vmem:[#allocation2 + $0xd9] sm:$0xff] %vm654, %v649
    %683 = vst.msk [vmem:[#allocation2 + $0xe1] sm:$0xff] %vm654, %v650
    %684 = vst.msk [vmem:[#allocation2 + $0xe9] sm:$0xff] %vm654, %v651
    %685 = vst.msk [vmem:[#allocation2 + $0xf1] sm:$0xff] %vm654, %v652
    %686 = vst.msk [vmem:[#allocation2 + $0xf9] sm:$0xff] %vm654, %v653
    %v687 = vld [vmem:[#allocation2] sm:$0xff]
    %v688 = vld [vmem:[#allocation2 + $0x8] sm:$0xff]
    %v689 = vld [vmem:[#allocation2 + $0x10] sm:$0xff]
    %v690 = vld [vmem:[#allocation2 + $0x18] sm:$0xff]
    %v691 = vld [vmem:[#allocation2 + $0x20] sm:$0xff]
    %v692 = vld [vmem:[#allocation2 + $0x28] sm:$0xff]
    %v693 = vld [vmem:[#allocation2 + $0x30] sm:$0xff]
    %v694 = vld [vmem:[#allocation2 + $0x38] sm:$0xff]
    %v695 = vld [vmem:[#allocation2 + $0x40] sm:$0xff]
    %v696 = vld [vmem:[#allocation2 + $0x48] sm:$0xff]
    %v697 = vld [vmem:[#allocation2 + $0x50] sm:$0xff]
    %v698 = vld [vmem:[#allocation2 + $0x58] sm:$0xff]
    %v699 = vld [vmem:[#allocation2 + $0x60] sm:$0xff]
    %v700 = vld [vmem:[#allocation2 + $0x68] sm:$0xff]
    %v701 = vld [vmem:[#allocation2 + $0x70] sm:$0xff]
    %v702 = vld [vmem:[#allocation2 + $0x78] sm:$0xff]
    %v703 = vld [vmem:[#allocation2 + $0x80] sm:$0xff]
    %v704 = vld [vmem:[#allocation2 + $0x88] sm:$0xff]
    %v705 = vld [vmem:[#allocation2 + $0x90] sm:$0xff]
    %v706 = vld [vmem:[#allocation2 + $0x98] sm:$0xff]
    %v707 = vld [vmem:[#allocation2 + $0xa0] sm:$0xff]
    %v708 = vld [vmem:[#allocation2 + $0xa8] sm:$0xff]
    %v709 = vld [vmem:[#allocation2 + $0xb0] sm:$0xff]
    %v710 = vld [vmem:[#allocation2 + $0xb8] sm:$0xff]
    %v711 = vld [vmem:[#allocation2 + $0xc0] sm:$0xff]
    %v712 = vld [vmem:[#allocation2 + $0xc8] sm:$0xff]
    %v713 = vld [vmem:[#allocation2 + $0xd0] sm:$0xff]
    %v714 = vld [vmem:[#allocation2 + $0xd8] sm:$0xff]
    %v715 = vld [vmem:[#allocation2 + $0xe0] sm:$0xff]
    %v716 = vld [vmem:[#allocation2 + $0xe8] sm:$0xff]
    %v717 = vld [vmem:[#allocation2 + $0xf0] sm:$0xff]
    %v718 = vld [vmem:[#allocation2 + $0xf8] sm:$0xff]
    %v719 = vsel %vm89, 1, 0
    %v720 = vsel %vm90, 1, 0
    %v721 = vsel %vm91, 1, 0
    %v722 = vsel %vm92, 1, 0
    %v723 = vsel %vm93, 1, 0
    %v724 = vsel %vm94, 1, 0
    %v725 = vsel %vm95, 1, 0
    %v726 = vsel %vm96, 1, 0
    %v727 = vsel %vm97, 1, 0
    %v728 = vsel %vm98, 1, 0
    %v729 = vsel %vm99, 1, 0
    %v730 = vsel %vm100, 1, 0
    %v731 = vsel %vm101, 1, 0
    %v732 = vsel %vm102, 1, 0
    %v733 = vsel %vm103, 1, 0
    %v734 = vsel %vm104, 1, 0
    %v735 = vsel %vm105, 1, 0
    %v736 = vsel %vm106, 1, 0
    %v737 = vsel %vm107, 1, 0
    %v738 = vsel %vm108, 1, 0
    %v739 = vsel %vm109, 1, 0
    %v740 = vsel %vm110, 1, 0
    %v741 = vsel %vm111, 1, 0
    %v742 = vsel %vm112, 1, 0
    %v743 = vsel %vm113, 1, 0
    %v744 = vsel %vm114, 1, 0
    %v745 = vsel %vm115, 1, 0
    %v746 = vsel %vm116, 1, 0
    %v747 = vsel %vm117, 1, 0
    %v748 = vsel %vm118, 1, 0
    %v749 = vsel %vm119, 1, 0
    %v750 = vsel %vm120, 1, 0
    %751 = vset.pattern.permute.xlu0 0
    %752 = vperm.xlu0 %751, %v719
    %v753 = vpop.permute.xlu0 %752
    %754 = vset.pattern.permute.xlu0 0
    %755 = vperm.xlu0 %754, %v720
    %v756 = vpop.permute.xlu0 %755
    %757 = vset.pattern.permute.xlu0 0
    %758 = vperm.xlu0 %757, %v721
    %v759 = vpop.permute.xlu0 %758
    %760 = vset.pattern.permute.xlu0 0
    %761 = vperm.xlu0 %760, %v722
    %v762 = vpop.permute.xlu0 %761
    %763 = vset.pattern.permute.xlu0 0
    %764 = vperm.xlu0 %763, %v723
    %v765 = vpop.permute.xlu0 %764
    %766 = vset.pattern.permute.xlu0 0
    %767 = vperm.xlu0 %766, %v724
    %v768 = vpop.permute.xlu0 %767
    %769 = vset.pattern.permute.xlu0 0
    %770 = vperm.xlu0 %769, %v725
    %v771 = vpop.permute.xlu0 %770
    %772 = vset.pattern.permute.xlu0 0
    %773 = vperm.xlu0 %772, %v726
    %v774 = vpop.permute.xlu0 %773
    %775 = vset.pattern.permute.xlu0 0
    %776 = vperm.xlu0 %775, %v727
    %v777 = vpop.permute.xlu0 %776
    %778 = vset.pattern.permute.xlu0 0
    %779 = vperm.xlu0 %778, %v728
    %v780 = vpop.permute.xlu0 %779
    %781 = vset.pattern.permute.xlu0 0
    %782 = vperm.xlu0 %781, %v729
    %v783 = vpop.permute.xlu0 %782
    %784 = vset.pattern.permute.xlu0 0
    %785 = vperm.xlu0 %784, %v730
    %v786 = vpop.permute.xlu0 %785
    %787 = vset.pattern.permute.xlu0 0
    %788 = vperm.xlu0 %787, %v731
    %v789 = vpop.permute.xlu0 %788
    %790 = vset.pattern.permute.xlu0 0
    %791 = vperm.xlu0 %790, %v732
    %v792 = vpop.permute.xlu0 %791
    %793 = vset.pattern.permute.xlu0 0
    %794 = vperm.xlu0 %793, %v733
    %v795 = vpop.permute.xlu0 %794
    %796 = vset.pattern.permute.xlu0 0
    %797 = vperm.xlu0 %796, %v734
    %v798 = vpop.permute.xlu0 %797
    %799 = vset.pattern.permute.xlu0 0
    %800 = vperm.xlu0 %799, %v735
    %v801 = vpop.permute.xlu0 %800
    %802 = vset.pattern.permute.xlu0 0
    %803 = vperm.xlu0 %802, %v736
    %v804 = vpop.permute.xlu0 %803
    %805 = vset.pattern.permute.xlu0 0
    %806 = vperm.xlu0 %805, %v737
    %v807 = vpop.permute.xlu0 %806
    %808 = vset.pattern.permute.xlu0 0
    %809 = vperm.xlu0 %808, %v738
    %v810 = vpop.permute.xlu0 %809
    %811 = vset.pattern.permute.xlu0 0
    %812 = vperm.xlu0 %811, %v739
    %v813 = vpop.permute.xlu0 %812
    %814 = vset.pattern.permute.xlu0 0
    %815 = vperm.xlu0 %814, %v740
    %v816 = vpop.permute.xlu0 %815
    %817 = vset.pattern.permute.xlu0 0
    %818 = vperm.xlu0 %817, %v741
    %v819 = vpop.permute.xlu0 %818
    %820 = vset.pattern.permute.xlu0 0
    %821 = vperm.xlu0 %820, %v742
    %v822 = vpop.permute.xlu0 %821
    %823 = vset.pattern.permute.xlu0 0
    %824 = vperm.xlu0 %823, %v743
    %v825 = vpop.permute.xlu0 %824
    %826 = vset.pattern.permute.xlu0 0
    %827 = vperm.xlu0 %826, %v744
    %v828 = vpop.permute.xlu0 %827
    %829 = vset.pattern.permute.xlu0 0
    %830 = vperm.xlu0 %829, %v745
    %v831 = vpop.permute.xlu0 %830
    %832 = vset.pattern.permute.xlu0 0
    %833 = vperm.xlu0 %832, %v746
    %v834 = vpop.permute.xlu0 %833
    %835 = vset.pattern.permute.xlu0 0
    %836 = vperm.xlu0 %835, %v747
    %v837 = vpop.permute.xlu0 %836
    %838 = vset.pattern.permute.xlu0 0
    %839 = vperm.xlu0 %838, %v748
    %v840 = vpop.permute.xlu0 %839
    %841 = vset.pattern.permute.xlu0 0
    %842 = vperm.xlu0 %841, %v749
    %v843 = vpop.permute.xlu0 %842
    %844 = vset.pattern.permute.xlu0 0
    %845 = vperm.xlu0 %844, %v750
    %v846 = vpop.permute.xlu0 %845
    %vm847 = vcmp.eq.s32.totalorder %v753, 1
    %vm848 = vcmp.eq.s32.totalorder %v756, 1
    %vm849 = vcmp.eq.s32.totalorder %v759, 1
    %vm850 = vcmp.eq.s32.totalorder %v762, 1
    %vm851 = vcmp.eq.s32.totalorder %v765, 1
    %vm852 = vcmp.eq.s32.totalorder %v768, 1
    %vm853 = vcmp.eq.s32.totalorder %v771, 1
    %vm854 = vcmp.eq.s32.totalorder %v774, 1
    %vm855 = vcmp.eq.s32.totalorder %v777, 1
    %vm856 = vcmp.eq.s32.totalorder %v780, 1
    %vm857 = vcmp.eq.s32.totalorder %v783, 1
    %vm858 = vcmp.eq.s32.totalorder %v786, 1
    %vm859 = vcmp.eq.s32.totalorder %v789, 1
    %vm860 = vcmp.eq.s32.totalorder %v792, 1
    %vm861 = vcmp.eq.s32.totalorder %v795, 1
    %vm862 = vcmp.eq.s32.totalorder %v798, 1
    %vm863 = vcmp.eq.s32.totalorder %v801, 1
    %vm864 = vcmp.eq.s32.totalorder %v804, 1
    %vm865 = vcmp.eq.s32.totalorder %v807, 1
    %vm866 = vcmp.eq.s32.totalorder %v810, 1
    %vm867 = vcmp.eq.s32.totalorder %v813, 1
    %vm868 = vcmp.eq.s32.totalorder %v816, 1
    %vm869 = vcmp.eq.s32.totalorder %v819, 1
    %vm870 = vcmp.eq.s32.totalorder %v822, 1
    %vm871 = vcmp.eq.s32.totalorder %v825, 1
    %vm872 = vcmp.eq.s32.totalorder %v828, 1
    %vm873 = vcmp.eq.s32.totalorder %v831, 1
    %vm874 = vcmp.eq.s32.totalorder %v834, 1
    %vm875 = vcmp.eq.s32.totalorder %v837, 1
    %vm876 = vcmp.eq.s32.totalorder %v840, 1
    %vm877 = vcmp.eq.s32.totalorder %v843, 1
    %vm878 = vcmp.eq.s32.totalorder %v846, 1
    %v879 = vsel %vm847, %v687, 0.0
    %v880 = vsel %vm848, %v688, 0.0
    %v881 = vsel %vm849, %v689, 0.0
    %v882 = vsel %vm850, %v690, 0.0
    %v883 = vsel %vm851, %v691, 0.0
    %v884 = vsel %vm852, %v692, 0.0
    %v885 = vsel %vm853, %v693, 0.0
    %v886 = vsel %vm854, %v694, 0.0
    %v887 = vsel %vm855, %v695, 0.0
    %v888 = vsel %vm856, %v696, 0.0
    %v889 = vsel %vm857, %v697, 0.0
    %v890 = vsel %vm858, %v698, 0.0
    %v891 = vsel %vm859, %v699, 0.0
    %v892 = vsel %vm860, %v700, 0.0
    %v893 = vsel %vm861, %v701, 0.0
    %v894 = vsel %vm862, %v702, 0.0
    %v895 = vsel %vm863, %v703, 0.0
    %v896 = vsel %vm864, %v704, 0.0
    %v897 = vsel %vm865, %v705, 0.0
    %v898 = vsel %vm866, %v706, 0.0
    %v899 = vsel %vm867, %v707, 0.0
    %v900 = vsel %vm868, %v708, 0.0
    %v901 = vsel %vm869, %v709, 0.0
    %v902 = vsel %vm870, %v710, 0.0
    %v903 = vsel %vm871, %v711, 0.0
    %v904 = vsel %vm872, %v712, 0.0
    %v905 = vsel %vm873, %v713, 0.0
    %v906 = vsel %vm874, %v714, 0.0
    %v907 = vsel %vm875, %v715, 0.0
    %v908 = vsel %vm876, %v716, 0.0
    %v909 = vsel %vm877, %v717, 0.0
    %v910 = vsel %vm878, %v718, 0.0
    %v911 = vld [vmem:[#allocation2 + $0x2] sm:$0xff]
    %v912 = vld [vmem:[#allocation2 + $0xa] sm:$0xff]
    %v913 = vld [vmem:[#allocation2 + $0x12] sm:$0xff]
    %v914 = vld [vmem:[#allocation2 + $0x1a] sm:$0xff]
    %v915 = vld [vmem:[#allocation2 + $0x22] sm:$0xff]
    %v916 = vld [vmem:[#allocation2 + $0x2a] sm:$0xff]
    %v917 = vld [vmem:[#allocation2 + $0x32] sm:$0xff]
    %v918 = vld [vmem:[#allocation2 + $0x3a] sm:$0xff]
    %v919 = vld [vmem:[#allocation2 + $0x42] sm:$0xff]
    %v920 = vld [vmem:[#allocation2 + $0x4a] sm:$0xff]
    %v921 = vld [vmem:[#allocation2 + $0x52] sm:$0xff]
    %v922 = vld [vmem:[#allocation2 + $0x5a] sm:$0xff]
    %v923 = vld [vmem:[#allocation2 + $0x62] sm:$0xff]
    %v924 = vld [vmem:[#allocation2 + $0x6a] sm:$0xff]
    %v925 = vld [vmem:[#allocation2 + $0x72] sm:$0xff]
    %v926 = vld [vmem:[#allocation2 + $0x7a] sm:$0xff]
    %v927 = vld [vmem:[#allocation2 + $0x82] sm:$0xff]
    %v928 = vld [vmem:[#allocation2 + $0x8a] sm:$0xff]
    %v929 = vld [vmem:[#allocation2 + $0x92] sm:$0xff]
    %v930 = vld [vmem:[#allocation2 + $0x9a] sm:$0xff]
    %v931 = vld [vmem:[#allocation2 + $0xa2] sm:$0xff]
    %v932 = vld [vmem:[#allocation2 + $0xaa] sm:$0xff]
    %v933 = vld [vmem:[#allocation2 + $0xb2] sm:$0xff]
    %v934 = vld [vmem:[#allocation2 + $0xba] sm:$0xff]
    %v935 = vld [vmem:[#allocation2 + $0xc2] sm:$0xff]
    %v936 = vld [vmem:[#allocation2 + $0xca] sm:$0xff]
    %v937 = vld [vmem:[#allocation2 + $0xd2] sm:$0xff]
    %v938 = vld [vmem:[#allocation2 + $0xda] sm:$0xff]
    %v939 = vld [vmem:[#allocation2 + $0xe2] sm:$0xff]
    %v940 = vld [vmem:[#allocation2 + $0xea] sm:$0xff]
    %v941 = vld [vmem:[#allocation2 + $0xf2] sm:$0xff]
    %v942 = vld [vmem:[#allocation2 + $0xfa] sm:$0xff]
    %v943 = vsel %vm153, 1, 0
    %v944 = vsel %vm154, 1, 0
    %v945 = vsel %vm155, 1, 0
    %v946 = vsel %vm156, 1, 0
    %v947 = vsel %vm157, 1, 0
    %v948 = vsel %vm158, 1, 0
    %v949 = vsel %vm159, 1, 0
    %v950 = vsel %vm160, 1, 0
    %v951 = vsel %vm161, 1, 0
    %v952 = vsel %vm162, 1, 0
    %v953 = vsel %vm163, 1, 0
    %v954 = vsel %vm164, 1, 0
    %v955 = vsel %vm165, 1, 0
    %v956 = vsel %vm166, 1, 0
    %v957 = vsel %vm167, 1, 0
    %v958 = vsel %vm168, 1, 0
    %v959 = vsel %vm169, 1, 0
    %v960 = vsel %vm170, 1, 0
    %v961 = vsel %vm171, 1, 0
    %v962 = vsel %vm172, 1, 0
    %v963 = vsel %vm173, 1, 0
    %v964 = vsel %vm174, 1, 0
    %v965 = vsel %vm175, 1, 0
    %v966 = vsel %vm176, 1, 0
    %v967 = vsel %vm177, 1, 0
    %v968 = vsel %vm178, 1, 0
    %v969 = vsel %vm179, 1, 0
    %v970 = vsel %vm180, 1, 0
    %v971 = vsel %vm181, 1, 0
    %v972 = vsel %vm182, 1, 0
    %v973 = vsel %vm183, 1, 0
    %v974 = vsel %vm184, 1, 0
    %975 = vset.pattern.permute.xlu0 0
    %976 = vperm.xlu0 %975, %v943
    %v977 = vpop.permute.xlu0 %976
    %978 = vset.pattern.permute.xlu0 0
    %979 = vperm.xlu0 %978, %v944
    %v980 = vpop.permute.xlu0 %979
    %981 = vset.pattern.permute.xlu0 0
    %982 = vperm.xlu0 %981, %v945
    %v983 = vpop.permute.xlu0 %982
    %984 = vset.pattern.permute.xlu0 0
    %985 = vperm.xlu0 %984, %v946
    %v986 = vpop.permute.xlu0 %985
    %987 = vset.pattern.permute.xlu0 0
    %988 = vperm.xlu0 %987, %v947
    %v989 = vpop.permute.xlu0 %988
    %990 = vset.pattern.permute.xlu0 0
    %991 = vperm.xlu0 %990, %v948
    %v992 = vpop.permute.xlu0 %991
    %993 = vset.pattern.permute.xlu0 0
    %994 = vperm.xlu0 %993, %v949
    %v995 = vpop.permute.xlu0 %994
    %996 = vset.pattern.permute.xlu0 0
    %997 = vperm.xlu0 %996, %v950
    %v998 = vpop.permute.xlu0 %997
    %999 = vset.pattern.permute.xlu0 0
    %1000 = vperm.xlu0 %999, %v951
    %v1001 = vpop.permute.xlu0 %1000
    %1002 = vset.pattern.permute.xlu0 0
    %1003 = vperm.xlu0 %1002, %v952
    %v1004 = vpop.permute.xlu0 %1003
    %1005 = vset.pattern.permute.xlu0 0
    %1006 = vperm.xlu0 %1005, %v953
    %v1007 = vpop.permute.xlu0 %1006
    %1008 = vset.pattern.permute.xlu0 0
    %1009 = vperm.xlu0 %1008, %v954
    %v1010 = vpop.permute.xlu0 %1009
    %1011 = vset.pattern.permute.xlu0 0
    %1012 = vperm.xlu0 %1011, %v955
    %v1013 = vpop.permute.xlu0 %1012
    %1014 = vset.pattern.permute.xlu0 0
    %1015 = vperm.xlu0 %1014, %v956
    %v1016 = vpop.permute.xlu0 %1015
    %1017 = vset.pattern.permute.xlu0 0
    %1018 = vperm.xlu0 %1017, %v957
    %v1019 = vpop.permute.xlu0 %1018
    %1020 = vset.pattern.permute.xlu0 0
    %1021 = vperm.xlu0 %1020, %v958
    %v1022 = vpop.permute.xlu0 %1021
    %1023 = vset.pattern.permute.xlu0 0
    %1024 = vperm.xlu0 %1023, %v959
    %v1025 = vpop.permute.xlu0 %1024
    %1026 = vset.pattern.permute.xlu0 0
    %1027 = vperm.xlu0 %1026, %v960
    %v1028 = vpop.permute.xlu0 %1027
    %1029 = vset.pattern.permute.xlu0 0
    %1030 = vperm.xlu0 %1029, %v961
    %v1031 = vpop.permute.xlu0 %1030
    %1032 = vset.pattern.permute.xlu0 0
    %1033 = vperm.xlu0 %1032, %v962
    %v1034 = vpop.permute.xlu0 %1033
    %1035 = vset.pattern.permute.xlu0 0
    %1036 = vperm.xlu0 %1035, %v963
    %v1037 = vpop.permute.xlu0 %1036
    %1038 = vset.pattern.permute.xlu0 0
    %1039 = vperm.xlu0 %1038, %v964
    %v1040 = vpop.permute.xlu0 %1039
    %1041 = vset.pattern.permute.xlu0 0
    %1042 = vperm.xlu0 %1041, %v965
    %v1043 = vpop.permute.xlu0 %1042
    %1044 = vset.pattern.permute.xlu0 0
    %1045 = vperm.xlu0 %1044, %v966
    %v1046 = vpop.permute.xlu0 %1045
    %1047 = vset.pattern.permute.xlu0 0
    %1048 = vperm.xlu0 %1047, %v967
    %v1049 = vpop.permute.xlu0 %1048
    %1050 = vset.pattern.permute.xlu0 0
    %1051 = vperm.xlu0 %1050, %v968
    %v1052 = vpop.permute.xlu0 %1051
    %1053 = vset.pattern.permute.xlu0 0
    %1054 = vperm.xlu0 %1053, %v969
    %v1055 = vpop.permute.xlu0 %1054
    %1056 = vset.pattern.permute.xlu0 0
    %1057 = vperm.xlu0 %1056, %v970
    %v1058 = vpop.permute.xlu0 %1057
    %1059 = vset.pattern.permute.xlu0 0
    %1060 = vperm.xlu0 %1059, %v971
    %v1061 = vpop.permute.xlu0 %1060
    %1062 = vset.pattern.permute.xlu0 0
    %1063 = vperm.xlu0 %1062, %v972
    %v1064 = vpop.permute.xlu0 %1063
    %1065 = vset.pattern.permute.xlu0 0
    %1066 = vperm.xlu0 %1065, %v973
    %v1067 = vpop.permute.xlu0 %1066
    %1068 = vset.pattern.permute.xlu0 0
    %1069 = vperm.xlu0 %1068, %v974
    %v1070 = vpop.permute.xlu0 %1069
    %vm1071 = vcmp.eq.s32.totalorder %v977, 1
    %vm1072 = vcmp.eq.s32.totalorder %v980, 1
    %vm1073 = vcmp.eq.s32.totalorder %v983, 1
    %vm1074 = vcmp.eq.s32.totalorder %v986, 1
    %vm1075 = vcmp.eq.s32.totalorder %v989, 1
    %vm1076 = vcmp.eq.s32.totalorder %v992, 1
    %vm1077 = vcmp.eq.s32.totalorder %v995, 1
    %vm1078 = vcmp.eq.s32.totalorder %v998, 1
    %vm1079 = vcmp.eq.s32.totalorder %v1001, 1
    %vm1080 = vcmp.eq.s32.totalorder %v1004, 1
    %vm1081 = vcmp.eq.s32.totalorder %v1007, 1
    %vm1082 = vcmp.eq.s32.totalorder %v1010, 1
    %vm1083 = vcmp.eq.s32.totalorder %v1013, 1
    %vm1084 = vcmp.eq.s32.totalorder %v1016, 1
    %vm1085 = vcmp.eq.s32.totalorder %v1019, 1
    %vm1086 = vcmp.eq.s32.totalorder %v1022, 1
    %vm1087 = vcmp.eq.s32.totalorder %v1025, 1
    %vm1088 = vcmp.eq.s32.totalorder %v1028, 1
    %vm1089 = vcmp.eq.s32.totalorder %v1031, 1
    %vm1090 = vcmp.eq.s32.totalorder %v1034, 1
    %vm1091 = vcmp.eq.s32.totalorder %v1037, 1
    %vm1092 = vcmp.eq.s32.totalorder %v1040, 1
    %vm1093 = vcmp.eq.s32.totalorder %v1043, 1
    %vm1094 = vcmp.eq.s32.totalorder %v1046, 1
    %vm1095 = vcmp.eq.s32.totalorder %v1049, 1
    %vm1096 = vcmp.eq.s32.totalorder %v1052, 1
    %vm1097 = vcmp.eq.s32.totalorder %v1055, 1
    %vm1098 = vcmp.eq.s32.totalorder %v1058, 1
    %vm1099 = vcmp.eq.s32.totalorder %v1061, 1
    %vm1100 = vcmp.eq.s32.totalorder %v1064, 1
    %vm1101 = vcmp.eq.s32.totalorder %v1067, 1
    %vm1102 = vcmp.eq.s32.totalorder %v1070, 1
    %v1103 = vsel %vm1071, %v911, 0.0
    %v1104 = vsel %vm1072, %v912, 0.0
    %v1105 = vsel %vm1073, %v913, 0.0
    %v1106 = vsel %vm1074, %v914, 0.0
    %v1107 = vsel %vm1075, %v915, 0.0
    %v1108 = vsel %vm1076, %v916, 0.0
    %v1109 = vsel %vm1077, %v917, 0.0
    %v1110 = vsel %vm1078, %v918, 0.0
    %v1111 = vsel %vm1079, %v919, 0.0
    %v1112 = vsel %vm1080, %v920, 0.0
    %v1113 = vsel %vm1081, %v921, 0.0
    %v1114 = vsel %vm1082, %v922, 0.0
    %v1115 = vsel %vm1083, %v923, 0.0
    %v1116 = vsel %vm1084, %v924, 0.0
    %v1117 = vsel %vm1085, %v925, 0.0
    %v1118 = vsel %vm1086, %v926, 0.0
    %v1119 = vsel %vm1087, %v927, 0.0
    %v1120 = vsel %vm1088, %v928, 0.0
    %v1121 = vsel %vm1089, %v929, 0.0
    %v1122 = vsel %vm1090, %v930, 0.0
    %v1123 = vsel %vm1091, %v931, 0.0
    %v1124 = vsel %vm1092, %v932, 0.0
    %v1125 = vsel %vm1093, %v933, 0.0
    %v1126 = vsel %vm1094, %v934, 0.0
    %v1127 = vsel %vm1095, %v935, 0.0
    %v1128 = vsel %vm1096, %v936, 0.0
    %v1129 = vsel %vm1097, %v937, 0.0
    %v1130 = vsel %vm1098, %v938, 0.0
    %v1131 = vsel %vm1099, %v939, 0.0
    %v1132 = vsel %vm1100, %v940, 0.0
    %v1133 = vsel %vm1101, %v941, 0.0
    %v1134 = vsel %vm1102, %v942, 0.0
    %v1135 = vld [vmem:[%s6] sm:$0xff]
    %v1136 = vld [vmem:[%s6 + $0x8] sm:$0xff]
    %v1137 = vld [vmem:[%s6 + $0x10] sm:$0xff]
    %v1138 = vld [vmem:[%s6 + $0x18] sm:$0xff]
    %v1139 = vld [vmem:[%s6 + $0x20] sm:$0xff]
    %v1140 = vld [vmem:[%s6 + $0x28] sm:$0xff]
    %v1141 = vld [vmem:[%s6 + $0x30] sm:$0xff]
    %v1142 = vld [vmem:[%s6 + $0x38] sm:$0xff]
    %s1143 = scalar_lea.vmem %s6, 64
    %v1144 = vld [vmem:[%s1143] sm:$0xff]
    %v1145 = vld [vmem:[%s1143 + $0x8] sm:$0xff]
    %v1146 = vld [vmem:[%s1143 + $0x10] sm:$0xff]
    %v1147 = vld [vmem:[%s1143 + $0x18] sm:$0xff]
    %v1148 = vld [vmem:[%s1143 + $0x20] sm:$0xff]
    %v1149 = vld [vmem:[%s1143 + $0x28] sm:$0xff]
    %v1150 = vld [vmem:[%s1143 + $0x30] sm:$0xff]
    %v1151 = vld [vmem:[%s1143 + $0x38] sm:$0xff]
    %v1153 = vsel %vm654, %v622, 0
    %v1156 = vsel %vm654, %v623, 0
    %v1159 = vsel %vm654, %v624, 0
    %v1162 = vsel %vm654, %v625, 0
    %v1165 = vsel %vm654, %v626, 0
    %v1168 = vsel %vm654, %v627, 0
    %v1171 = vsel %vm654, %v628, 0
    %v1174 = vsel %vm654, %v629, 0
    %v1177 = vsel %vm654, %v630, 0
    %v1180 = vsel %vm654, %v631, 0
    %v1183 = vsel %vm654, %v632, 0
    %v1186 = vsel %vm654, %v633, 0
    %v1189 = vsel %vm654, %v634, 0
    %v1192 = vsel %vm654, %v635, 0
    %v1195 = vsel %vm654, %v636, 0
    %v1198 = vsel %vm654, %v637, 0
    %v1201 = vsel %vm654, %v638, 0
    %v1204 = vsel %vm654, %v639, 0
    %v1207 = vsel %vm654, %v640, 0
    %v1210 = vsel %vm654, %v641, 0
    %v1213 = vsel %vm654, %v642, 0
    %v1216 = vsel %vm654, %v643, 0
    %v1219 = vsel %vm654, %v644, 0
    %v1222 = vsel %vm654, %v645, 0
    %v1225 = vsel %vm654, %v646, 0
    %v1228 = vsel %vm654, %v647, 0
    %v1231 = vsel %vm654, %v648, 0
    %v1234 = vsel %vm654, %v649, 0
    %v1237 = vsel %vm654, %v650, 0
    %v1240 = vsel %vm654, %v651, 0
    %v1243 = vsel %vm654, %v652, 0
    %v1246 = vsel %vm654, %v653, 0
    %1248 = vmatprep.subr.mxu0 0.0
    %1249 = vmatpush1.msra.mxu0 0.0
    %1250 = vmatprep.subr.mxu0 0.0
    %1251 = vmatpush1.msra.mxu0 0.0
    %1252 = vmatprep.subr.mxu0 0.0
    %1253 = vmatpush1.msra.mxu0 0.0
    %1254 = vmatprep.subr.mxu0 0.0
    %1255 = vmatpush1.msra.mxu0 0.0
    %1256 = vmatprep.subr.mxu0 0.0
    %1257 = vmatpush1.msra.mxu0 0.0
    %1258 = vmatprep.subr.mxu0 0.0
    %1259 = vmatpush1.msra.mxu0 0.0
    %1260 = vmatprep.subr.mxu0 0.0
    %1261 = vmatpush1.msra.mxu0 0.0
    %1262 = vmatprep.subr.mxu0 0.0
    %1263 = vmatpush1.msra.mxu0 0.0
    %1264 = vmatprep.subr.mxu0 0.0
    %1265 = vmatpush1.msra.mxu0 %v1151
    %1266 = vmatprep.subr.mxu0 0.0
    %1267 = vmatpush1.msra.mxu0 %v1150
    %1268 = vmatprep.subr.mxu0 0.0
    %1269 = vmatpush1.msra.mxu0 %v1149
    %1270 = vmatprep.subr.mxu0 0.0
    %1271 = vmatpush1.msra.mxu0 %v1148
    %1272 = vmatprep.subr.mxu0 0.0
    %1273 = vmatpush1.msra.mxu0 %v1147
    %1274 = vmatprep.subr.mxu0 0.0
    %1275 = vmatpush1.msra.mxu0 %v1146
    %1276 = vmatprep.subr.mxu0 0.0
    %1277 = vmatpush1.msra.mxu0 %v1145
    %1278 = vmatprep.subr.mxu0 0.0
    %1279 = vmatpush1.msra.mxu0 %v1144
    %1280 = vmatprep.subr.mxu0 0.0
    %1281 = vmatpush2.msra.mxu0 0.0
    %1282 = vmatprep.subr.mxu0 0.0
    %1283 = vmatpush2.msra.mxu0 0.0
    %1284 = vmatprep.subr.mxu0 0.0
    %1285 = vmatpush2.msra.mxu0 0.0
    %1286 = vmatprep.subr.mxu0 0.0
    %1287 = vmatpush2.msra.mxu0 0.0
    %1288 = vmatprep.subr.mxu0 0.0
    %1289 = vmatpush2.msra.mxu0 0.0
    %1290 = vmatprep.subr.mxu0 0.0
    %1291 = vmatpush2.msra.mxu0 0.0
    %1292 = vmatprep.subr.mxu0 0.0
    %1293 = vmatpush2.msra.mxu0 0.0
    %1294 = vmatprep.subr.mxu0 0.0
    %1295 = vmatpush2.msra.mxu0 0.0
    %1296 = vmatprep.subr.mxu0 0.0
    %1297 = vmatpush2.msra.mxu0 0.0
    %1298 = vmatprep.subr.mxu0 0.0
    %1299 = vmatpush2.msra.mxu0 0.0
    %1300 = vmatprep.subr.mxu0 0.0
    %1301 = vmatpush2.msra.mxu0 0.0
    %1302 = vmatprep.subr.mxu0 0.0
    %1303 = vmatpush2.msra.mxu0 0.0
    %1304 = vmatprep.subr.mxu0 0.0
    %1305 = vmatpush2.msra.mxu0 0.0
    %1306 = vmatprep.subr.mxu0 0.0
    %1307 = vmatpush2.msra.mxu0 0.0
    %1308 = vmatprep.subr.mxu0 0.0
    %1309 = vmatpush2.msra.mxu0 0.0
    %1310 = vmatprep.subr.mxu0 0.0
    %1311 = vmatpush2.msra.mxu0 0.0
    %1312 = vmatprep.mubr.f32.mxu0 0.0
    %1313 = vmatmul.mubr.f32.gmra.mxu0 %v1153
    %v1314 = vpop.f32.mrf.mxu0
    %v1315 = vadd.f32 0.0, %v1314
    %v1316 = vpop.f32.mrf.mxu0
    %1317 = vmatprep.mubr.f32.mxu0 0.0
    %1318 = vmatmul.mubr.f32.gmra.mxu0 %v1156
    %v1319 = vpop.f32.mrf.mxu0
    %v1320 = vadd.f32 0.0, %v1319
    %v1321 = vpop.f32.mrf.mxu0
    %1322 = vmatprep.mubr.f32.mxu0 0.0
    %1323 = vmatmul.mubr.f32.gmra.mxu0 %v1159
    %v1324 = vpop.f32.mrf.mxu0
    %v1325 = vadd.f32 0.0, %v1324
    %v1326 = vpop.f32.mrf.mxu0
    %1327 = vmatprep.mubr.f32.mxu0 0.0
    %1328 = vmatmul.mubr.f32.gmra.mxu0 %v1162
    %v1329 = vpop.f32.mrf.mxu0
    %v1330 = vadd.f32 0.0, %v1329
    %v1331 = vpop.f32.mrf.mxu0
    %1332 = vmatprep.mubr.f32.mxu0 0.0
    %1333 = vmatmul.mubr.f32.gmra.mxu0 %v1165
    %v1334 = vpop.f32.mrf.mxu0
    %v1335 = vadd.f32 0.0, %v1334
    %v1336 = vpop.f32.mrf.mxu0
    %1337 = vmatprep.mubr.f32.mxu0 0.0
    %1338 = vmatmul.mubr.f32.gmra.mxu0 %v1168
    %v1339 = vpop.f32.mrf.mxu0
    %v1340 = vadd.f32 0.0, %v1339
    %v1341 = vpop.f32.mrf.mxu0
    %1342 = vmatprep.mubr.f32.mxu0 0.0
    %1343 = vmatmul.mubr.f32.gmra.mxu0 %v1171
    %v1344 = vpop.f32.mrf.mxu0
    %v1345 = vadd.f32 0.0, %v1344
    %v1346 = vpop.f32.mrf.mxu0
    %1347 = vmatprep.mubr.f32.mxu0 0.0
    %1348 = vmatmul.mubr.f32.gmra.mxu0 %v1174
    %v1349 = vpop.f32.mrf.mxu0
    %v1350 = vadd.f32 0.0, %v1349
    %v1351 = vpop.f32.mrf.mxu0
    %1352 = vmatprep.mubr.f32.mxu0 0.0
    %1353 = vmatmul.mubr.f32.gmra.mxu0 %v1177
    %v1354 = vpop.f32.mrf.mxu0
    %v1355 = vadd.f32 0.0, %v1354
    %v1356 = vpop.f32.mrf.mxu0
    %1357 = vmatprep.mubr.f32.mxu0 0.0
    %1358 = vmatmul.mubr.f32.gmra.mxu0 %v1180
    %v1359 = vpop.f32.mrf.mxu0
    %v1360 = vadd.f32 0.0, %v1359
    %v1361 = vpop.f32.mrf.mxu0
    %1362 = vmatprep.mubr.f32.mxu0 0.0
    %1363 = vmatmul.mubr.f32.gmra.mxu0 %v1183
    %v1364 = vpop.f32.mrf.mxu0
    %v1365 = vadd.f32 0.0, %v1364
    %v1366 = vpop.f32.mrf.mxu0
    %1367 = vmatprep.mubr.f32.mxu0 0.0
    %1368 = vmatmul.mubr.f32.gmra.mxu0 %v1186
    %v1369 = vpop.f32.mrf.mxu0
    %v1370 = vadd.f32 0.0, %v1369
    %v1371 = vpop.f32.mrf.mxu0
    %1372 = vmatprep.mubr.f32.mxu0 0.0
    %1373 = vmatmul.mubr.f32.gmra.mxu0 %v1189
    %v1374 = vpop.f32.mrf.mxu0
    %v1375 = vadd.f32 0.0, %v1374
    %v1376 = vpop.f32.mrf.mxu0
    %1377 = vmatprep.mubr.f32.mxu0 0.0
    %1378 = vmatmul.mubr.f32.gmra.mxu0 %v1192
    %v1379 = vpop.f32.mrf.mxu0
    %v1380 = vadd.f32 0.0, %v1379
    %v1381 = vpop.f32.mrf.mxu0
    %1382 = vmatprep.mubr.f32.mxu0 0.0
    %1383 = vmatmul.mubr.f32.gmra.mxu0 %v1195
    %v1384 = vpop.f32.mrf.mxu0
    %v1385 = vadd.f32 0.0, %v1384
    %v1386 = vpop.f32.mrf.mxu0
    %1387 = vmatprep.mubr.f32.mxu0 0.0
    %1388 = vmatmul.mubr.f32.gmra.mxu0 %v1198
    %v1389 = vpop.f32.mrf.mxu0
    %v1390 = vadd.f32 0.0, %v1389
    %v1391 = vpop.f32.mrf.mxu0
    %1392 = vmatprep.mubr.f32.mxu0 0.0
    %1393 = vmatmul.mubr.f32.gmra.mxu0 %v1201
    %v1394 = vpop.f32.mrf.mxu0
    %v1395 = vadd.f32 0.0, %v1394
    %v1396 = vpop.f32.mrf.mxu0
    %1397 = vmatprep.mubr.f32.mxu0 0.0
    %1398 = vmatmul.mubr.f32.gmra.mxu0 %v1204
    %v1399 = vpop.f32.mrf.mxu0
    %v1400 = vadd.f32 0.0, %v1399
    %v1401 = vpop.f32.mrf.mxu0
    %1402 = vmatprep.mubr.f32.mxu0 0.0
    %1403 = vmatmul.mubr.f32.gmra.mxu0 %v1207
    %v1404 = vpop.f32.mrf.mxu0
    %v1405 = vadd.f32 0.0, %v1404
    %v1406 = vpop.f32.mrf.mxu0
    %1407 = vmatprep.mubr.f32.mxu0 0.0
    %1408 = vmatmul.mubr.f32.gmra.mxu0 %v1210
    %v1409 = vpop.f32.mrf.mxu0
    %v1410 = vadd.f32 0.0, %v1409
    %v1411 = vpop.f32.mrf.mxu0
    %1412 = vmatprep.mubr.f32.mxu0 0.0
    %1413 = vmatmul.mubr.f32.gmra.mxu0 %v1213
    %v1414 = vpop.f32.mrf.mxu0
    %v1415 = vadd.f32 0.0, %v1414
    %v1416 = vpop.f32.mrf.mxu0
    %1417 = vmatprep.mubr.f32.mxu0 0.0
    %1418 = vmatmul.mubr.f32.gmra.mxu0 %v1216
    %v1419 = vpop.f32.mrf.mxu0
    %v1420 = vadd.f32 0.0, %v1419
    %v1421 = vpop.f32.mrf.mxu0
    %1422 = vmatprep.mubr.f32.mxu0 0.0
    %1423 = vmatmul.mubr.f32.gmra.mxu0 %v1219
    %v1424 = vpop.f32.mrf.mxu0
    %v1425 = vadd.f32 0.0, %v1424
    %v1426 = vpop.f32.mrf.mxu0
    %1427 = vmatprep.mubr.f32.mxu0 0.0
    %1428 = vmatmul.mubr.f32.gmra.mxu0 %v1222
    %v1429 = vpop.f32.mrf.mxu0
    %v1430 = vadd.f32 0.0, %v1429
    %v1431 = vpop.f32.mrf.mxu0
    %1432 = vmatprep.mubr.f32.mxu0 0.0
    %1433 = vmatmul.mubr.f32.gmra.mxu0 %v1225
    %v1434 = vpop.f32.mrf.mxu0
    %v1435 = vadd.f32 0.0, %v1434
    %v1436 = vpop.f32.mrf.mxu0
    %1437 = vmatprep.mubr.f32.mxu0 0.0
    %1438 = vmatmul.mubr.f32.gmra.mxu0 %v1228
    %v1439 = vpop.f32.mrf.mxu0
    %v1440 = vadd.f32 0.0, %v1439
    %v1441 = vpop.f32.mrf.mxu0
    %1442 = vmatprep.mubr.f32.mxu0 0.0
    %1443 = vmatmul.mubr.f32.gmra.mxu0 %v1231
    %v1444 = vpop.f32.mrf.mxu0
    %v1445 = vadd.f32 0.0, %v1444
    %v1446 = vpop.f32.mrf.mxu0
    %1447 = vmatprep.mubr.f32.mxu0 0.0
    %1448 = vmatmul.mubr.f32.gmra.mxu0 %v1234
    %v1449 = vpop.f32.mrf.mxu0
    %v1450 = vadd.f32 0.0, %v1449
    %v1451 = vpop.f32.mrf.mxu0
    %1452 = vmatprep.mubr.f32.mxu0 0.0
    %1453 = vmatmul.mubr.f32.gmra.mxu0 %v1237
    %v1454 = vpop.f32.mrf.mxu0
    %v1455 = vadd.f32 0.0, %v1454
    %v1456 = vpop.f32.mrf.mxu0
    %1457 = vmatprep.mubr.f32.mxu0 0.0
    %1458 = vmatmul.mubr.f32.gmra.mxu0 %v1240
    %v1459 = vpop.f32.mrf.mxu0
    %v1460 = vadd.f32 0.0, %v1459
    %v1461 = vpop.f32.mrf.mxu0
    %1462 = vmatprep.mubr.f32.mxu0 0.0
    %1463 = vmatmul.mubr.f32.gmra.mxu0 %v1243
    %v1464 = vpop.f32.mrf.mxu0
    %v1465 = vadd.f32 0.0, %v1464
    %v1466 = vpop.f32.mrf.mxu0
    %1467 = vmatprep.mubr.f32.mxu0 0.0
    %1468 = vmatmul.mubr.f32.gmra.mxu0 %v1246
    %v1469 = vpop.f32.mrf.mxu0
    %v1470 = vadd.f32 0.0, %v1469
    %v1471 = vpop.f32.mrf.mxu0
    %1472 = vdwg.mxu0
    %v1474 = vsel %vm654, %v879, 0
    %v1477 = vsel %vm654, %v880, 0
    %v1480 = vsel %vm654, %v881, 0
    %v1483 = vsel %vm654, %v882, 0
    %v1486 = vsel %vm654, %v883, 0
    %v1489 = vsel %vm654, %v884, 0
    %v1492 = vsel %vm654, %v885, 0
    %v1495 = vsel %vm654, %v886, 0
    %v1498 = vsel %vm654, %v887, 0
    %v1501 = vsel %vm654, %v888, 0
    %v1504 = vsel %vm654, %v889, 0
    %v1507 = vsel %vm654, %v890, 0
    %v1510 = vsel %vm654, %v891, 0
    %v1513 = vsel %vm654, %v892, 0
    %v1516 = vsel %vm654, %v893, 0
    %v1519 = vsel %vm654, %v894, 0
    %v1522 = vsel %vm654, %v895, 0
    %v1525 = vsel %vm654, %v896, 0
    %v1528 = vsel %vm654, %v897, 0
    %v1531 = vsel %vm654, %v898, 0
    %v1534 = vsel %vm654, %v899, 0
    %v1537 = vsel %vm654, %v900, 0
    %v1540 = vsel %vm654, %v901, 0
    %v1543 = vsel %vm654, %v902, 0
    %v1546 = vsel %vm654, %v903, 0
    %v1549 = vsel %vm654, %v904, 0
    %v1552 = vsel %vm654, %v905, 0
    %v1555 = vsel %vm654, %v906, 0
    %v1558 = vsel %vm654, %v907, 0
    %v1561 = vsel %vm654, %v908, 0
    %v1564 = vsel %vm654, %v909, 0
    %v1567 = vsel %vm654, %v910, 0
    %1569 = vmatprep.subr.mxu0 0.0
    %1570 = vmatpush1.msra.mxu0 0.0
    %1571 = vmatprep.subr.mxu0 0.0
    %1572 = vmatpush1.msra.mxu0 0.0
    %1573 = vmatprep.subr.mxu0 0.0
    %1574 = vmatpush1.msra.mxu0 0.0
    %1575 = vmatprep.subr.mxu0 0.0
    %1576 = vmatpush1.msra.mxu0 0.0
    %1577 = vmatprep.subr.mxu0 0.0
    %1578 = vmatpush1.msra.mxu0 0.0
    %1579 = vmatprep.subr.mxu0 0.0
    %1580 = vmatpush1.msra.mxu0 0.0
    %1581 = vmatprep.subr.mxu0 0.0
    %1582 = vmatpush1.msra.mxu0 0.0
    %1583 = vmatprep.subr.mxu0 0.0
    %1584 = vmatpush1.msra.mxu0 0.0
    %1585 = vmatprep.subr.mxu0 0.0
    %1586 = vmatpush1.msra.mxu0 %v1142
    %1587 = vmatprep.subr.mxu0 0.0
    %1588 = vmatpush1.msra.mxu0 %v1141
    %1589 = vmatprep.subr.mxu0 0.0
    %1590 = vmatpush1.msra.mxu0 %v1140
    %1591 = vmatprep.subr.mxu0 0.0
    %1592 = vmatpush1.msra.mxu0 %v1139
    %1593 = vmatprep.subr.mxu0 0.0
    %1594 = vmatpush1.msra.mxu0 %v1138
    %1595 = vmatprep.subr.mxu0 0.0
    %1596 = vmatpush1.msra.mxu0 %v1137
    %1597 = vmatprep.subr.mxu0 0.0
    %1598 = vmatpush1.msra.mxu0 %v1136
    %1599 = vmatprep.subr.mxu0 0.0
    %1600 = vmatpush1.msra.mxu0 %v1135
    %1601 = vmatprep.subr.mxu0 0.0
    %1602 = vmatpush2.msra.mxu0 0.0
    %1603 = vmatprep.subr.mxu0 0.0
    %1604 = vmatpush2.msra.mxu0 0.0
    %1605 = vmatprep.subr.mxu0 0.0
    %1606 = vmatpush2.msra.mxu0 0.0
    %1607 = vmatprep.subr.mxu0 0.0
    %1608 = vmatpush2.msra.mxu0 0.0
    %1609 = vmatprep.subr.mxu0 0.0
    %1610 = vmatpush2.msra.mxu0 0.0
    %1611 = vmatprep.subr.mxu0 0.0
    %1612 = vmatpush2.msra.mxu0 0.0
    %1613 = vmatprep.subr.mxu0 0.0
    %1614 = vmatpush2.msra.mxu0 0.0
    %1615 = vmatprep.subr.mxu0 0.0
    %1616 = vmatpush2.msra.mxu0 0.0
    %1617 = vmatprep.subr.mxu0 0.0
    %1618 = vmatpush2.msra.mxu0 0.0
    %1619 = vmatprep.subr.mxu0 0.0
    %1620 = vmatpush2.msra.mxu0 0.0
    %1621 = vmatprep.subr.mxu0 0.0
    %1622 = vmatpush2.msra.mxu0 0.0
    %1623 = vmatprep.subr.mxu0 0.0
    %1624 = vmatpush2.msra.mxu0 0.0
    %1625 = vmatprep.subr.mxu0 0.0
    %1626 = vmatpush2.msra.mxu0 0.0
    %1627 = vmatprep.subr.mxu0 0.0
    %1628 = vmatpush2.msra.mxu0 0.0
    %1629 = vmatprep.subr.mxu0 0.0
    %1630 = vmatpush2.msra.mxu0 0.0
    %1631 = vmatprep.subr.mxu0 0.0
    %1632 = vmatpush2.msra.mxu0 0.0
    %1633 = vmatprep.mubr.f32.mxu0 0.0
    %1634 = vmatmul.mubr.f32.gmra.mxu0 %v1474
    %v1635 = vpop.f32.mrf.mxu0
    %v1636 = vadd.f32 %v1315, %v1635
    %v1637 = vpop.f32.mrf.mxu0
    %1638 = vmatprep.mubr.f32.mxu0 0.0
    %1639 = vmatmul.mubr.f32.gmra.mxu0 %v1477
    %v1640 = vpop.f32.mrf.mxu0
    %v1641 = vadd.f32 %v1320, %v1640
    %v1642 = vpop.f32.mrf.mxu0
    %1643 = vmatprep.mubr.f32.mxu0 0.0
    %1644 = vmatmul.mubr.f32.gmra.mxu0 %v1480
    %v1645 = vpop.f32.mrf.mxu0
    %v1646 = vadd.f32 %v1325, %v1645
    %v1647 = vpop.f32.mrf.mxu0
    %1648 = vmatprep.mubr.f32.mxu0 0.0
    %1649 = vmatmul.mubr.f32.gmra.mxu0 %v1483
    %v1650 = vpop.f32.mrf.mxu0
    %v1651 = vadd.f32 %v1330, %v1650
    %v1652 = vpop.f32.mrf.mxu0
    %1653 = vmatprep.mubr.f32.mxu0 0.0
    %1654 = vmatmul.mubr.f32.gmra.mxu0 %v1486
    %v1655 = vpop.f32.mrf.mxu0
    %v1656 = vadd.f32 %v1335, %v1655
    %v1657 = vpop.f32.mrf.mxu0
    %1658 = vmatprep.mubr.f32.mxu0 0.0
    %1659 = vmatmul.mubr.f32.gmra.mxu0 %v1489
    %v1660 = vpop.f32.mrf.mxu0
    %v1661 = vadd.f32 %v1340, %v1660
    %v1662 = vpop.f32.mrf.mxu0
    %1663 = vmatprep.mubr.f32.mxu0 0.0
    %1664 = vmatmul.mubr.f32.gmra.mxu0 %v1492
    %v1665 = vpop.f32.mrf.mxu0
    %v1666 = vadd.f32 %v1345, %v1665
    %v1667 = vpop.f32.mrf.mxu0
    %1668 = vmatprep.mubr.f32.mxu0 0.0
    %1669 = vmatmul.mubr.f32.gmra.mxu0 %v1495
    %v1670 = vpop.f32.mrf.mxu0
    %v1671 = vadd.f32 %v1350, %v1670
    %v1672 = vpop.f32.mrf.mxu0
    %1673 = vmatprep.mubr.f32.mxu0 0.0
    %1674 = vmatmul.mubr.f32.gmra.mxu0 %v1498
    %v1675 = vpop.f32.mrf.mxu0
    %v1676 = vadd.f32 %v1355, %v1675
    %v1677 = vpop.f32.mrf.mxu0
    %1678 = vmatprep.mubr.f32.mxu0 0.0
    %1679 = vmatmul.mubr.f32.gmra.mxu0 %v1501
    %v1680 = vpop.f32.mrf.mxu0
    %v1681 = vadd.f32 %v1360, %v1680
    %v1682 = vpop.f32.mrf.mxu0
    %1683 = vmatprep.mubr.f32.mxu0 0.0
    %1684 = vmatmul.mubr.f32.gmra.mxu0 %v1504
    %v1685 = vpop.f32.mrf.mxu0
    %v1686 = vadd.f32 %v1365, %v1685
    %v1687 = vpop.f32.mrf.mxu0
    %1688 = vmatprep.mubr.f32.mxu0 0.0
    %1689 = vmatmul.mubr.f32.gmra.mxu0 %v1507
    %v1690 = vpop.f32.mrf.mxu0
    %v1691 = vadd.f32 %v1370, %v1690
    %v1692 = vpop.f32.mrf.mxu0
    %1693 = vmatprep.mubr.f32.mxu0 0.0
    %1694 = vmatmul.mubr.f32.gmra.mxu0 %v1510
    %v1695 = vpop.f32.mrf.mxu0
    %v1696 = vadd.f32 %v1375, %v1695
    %v1697 = vpop.f32.mrf.mxu0
    %1698 = vmatprep.mubr.f32.mxu0 0.0
    %1699 = vmatmul.mubr.f32.gmra.mxu0 %v1513
    %v1700 = vpop.f32.mrf.mxu0
    %v1701 = vadd.f32 %v1380, %v1700
    %v1702 = vpop.f32.mrf.mxu0
    %1703 = vmatprep.mubr.f32.mxu0 0.0
    %1704 = vmatmul.mubr.f32.gmra.mxu0 %v1516
    %v1705 = vpop.f32.mrf.mxu0
    %v1706 = vadd.f32 %v1385, %v1705
    %v1707 = vpop.f32.mrf.mxu0
    %1708 = vmatprep.mubr.f32.mxu0 0.0
    %1709 = vmatmul.mubr.f32.gmra.mxu0 %v1519
    %v1710 = vpop.f32.mrf.mxu0
    %v1711 = vadd.f32 %v1390, %v1710
    %v1712 = vpop.f32.mrf.mxu0
    %1713 = vmatprep.mubr.f32.mxu0 0.0
    %1714 = vmatmul.mubr.f32.gmra.mxu0 %v1522
    %v1715 = vpop.f32.mrf.mxu0
    %v1716 = vadd.f32 %v1395, %v1715
    %v1717 = vpop.f32.mrf.mxu0
    %1718 = vmatprep.mubr.f32.mxu0 0.0
    %1719 = vmatmul.mubr.f32.gmra.mxu0 %v1525
    %v1720 = vpop.f32.mrf.mxu0
    %v1721 = vadd.f32 %v1400, %v1720
    %v1722 = vpop.f32.mrf.mxu0
    %1723 = vmatprep.mubr.f32.mxu0 0.0
    %1724 = vmatmul.mubr.f32.gmra.mxu0 %v1528
    %v1725 = vpop.f32.mrf.mxu0
    %v1726 = vadd.f32 %v1405, %v1725
    %v1727 = vpop.f32.mrf.mxu0
    %1728 = vmatprep.mubr.f32.mxu0 0.0
    %1729 = vmatmul.mubr.f32.gmra.mxu0 %v1531
    %v1730 = vpop.f32.mrf.mxu0
    %v1731 = vadd.f32 %v1410, %v1730
    %v1732 = vpop.f32.mrf.mxu0
    %1733 = vmatprep.mubr.f32.mxu0 0.0
    %1734 = vmatmul.mubr.f32.gmra.mxu0 %v1534
    %v1735 = vpop.f32.mrf.mxu0
    %v1736 = vadd.f32 %v1415, %v1735
    %v1737 = vpop.f32.mrf.mxu0
    %1738 = vmatprep.mubr.f32.mxu0 0.0
    %1739 = vmatmul.mubr.f32.gmra.mxu0 %v1537
    %v1740 = vpop.f32.mrf.mxu0
    %v1741 = vadd.f32 %v1420, %v1740
    %v1742 = vpop.f32.mrf.mxu0
    %1743 = vmatprep.mubr.f32.mxu0 0.0
    %1744 = vmatmul.mubr.f32.gmra.mxu0 %v1540
    %v1745 = vpop.f32.mrf.mxu0
    %v1746 = vadd.f32 %v1425, %v1745
    %v1747 = vpop.f32.mrf.mxu0
    %1748 = vmatprep.mubr.f32.mxu0 0.0
    %1749 = vmatmul.mubr.f32.gmra.mxu0 %v1543
    %v1750 = vpop.f32.mrf.mxu0
    %v1751 = vadd.f32 %v1430, %v1750
    %v1752 = vpop.f32.mrf.mxu0
    %1753 = vmatprep.mubr.f32.mxu0 0.0
    %1754 = vmatmul.mubr.f32.gmra.mxu0 %v1546
    %v1755 = vpop.f32.mrf.mxu0
    %v1756 = vadd.f32 %v1435, %v1755
    %v1757 = vpop.f32.mrf.mxu0
    %1758 = vmatprep.mubr.f32.mxu0 0.0
    %1759 = vmatmul.mubr.f32.gmra.mxu0 %v1549
    %v1760 = vpop.f32.mrf.mxu0
    %v1761 = vadd.f32 %v1440, %v1760
    %v1762 = vpop.f32.mrf.mxu0
    %1763 = vmatprep.mubr.f32.mxu0 0.0
    %1764 = vmatmul.mubr.f32.gmra.mxu0 %v1552
    %v1765 = vpop.f32.mrf.mxu0
    %v1766 = vadd.f32 %v1445, %v1765
    %v1767 = vpop.f32.mrf.mxu0
    %1768 = vmatprep.mubr.f32.mxu0 0.0
    %1769 = vmatmul.mubr.f32.gmra.mxu0 %v1555
    %v1770 = vpop.f32.mrf.mxu0
    %v1771 = vadd.f32 %v1450, %v1770
    %v1772 = vpop.f32.mrf.mxu0
    %1773 = vmatprep.mubr.f32.mxu0 0.0
    %1774 = vmatmul.mubr.f32.gmra.mxu0 %v1558
    %v1775 = vpop.f32.mrf.mxu0
    %v1776 = vadd.f32 %v1455, %v1775
    %v1777 = vpop.f32.mrf.mxu0
    %1778 = vmatprep.mubr.f32.mxu0 0.0
    %1779 = vmatmul.mubr.f32.gmra.mxu0 %v1561
    %v1780 = vpop.f32.mrf.mxu0
    %v1781 = vadd.f32 %v1460, %v1780
    %v1782 = vpop.f32.mrf.mxu0
    %1783 = vmatprep.mubr.f32.mxu0 0.0
    %1784 = vmatmul.mubr.f32.gmra.mxu0 %v1564
    %v1785 = vpop.f32.mrf.mxu0
    %v1786 = vadd.f32 %v1465, %v1785
    %v1787 = vpop.f32.mrf.mxu0
    %1788 = vmatprep.mubr.f32.mxu0 0.0
    %1789 = vmatmul.mubr.f32.gmra.mxu0 %v1567
    %v1790 = vpop.f32.mrf.mxu0
    %v1791 = vadd.f32 %v1470, %v1790
    %v1792 = vpop.f32.mrf.mxu0
    %1793 = vdwg.mxu0
    %s1794 = scalar_lea.vmem %s6, 128
    %v1795 = vld [vmem:[%s1794] sm:$0xff]
    %v1796 = vld [vmem:[%s1794 + $0x8] sm:$0xff]
    %v1797 = vld [vmem:[%s1794 + $0x10] sm:$0xff]
    %v1798 = vld [vmem:[%s1794 + $0x18] sm:$0xff]
    %v1799 = vld [vmem:[%s1794 + $0x20] sm:$0xff]
    %v1800 = vld [vmem:[%s1794 + $0x28] sm:$0xff]
    %v1801 = vld [vmem:[%s1794 + $0x30] sm:$0xff]
    %v1802 = vld [vmem:[%s1794 + $0x38] sm:$0xff]
    %v1804 = vsel %vm654, %v1103, 0
    %v1807 = vsel %vm654, %v1104, 0
    %v1810 = vsel %vm654, %v1105, 0
    %v1813 = vsel %vm654, %v1106, 0
    %v1816 = vsel %vm654, %v1107, 0
    %v1819 = vsel %vm654, %v1108, 0
    %v1822 = vsel %vm654, %v1109, 0
    %v1825 = vsel %vm654, %v1110, 0
    %v1828 = vsel %vm654, %v1111, 0
    %v1831 = vsel %vm654, %v1112, 0
    %v1834 = vsel %vm654, %v1113, 0
    %v1837 = vsel %vm654, %v1114, 0
    %v1840 = vsel %vm654, %v1115, 0
    %v1843 = vsel %vm654, %v1116, 0
    %v1846 = vsel %vm654, %v1117, 0
    %v1849 = vsel %vm654, %v1118, 0
    %v1852 = vsel %vm654, %v1119, 0
    %v1855 = vsel %vm654, %v1120, 0
    %v1858 = vsel %vm654, %v1121, 0
    %v1861 = vsel %vm654, %v1122, 0
    %v1864 = vsel %vm654, %v1123, 0
    %v1867 = vsel %vm654, %v1124, 0
    %v1870 = vsel %vm654, %v1125, 0
    %v1873 = vsel %vm654, %v1126, 0
    %v1876 = vsel %vm654, %v1127, 0
    %v1879 = vsel %vm654, %v1128, 0
    %v1882 = vsel %vm654, %v1129, 0
    %v1885 = vsel %vm654, %v1130, 0
    %v1888 = vsel %vm654, %v1131, 0
    %v1891 = vsel %vm654, %v1132, 0
    %v1894 = vsel %vm654, %v1133, 0
    %v1897 = vsel %vm654, %v1134, 0
    %1899 = vmatprep.subr.mxu0 0.0
    %1900 = vmatpush1.msra.mxu0 0.0
    %1901 = vmatprep.subr.mxu0 0.0
    %1902 = vmatpush1.msra.mxu0 0.0
    %1903 = vmatprep.subr.mxu0 0.0
    %1904 = vmatpush1.msra.mxu0 0.0
    %1905 = vmatprep.subr.mxu0 0.0
    %1906 = vmatpush1.msra.mxu0 0.0
    %1907 = vmatprep.subr.mxu0 0.0
    %1908 = vmatpush1.msra.mxu0 0.0
    %1909 = vmatprep.subr.mxu0 0.0
    %1910 = vmatpush1.msra.mxu0 0.0
    %1911 = vmatprep.subr.mxu0 0.0
    %1912 = vmatpush1.msra.mxu0 0.0
    %1913 = vmatprep.subr.mxu0 0.0
    %1914 = vmatpush1.msra.mxu0 0.0
    %1915 = vmatprep.subr.mxu0 0.0
    %1916 = vmatpush1.msra.mxu0 %v1802
    %1917 = vmatprep.subr.mxu0 0.0
    %1918 = vmatpush1.msra.mxu0 %v1801
    %1919 = vmatprep.subr.mxu0 0.0
    %1920 = vmatpush1.msra.mxu0 %v1800
    %1921 = vmatprep.subr.mxu0 0.0
    %1922 = vmatpush1.msra.mxu0 %v1799
    %1923 = vmatprep.subr.mxu0 0.0
    %1924 = vmatpush1.msra.mxu0 %v1798
    %1925 = vmatprep.subr.mxu0 0.0
    %1926 = vmatpush1.msra.mxu0 %v1797
    %1927 = vmatprep.subr.mxu0 0.0
    %1928 = vmatpush1.msra.mxu0 %v1796
    %1929 = vmatprep.subr.mxu0 0.0
    %1930 = vmatpush1.msra.mxu0 %v1795
    %1931 = vmatprep.subr.mxu0 0.0
    %1932 = vmatpush2.msra.mxu0 0.0
    %1933 = vmatprep.subr.mxu0 0.0
    %1934 = vmatpush2.msra.mxu0 0.0
    %1935 = vmatprep.subr.mxu0 0.0
    %1936 = vmatpush2.msra.mxu0 0.0
    %1937 = vmatprep.subr.mxu0 0.0
    %1938 = vmatpush2.msra.mxu0 0.0
    %1939 = vmatprep.subr.mxu0 0.0
    %1940 = vmatpush2.msra.mxu0 0.0
    %1941 = vmatprep.subr.mxu0 0.0
    %1942 = vmatpush2.msra.mxu0 0.0
    %1943 = vmatprep.subr.mxu0 0.0
    %1944 = vmatpush2.msra.mxu0 0.0
    %1945 = vmatprep.subr.mxu0 0.0
    %1946 = vmatpush2.msra.mxu0 0.0
    %1947 = vmatprep.subr.mxu0 0.0
    %1948 = vmatpush2.msra.mxu0 0.0
    %1949 = vmatprep.subr.mxu0 0.0
    %1950 = vmatpush2.msra.mxu0 0.0
    %1951 = vmatprep.subr.mxu0 0.0
    %1952 = vmatpush2.msra.mxu0 0.0
    %1953 = vmatprep.subr.mxu0 0.0
    %1954 = vmatpush2.msra.mxu0 0.0
    %1955 = vmatprep.subr.mxu0 0.0
    %1956 = vmatpush2.msra.mxu0 0.0
    %1957 = vmatprep.subr.mxu0 0.0
    %1958 = vmatpush2.msra.mxu0 0.0
    %1959 = vmatprep.subr.mxu0 0.0
    %1960 = vmatpush2.msra.mxu0 0.0
    %1961 = vmatprep.subr.mxu0 0.0
    %1962 = vmatpush2.msra.mxu0 0.0
    %1963 = vmatprep.mubr.f32.mxu0 0.0
    %1964 = vmatmul.mubr.f32.gmra.mxu0 %v1804
    %v1965 = vpop.f32.mrf.mxu0
    %v1966 = vadd.f32 0.0, %v1965
    %v1967 = vpop.f32.mrf.mxu0
    %1968 = vmatprep.mubr.f32.mxu0 0.0
    %1969 = vmatmul.mubr.f32.gmra.mxu0 %v1807
    %v1970 = vpop.f32.mrf.mxu0
    %v1971 = vadd.f32 0.0, %v1970
    %v1972 = vpop.f32.mrf.mxu0
    %1973 = vmatprep.mubr.f32.mxu0 0.0
    %1974 = vmatmul.mubr.f32.gmra.mxu0 %v1810
    %v1975 = vpop.f32.mrf.mxu0
    %v1976 = vadd.f32 0.0, %v1975
    %v1977 = vpop.f32.mrf.mxu0
    %1978 = vmatprep.mubr.f32.mxu0 0.0
    %1979 = vmatmul.mubr.f32.gmra.mxu0 %v1813
    %v1980 = vpop.f32.mrf.mxu0
    %v1981 = vadd.f32 0.0, %v1980
    %v1982 = vpop.f32.mrf.mxu0
    %1983 = vmatprep.mubr.f32.mxu0 0.0
    %1984 = vmatmul.mubr.f32.gmra.mxu0 %v1816
    %v1985 = vpop.f32.mrf.mxu0
    %v1986 = vadd.f32 0.0, %v1985
    %v1987 = vpop.f32.mrf.mxu0
    %1988 = vmatprep.mubr.f32.mxu0 0.0
    %1989 = vmatmul.mubr.f32.gmra.mxu0 %v1819
    %v1990 = vpop.f32.mrf.mxu0
    %v1991 = vadd.f32 0.0, %v1990
    %v1992 = vpop.f32.mrf.mxu0
    %1993 = vmatprep.mubr.f32.mxu0 0.0
    %1994 = vmatmul.mubr.f32.gmra.mxu0 %v1822
    %v1995 = vpop.f32.mrf.mxu0
    %v1996 = vadd.f32 0.0, %v1995
    %v1997 = vpop.f32.mrf.mxu0
    %1998 = vmatprep.mubr.f32.mxu0 0.0
    %1999 = vmatmul.mubr.f32.gmra.mxu0 %v1825
    %v2000 = vpop.f32.mrf.mxu0
    %v2001 = vadd.f32 0.0, %v2000
    %v2002 = vpop.f32.mrf.mxu0
    %2003 = vmatprep.mubr.f32.mxu0 0.0
    %2004 = vmatmul.mubr.f32.gmra.mxu0 %v1828
    %v2005 = vpop.f32.mrf.mxu0
    %v2006 = vadd.f32 0.0, %v2005
    %v2007 = vpop.f32.mrf.mxu0
    %2008 = vmatprep.mubr.f32.mxu0 0.0
    %2009 = vmatmul.mubr.f32.gmra.mxu0 %v1831
    %v2010 = vpop.f32.mrf.mxu0
    %v2011 = vadd.f32 0.0, %v2010
    %v2012 = vpop.f32.mrf.mxu0
    %2013 = vmatprep.mubr.f32.mxu0 0.0
    %2014 = vmatmul.mubr.f32.gmra.mxu0 %v1834
    %v2015 = vpop.f32.mrf.mxu0
    %v2016 = vadd.f32 0.0, %v2015
    %v2017 = vpop.f32.mrf.mxu0
    %2018 = vmatprep.mubr.f32.mxu0 0.0
    %2019 = vmatmul.mubr.f32.gmra.mxu0 %v1837
    %v2020 = vpop.f32.mrf.mxu0
    %v2021 = vadd.f32 0.0, %v2020
    %v2022 = vpop.f32.mrf.mxu0
    %2023 = vmatprep.mubr.f32.mxu0 0.0
    %2024 = vmatmul.mubr.f32.gmra.mxu0 %v1840
    %v2025 = vpop.f32.mrf.mxu0
    %v2026 = vadd.f32 0.0, %v2025
    %v2027 = vpop.f32.mrf.mxu0
    %2028 = vmatprep.mubr.f32.mxu0 0.0
    %2029 = vmatmul.mubr.f32.gmra.mxu0 %v1843
    %v2030 = vpop.f32.mrf.mxu0
    %v2031 = vadd.f32 0.0, %v2030
    %v2032 = vpop.f32.mrf.mxu0
    %2033 = vmatprep.mubr.f32.mxu0 0.0
    %2034 = vmatmul.mubr.f32.gmra.mxu0 %v1846
    %v2035 = vpop.f32.mrf.mxu0
    %v2036 = vadd.f32 0.0, %v2035
    %v2037 = vpop.f32.mrf.mxu0
    %2038 = vmatprep.mubr.f32.mxu0 0.0
    %2039 = vmatmul.mubr.f32.gmra.mxu0 %v1849
    %v2040 = vpop.f32.mrf.mxu0
    %v2041 = vadd.f32 0.0, %v2040
    %v2042 = vpop.f32.mrf.mxu0
    %2043 = vmatprep.mubr.f32.mxu0 0.0
    %2044 = vmatmul.mubr.f32.gmra.mxu0 %v1852
    %v2045 = vpop.f32.mrf.mxu0
    %v2046 = vadd.f32 0.0, %v2045
    %v2047 = vpop.f32.mrf.mxu0
    %2048 = vmatprep.mubr.f32.mxu0 0.0
    %2049 = vmatmul.mubr.f32.gmra.mxu0 %v1855
    %v2050 = vpop.f32.mrf.mxu0
    %v2051 = vadd.f32 0.0, %v2050
    %v2052 = vpop.f32.mrf.mxu0
    %2053 = vmatprep.mubr.f32.mxu0 0.0
    %2054 = vmatmul.mubr.f32.gmra.mxu0 %v1858
    %v2055 = vpop.f32.mrf.mxu0
    %v2056 = vadd.f32 0.0, %v2055
    %v2057 = vpop.f32.mrf.mxu0
    %2058 = vmatprep.mubr.f32.mxu0 0.0
    %2059 = vmatmul.mubr.f32.gmra.mxu0 %v1861
    %v2060 = vpop.f32.mrf.mxu0
    %v2061 = vadd.f32 0.0, %v2060
    %v2062 = vpop.f32.mrf.mxu0
    %2063 = vmatprep.mubr.f32.mxu0 0.0
    %2064 = vmatmul.mubr.f32.gmra.mxu0 %v1864
    %v2065 = vpop.f32.mrf.mxu0
    %v2066 = vadd.f32 0.0, %v2065
    %v2067 = vpop.f32.mrf.mxu0
    %2068 = vmatprep.mubr.f32.mxu0 0.0
    %2069 = vmatmul.mubr.f32.gmra.mxu0 %v1867
    %v2070 = vpop.f32.mrf.mxu0
    %v2071 = vadd.f32 0.0, %v2070
    %v2072 = vpop.f32.mrf.mxu0
    %2073 = vmatprep.mubr.f32.mxu0 0.0
    %2074 = vmatmul.mubr.f32.gmra.mxu0 %v1870
    %v2075 = vpop.f32.mrf.mxu0
    %v2076 = vadd.f32 0.0, %v2075
    %v2077 = vpop.f32.mrf.mxu0
    %2078 = vmatprep.mubr.f32.mxu0 0.0
    %2079 = vmatmul.mubr.f32.gmra.mxu0 %v1873
    %v2080 = vpop.f32.mrf.mxu0
    %v2081 = vadd.f32 0.0, %v2080
    %v2082 = vpop.f32.mrf.mxu0
    %2083 = vmatprep.mubr.f32.mxu0 0.0
    %2084 = vmatmul.mubr.f32.gmra.mxu0 %v1876
    %v2085 = vpop.f32.mrf.mxu0
    %v2086 = vadd.f32 0.0, %v2085
    %v2087 = vpop.f32.mrf.mxu0
    %2088 = vmatprep.mubr.f32.mxu0 0.0
    %2089 = vmatmul.mubr.f32.gmra.mxu0 %v1879
    %v2090 = vpop.f32.mrf.mxu0
    %v2091 = vadd.f32 0.0, %v2090
    %v2092 = vpop.f32.mrf.mxu0
    %2093 = vmatprep.mubr.f32.mxu0 0.0
    %2094 = vmatmul.mubr.f32.gmra.mxu0 %v1882
    %v2095 = vpop.f32.mrf.mxu0
    %v2096 = vadd.f32 0.0, %v2095
    %v2097 = vpop.f32.mrf.mxu0
    %2098 = vmatprep.mubr.f32.mxu0 0.0
    %2099 = vmatmul.mubr.f32.gmra.mxu0 %v1885
    %v2100 = vpop.f32.mrf.mxu0
    %v2101 = vadd.f32 0.0, %v2100
    %v2102 = vpop.f32.mrf.mxu0
    %2103 = vmatprep.mubr.f32.mxu0 0.0
    %2104 = vmatmul.mubr.f32.gmra.mxu0 %v1888
    %v2105 = vpop.f32.mrf.mxu0
    %v2106 = vadd.f32 0.0, %v2105
    %v2107 = vpop.f32.mrf.mxu0
    %2108 = vmatprep.mubr.f32.mxu0 0.0
    %2109 = vmatmul.mubr.f32.gmra.mxu0 %v1891
    %v2110 = vpop.f32.mrf.mxu0
    %v2111 = vadd.f32 0.0, %v2110
    %v2112 = vpop.f32.mrf.mxu0
    %2113 = vmatprep.mubr.f32.mxu0 0.0
    %2114 = vmatmul.mubr.f32.gmra.mxu0 %v1894
    %v2115 = vpop.f32.mrf.mxu0
    %v2116 = vadd.f32 0.0, %v2115
    %v2117 = vpop.f32.mrf.mxu0
    %2118 = vmatprep.mubr.f32.mxu0 0.0
    %2119 = vmatmul.mubr.f32.gmra.mxu0 %v1897
    %v2120 = vpop.f32.mrf.mxu0
    %v2121 = vadd.f32 0.0, %v2120
    %v2122 = vpop.f32.mrf.mxu0
    %2123 = vdwg.mxu0
    %v2124 = vadd.f32 %v1636, %v1966
    %v2125 = vadd.f32 %v1641, %v1971
    %v2126 = vadd.f32 %v1646, %v1976
    %v2127 = vadd.f32 %v1651, %v1981
    %v2128 = vadd.f32 %v1656, %v1986
    %v2129 = vadd.f32 %v1661, %v1991
    %v2130 = vadd.f32 %v1666, %v1996
    %v2131 = vadd.f32 %v1671, %v2001
    %v2132 = vadd.f32 %v1676, %v2006
    %v2133 = vadd.f32 %v1681, %v2011
    %v2134 = vadd.f32 %v1686, %v2016
    %v2135 = vadd.f32 %v1691, %v2021
    %v2136 = vadd.f32 %v1696, %v2026
    %v2137 = vadd.f32 %v1701, %v2031
    %v2138 = vadd.f32 %v1706, %v2036
    %v2139 = vadd.f32 %v1711, %v2041
    %v2140 = vadd.f32 %v1716, %v2046
    %v2141 = vadd.f32 %v1721, %v2051
    %v2142 = vadd.f32 %v1726, %v2056
    %v2143 = vadd.f32 %v1731, %v2061
    %v2144 = vadd.f32 %v1736, %v2066
    %v2145 = vadd.f32 %v1741, %v2071
    %v2146 = vadd.f32 %v1746, %v2076
    %v2147 = vadd.f32 %v1751, %v2081
    %v2148 = vadd.f32 %v1756, %v2086
    %v2149 = vadd.f32 %v1761, %v2091
    %v2150 = vadd.f32 %v1766, %v2096
    %v2151 = vadd.f32 %v1771, %v2101
    %v2152 = vadd.f32 %v1776, %v2106
    %v2153 = vadd.f32 %v1781, %v2111
    %v2154 = vadd.f32 %v1786, %v2116
    %v2155 = vadd.f32 %v1791, %v2121
    %v2156 = vld [vmem:[%s7] sm:$0x1]
    %v2158 = vlaneseq
    %v2159 = vshrl.u32 %v2158, 7
    %v2160 = vsub.s32 0, %v2159
    %v2161 = vrot.slane %v2156, %v2160
    %v2163 = vmul.f32 %v2124, %v2161
    %v2164 = vmul.f32 %v2125, %v2161
    %v2165 = vmul.f32 %v2126, %v2161
    %v2166 = vmul.f32 %v2127, %v2161
    %v2167 = vmul.f32 %v2128, %v2161
    %v2168 = vmul.f32 %v2129, %v2161
    %v2169 = vmul.f32 %v2130, %v2161
    %v2170 = vmul.f32 %v2131, %v2161
    %v2171 = vmul.f32 %v2132, %v2161
    %v2172 = vmul.f32 %v2133, %v2161
    %v2173 = vmul.f32 %v2134, %v2161
    %v2174 = vmul.f32 %v2135, %v2161
    %v2175 = vmul.f32 %v2136, %v2161
    %v2176 = vmul.f32 %v2137, %v2161
    %v2177 = vmul.f32 %v2138, %v2161
    %v2178 = vmul.f32 %v2139, %v2161
    %v2179 = vmul.f32 %v2140, %v2161
    %v2180 = vmul.f32 %v2141, %v2161
    %v2181 = vmul.f32 %v2142, %v2161
    %v2182 = vmul.f32 %v2143, %v2161
    %v2183 = vmul.f32 %v2144, %v2161
    %v2184 = vmul.f32 %v2145, %v2161
    %v2185 = vmul.f32 %v2146, %v2161
    %v2186 = vmul.f32 %v2147, %v2161
    %v2187 = vmul.f32 %v2148, %v2161
    %v2188 = vmul.f32 %v2149, %v2161
    %v2189 = vmul.f32 %v2150, %v2161
    %v2190 = vmul.f32 %v2151, %v2161
    %v2191 = vmul.f32 %v2152, %v2161
    %v2192 = vmul.f32 %v2153, %v2161
    %v2193 = vmul.f32 %v2154, %v2161
    %v2194 = vmul.f32 %v2155, %v2161
    %v2195 = vld [vmem:[%s8] sm:$0x1]
    %v2197 = vlaneseq
    %v2198 = vshrl.u32 %v2197, 7
    %v2199 = vsub.s32 0, %v2198
    %v2200 = vrot.slane %v2195, %v2199
    %v2202 = vadd.f32 %v2163, %v2200
    %v2203 = vadd.f32 %v2164, %v2200
    %v2204 = vadd.f32 %v2165, %v2200
    %v2205 = vadd.f32 %v2166, %v2200
    %v2206 = vadd.f32 %v2167, %v2200
    %v2207 = vadd.f32 %v2168, %v2200
    %v2208 = vadd.f32 %v2169, %v2200
    %v2209 = vadd.f32 %v2170, %v2200
    %v2210 = vadd.f32 %v2171, %v2200
    %v2211 = vadd.f32 %v2172, %v2200
    %v2212 = vadd.f32 %v2173, %v2200
    %v2213 = vadd.f32 %v2174, %v2200
    %v2214 = vadd.f32 %v2175, %v2200
    %v2215 = vadd.f32 %v2176, %v2200
    %v2216 = vadd.f32 %v2177, %v2200
    %v2217 = vadd.f32 %v2178, %v2200
    %v2218 = vadd.f32 %v2179, %v2200
    %v2219 = vadd.f32 %v2180, %v2200
    %v2220 = vadd.f32 %v2181, %v2200
    %v2221 = vadd.f32 %v2182, %v2200
    %v2222 = vadd.f32 %v2183, %v2200
    %v2223 = vadd.f32 %v2184, %v2200
    %v2224 = vadd.f32 %v2185, %v2200
    %v2225 = vadd.f32 %v2186, %v2200
    %v2226 = vadd.f32 %v2187, %v2200
    %v2227 = vadd.f32 %v2188, %v2200
    %v2228 = vadd.f32 %v2189, %v2200
    %v2229 = vadd.f32 %v2190, %v2200
    %v2230 = vadd.f32 %v2191, %v2200
    %v2231 = vadd.f32 %v2192, %v2200
    %v2232 = vadd.f32 %v2193, %v2200
    %v2233 = vadd.f32 %v2194, %v2200
    %v2234 = vmax.f32 %v2202, 0.0
    %v2235 = vmax.f32 %v2203, 0.0
    %v2236 = vmax.f32 %v2204, 0.0
    %v2237 = vmax.f32 %v2205, 0.0
    %v2238 = vmax.f32 %v2206, 0.0
    %v2239 = vmax.f32 %v2207, 0.0
    %v2240 = vmax.f32 %v2208, 0.0
    %v2241 = vmax.f32 %v2209, 0.0
    %v2242 = vmax.f32 %v2210, 0.0
    %v2243 = vmax.f32 %v2211, 0.0
    %v2244 = vmax.f32 %v2212, 0.0
    %v2245 = vmax.f32 %v2213, 0.0
    %v2246 = vmax.f32 %v2214, 0.0
    %v2247 = vmax.f32 %v2215, 0.0
    %v2248 = vmax.f32 %v2216, 0.0
    %v2249 = vmax.f32 %v2217, 0.0
    %v2250 = vmax.f32 %v2218, 0.0
    %v2251 = vmax.f32 %v2219, 0.0
    %v2252 = vmax.f32 %v2220, 0.0
    %v2253 = vmax.f32 %v2221, 0.0
    %v2254 = vmax.f32 %v2222, 0.0
    %v2255 = vmax.f32 %v2223, 0.0
    %v2256 = vmax.f32 %v2224, 0.0
    %v2257 = vmax.f32 %v2225, 0.0
    %v2258 = vmax.f32 %v2226, 0.0
    %v2259 = vmax.f32 %v2227, 0.0
    %v2260 = vmax.f32 %v2228, 0.0
    %v2261 = vmax.f32 %v2229, 0.0
    %v2262 = vmax.f32 %v2230, 0.0
    %v2263 = vmax.f32 %v2231, 0.0
    %v2264 = vmax.f32 %v2232, 0.0
    %v2265 = vmax.f32 %v2233, 0.0
    %2266 = vst [vmem:[#allocation3 + $0x1] sm:$0xff] %v2234
    %2267 = vst [vmem:[#allocation3 + $0x9] sm:$0xff] %v2235
    %2268 = vst [vmem:[#allocation3 + $0x11] sm:$0xff] %v2236
    %2269 = vst [vmem:[#allocation3 + $0x19] sm:$0xff] %v2237
    %2270 = vst [vmem:[#allocation3 + $0x21] sm:$0xff] %v2238
    %2271 = vst [vmem:[#allocation3 + $0x29] sm:$0xff] %v2239
    %2272 = vst [vmem:[#allocation3 + $0x31] sm:$0xff] %v2240
    %2273 = vst [vmem:[#allocation3 + $0x39] sm:$0xff] %v2241
    %2274 = vst [vmem:[#allocation3 + $0x41] sm:$0xff] %v2242
    %2275 = vst [vmem:[#allocation3 + $0x49] sm:$0xff] %v2243
    %2276 = vst [vmem:[#allocation3 + $0x51] sm:$0xff] %v2244
    %2277 = vst [vmem:[#allocation3 + $0x59] sm:$0xff] %v2245
    %2278 = vst [vmem:[#allocation3 + $0x61] sm:$0xff] %v2246
    %2279 = vst [vmem:[#allocation3 + $0x69] sm:$0xff] %v2247
    %2280 = vst [vmem:[#allocation3 + $0x71] sm:$0xff] %v2248
    %2281 = vst [vmem:[#allocation3 + $0x79] sm:$0xff] %v2249
    %2282 = vst [vmem:[#allocation3 + $0x81] sm:$0xff] %v2250
    %2283 = vst [vmem:[#allocation3 + $0x89] sm:$0xff] %v2251
    %2284 = vst [vmem:[#allocation3 + $0x91] sm:$0xff] %v2252
    %2285 = vst [vmem:[#allocation3 + $0x99] sm:$0xff] %v2253
    %2286 = vst [vmem:[#allocation3 + $0xa1] sm:$0xff] %v2254
    %2287 = vst [vmem:[#allocation3 + $0xa9] sm:$0xff] %v2255
    %2288 = vst [vmem:[#allocation3 + $0xb1] sm:$0xff] %v2256
    %2289 = vst [vmem:[#allocation3 + $0xb9] sm:$0xff] %v2257
    %2290 = vst [vmem:[#allocation3 + $0xc1] sm:$0xff] %v2258
    %2291 = vst [vmem:[#allocation3 + $0xc9] sm:$0xff] %v2259
    %2292 = vst [vmem:[#allocation3 + $0xd1] sm:$0xff] %v2260
    %2293 = vst [vmem:[#allocation3 + $0xd9] sm:$0xff] %v2261
    %2294 = vst [vmem:[#allocation3 + $0xe1] sm:$0xff] %v2262
    %2295 = vst [vmem:[#allocation3 + $0xe9] sm:$0xff] %v2263
    %2296 = vst [vmem:[#allocation3 + $0xf1] sm:$0xff] %v2264
    %2297 = vst [vmem:[#allocation3 + $0xf9] sm:$0xff] %v2265
    %v2298 = vld [vmem:[#allocation3] sm:$0xff]
    %v2299 = vld [vmem:[#allocation3 + $0x8] sm:$0xff]
    %v2300 = vld [vmem:[#allocation3 + $0x10] sm:$0xff]
    %v2301 = vld [vmem:[#allocation3 + $0x18] sm:$0xff]
    %v2302 = vld [vmem:[#allocation3 + $0x20] sm:$0xff]
    %v2303 = vld [vmem:[#allocation3 + $0x28] sm:$0xff]
    %v2304 = vld [vmem:[#allocation3 + $0x30] sm:$0xff]
    %v2305 = vld [vmem:[#allocation3 + $0x38] sm:$0xff]
    %v2306 = vld [vmem:[#allocation3 + $0x40] sm:$0xff]
    %v2307 = vld [vmem:[#allocation3 + $0x48] sm:$0xff]
    %v2308 = vld [vmem:[#allocation3 + $0x50] sm:$0xff]
    %v2309 = vld [vmem:[#allocation3 + $0x58] sm:$0xff]
    %v2310 = vld [vmem:[#allocation3 + $0x60] sm:$0xff]
    %v2311 = vld [vmem:[#allocation3 + $0x68] sm:$0xff]
    %v2312 = vld [vmem:[#allocation3 + $0x70] sm:$0xff]
    %v2313 = vld [vmem:[#allocation3 + $0x78] sm:$0xff]
    %v2314 = vld [vmem:[#allocation3 + $0x80] sm:$0xff]
    %v2315 = vld [vmem:[#allocation3 + $0x88] sm:$0xff]
    %v2316 = vld [vmem:[#allocation3 + $0x90] sm:$0xff]
    %v2317 = vld [vmem:[#allocation3 + $0x98] sm:$0xff]
    %v2318 = vld [vmem:[#allocation3 + $0xa0] sm:$0xff]
    %v2319 = vld [vmem:[#allocation3 + $0xa8] sm:$0xff]
    %v2320 = vld [vmem:[#allocation3 + $0xb0] sm:$0xff]
    %v2321 = vld [vmem:[#allocation3 + $0xb8] sm:$0xff]
    %v2322 = vld [vmem:[#allocation3 + $0xc0] sm:$0xff]
    %v2323 = vld [vmem:[#allocation3 + $0xc8] sm:$0xff]
    %v2324 = vld [vmem:[#allocation3 + $0xd0] sm:$0xff]
    %v2325 = vld [vmem:[#allocation3 + $0xd8] sm:$0xff]
    %v2326 = vld [vmem:[#allocation3 + $0xe0] sm:$0xff]
    %v2327 = vld [vmem:[#allocation3 + $0xe8] sm:$0xff]
    %v2328 = vld [vmem:[#allocation3 + $0xf0] sm:$0xff]
    %v2329 = vld [vmem:[#allocation3 + $0xf8] sm:$0xff]
    %v2330 = vsel %vm847, %v2298, 0.0
    %v2331 = vsel %vm848, %v2299, 0.0
    %v2332 = vsel %vm849, %v2300, 0.0
    %v2333 = vsel %vm850, %v2301, 0.0
    %v2334 = vsel %vm851, %v2302, 0.0
    %v2335 = vsel %vm852, %v2303, 0.0
    %v2336 = vsel %vm853, %v2304, 0.0
    %v2337 = vsel %vm854, %v2305, 0.0
    %v2338 = vsel %vm855, %v2306, 0.0
    %v2339 = vsel %vm856, %v2307, 0.0
    %v2340 = vsel %vm857, %v2308, 0.0
    %v2341 = vsel %vm858, %v2309, 0.0
    %v2342 = vsel %vm859, %v2310, 0.0
    %v2343 = vsel %vm860, %v2311, 0.0
    %v2344 = vsel %vm861, %v2312, 0.0
    %v2345 = vsel %vm862, %v2313, 0.0
    %v2346 = vsel %vm863, %v2314, 0.0
    %v2347 = vsel %vm864, %v2315, 0.0
    %v2348 = vsel %vm865, %v2316, 0.0
    %v2349 = vsel %vm866, %v2317, 0.0
    %v2350 = vsel %vm867, %v2318, 0.0
    %v2351 = vsel %vm868, %v2319, 0.0
    %v2352 = vsel %vm869, %v2320, 0.0
    %v2353 = vsel %vm870, %v2321, 0.0
    %v2354 = vsel %vm871, %v2322, 0.0
    %v2355 = vsel %vm872, %v2323, 0.0
    %v2356 = vsel %vm873, %v2324, 0.0
    %v2357 = vsel %vm874, %v2325, 0.0
    %v2358 = vsel %vm875, %v2326, 0.0
    %v2359 = vsel %vm876, %v2327, 0.0
    %v2360 = vsel %vm877, %v2328, 0.0
    %v2361 = vsel %vm878, %v2329, 0.0
    %v2362 = vld [vmem:[#allocation3 + $0x2] sm:$0xff]
    %v2363 = vld [vmem:[#allocation3 + $0xa] sm:$0xff]
    %v2364 = vld [vmem:[#allocation3 + $0x12] sm:$0xff]
    %v2365 = vld [vmem:[#allocation3 + $0x1a] sm:$0xff]
    %v2366 = vld [vmem:[#allocation3 + $0x22] sm:$0xff]
    %v2367 = vld [vmem:[#allocation3 + $0x2a] sm:$0xff]
    %v2368 = vld [vmem:[#allocation3 + $0x32] sm:$0xff]
    %v2369 = vld [vmem:[#allocation3 + $0x3a] sm:$0xff]
    %v2370 = vld [vmem:[#allocation3 + $0x42] sm:$0xff]
    %v2371 = vld [vmem:[#allocation3 + $0x4a] sm:$0xff]
    %v2372 = vld [vmem:[#allocation3 + $0x52] sm:$0xff]
    %v2373 = vld [vmem:[#allocation3 + $0x5a] sm:$0xff]
    %v2374 = vld [vmem:[#allocation3 + $0x62] sm:$0xff]
    %v2375 = vld [vmem:[#allocation3 + $0x6a] sm:$0xff]
    %v2376 = vld [vmem:[#allocation3 + $0x72] sm:$0xff]
    %v2377 = vld [vmem:[#allocation3 + $0x7a] sm:$0xff]
    %v2378 = vld [vmem:[#allocation3 + $0x82] sm:$0xff]
    %v2379 = vld [vmem:[#allocation3 + $0x8a] sm:$0xff]
    %v2380 = vld [vmem:[#allocation3 + $0x92] sm:$0xff]
    %v2381 = vld [vmem:[#allocation3 + $0x9a] sm:$0xff]
    %v2382 = vld [vmem:[#allocation3 + $0xa2] sm:$0xff]
    %v2383 = vld [vmem:[#allocation3 + $0xaa] sm:$0xff]
    %v2384 = vld [vmem:[#allocation3 + $0xb2] sm:$0xff]
    %v2385 = vld [vmem:[#allocation3 + $0xba] sm:$0xff]
    %v2386 = vld [vmem:[#allocation3 + $0xc2] sm:$0xff]
    %v2387 = vld [vmem:[#allocation3 + $0xca] sm:$0xff]
    %v2388 = vld [vmem:[#allocation3 + $0xd2] sm:$0xff]
    %v2389 = vld [vmem:[#allocation3 + $0xda] sm:$0xff]
    %v2390 = vld [vmem:[#allocation3 + $0xe2] sm:$0xff]
    %v2391 = vld [vmem:[#allocation3 + $0xea] sm:$0xff]
    %v2392 = vld [vmem:[#allocation3 + $0xf2] sm:$0xff]
    %v2393 = vld [vmem:[#allocation3 + $0xfa] sm:$0xff]
    %v2394 = vsel %vm1071, %v2362, 0.0
    %v2395 = vsel %vm1072, %v2363, 0.0
    %v2396 = vsel %vm1073, %v2364, 0.0
    %v2397 = vsel %vm1074, %v2365, 0.0
    %v2398 = vsel %vm1075, %v2366, 0.0
    %v2399 = vsel %vm1076, %v2367, 0.0
    %v2400 = vsel %vm1077, %v2368, 0.0
    %v2401 = vsel %vm1078, %v2369, 0.0
    %v2402 = vsel %vm1079, %v2370, 0.0
    %v2403 = vsel %vm1080, %v2371, 0.0
    %v2404 = vsel %vm1081, %v2372, 0.0
    %v2405 = vsel %vm1082, %v2373, 0.0
    %v2406 = vsel %vm1083, %v2374, 0.0
    %v2407 = vsel %vm1084, %v2375, 0.0
    %v2408 = vsel %vm1085, %v2376, 0.0
    %v2409 = vsel %vm1086, %v2377, 0.0
    %v2410 = vsel %vm1087, %v2378, 0.0
    %v2411 = vsel %vm1088, %v2379, 0.0
    %v2412 = vsel %vm1089, %v2380, 0.0
    %v2413 = vsel %vm1090, %v2381, 0.0
    %v2414 = vsel %vm1091, %v2382, 0.0
    %v2415 = vsel %vm1092, %v2383, 0.0
    %v2416 = vsel %vm1093, %v2384, 0.0
    %v2417 = vsel %vm1094, %v2385, 0.0
    %v2418 = vsel %vm1095, %v2386, 0.0
    %v2419 = vsel %vm1096, %v2387, 0.0
    %v2420 = vsel %vm1097, %v2388, 0.0
    %v2421 = vsel %vm1098, %v2389, 0.0
    %v2422 = vsel %vm1099, %v2390, 0.0
    %v2423 = vsel %vm1100, %v2391, 0.0
    %v2424 = vsel %vm1101, %v2392, 0.0
    %v2425 = vsel %vm1102, %v2393, 0.0
    %v2426 = vld [vmem:[%s9] sm:$0xff]
    %v2427 = vld [vmem:[%s9 + $0x8] sm:$0xff]
    %v2428 = vld [vmem:[%s9 + $0x10] sm:$0xff]
    %v2429 = vld [vmem:[%s9 + $0x18] sm:$0xff]
    %v2430 = vld [vmem:[%s9 + $0x20] sm:$0xff]
    %v2431 = vld [vmem:[%s9 + $0x28] sm:$0xff]
    %v2432 = vld [vmem:[%s9 + $0x30] sm:$0xff]
    %v2433 = vld [vmem:[%s9 + $0x38] sm:$0xff]
    %v2434 = vld [vmem:[%s9 + $0x40] sm:$0xff]
    %v2435 = vld [vmem:[%s9 + $0x48] sm:$0xff]
    %v2436 = vld [vmem:[%s9 + $0x50] sm:$0xff]
    %v2437 = vld [vmem:[%s9 + $0x58] sm:$0xff]
    %v2438 = vld [vmem:[%s9 + $0x60] sm:$0xff]
    %v2439 = vld [vmem:[%s9 + $0x68] sm:$0xff]
    %v2440 = vld [vmem:[%s9 + $0x70] sm:$0xff]
    %v2441 = vld [vmem:[%s9 + $0x78] sm:$0xff]
    %s2442 = scalar_lea.vmem %s9, 128
    %v2443 = vld [vmem:[%s2442] sm:$0xff]
    %v2444 = vld [vmem:[%s2442 + $0x8] sm:$0xff]
    %v2445 = vld [vmem:[%s2442 + $0x10] sm:$0xff]
    %v2446 = vld [vmem:[%s2442 + $0x18] sm:$0xff]
    %v2447 = vld [vmem:[%s2442 + $0x20] sm:$0xff]
    %v2448 = vld [vmem:[%s2442 + $0x28] sm:$0xff]
    %v2449 = vld [vmem:[%s2442 + $0x30] sm:$0xff]
    %v2450 = vld [vmem:[%s2442 + $0x38] sm:$0xff]
    %v2451 = vld [vmem:[%s2442 + $0x40] sm:$0xff]
    %v2452 = vld [vmem:[%s2442 + $0x48] sm:$0xff]
    %v2453 = vld [vmem:[%s2442 + $0x50] sm:$0xff]
    %v2454 = vld [vmem:[%s2442 + $0x58] sm:$0xff]
    %v2455 = vld [vmem:[%s2442 + $0x60] sm:$0xff]
    %v2456 = vld [vmem:[%s2442 + $0x68] sm:$0xff]
    %v2457 = vld [vmem:[%s2442 + $0x70] sm:$0xff]
    %v2458 = vld [vmem:[%s2442 + $0x78] sm:$0xff]
    %2459 = vmatprep.subr.mxu0 0.0
    %2460 = vmatpush1.msra.mxu0 %v2458
    %2461 = vmatprep.subr.mxu0 0.0
    %2462 = vmatpush1.msra.mxu0 %v2457
    %2463 = vmatprep.subr.mxu0 0.0
    %2464 = vmatpush1.msra.mxu0 %v2456
    %2465 = vmatprep.subr.mxu0 0.0
    %2466 = vmatpush1.msra.mxu0 %v2455
    %2467 = vmatprep.subr.mxu0 0.0
    %2468 = vmatpush1.msra.mxu0 %v2454
    %2469 = vmatprep.subr.mxu0 0.0
    %2470 = vmatpush1.msra.mxu0 %v2453
    %2471 = vmatprep.subr.mxu0 0.0
    %2472 = vmatpush1.msra.mxu0 %v2452
    %2473 = vmatprep.subr.mxu0 0.0
    %2474 = vmatpush1.msra.mxu0 %v2451
    %2475 = vmatprep.subr.mxu0 0.0
    %2476 = vmatpush1.msra.mxu0 %v2450
    %2477 = vmatprep.subr.mxu0 0.0
    %2478 = vmatpush1.msra.mxu0 %v2449
    %2479 = vmatprep.subr.mxu0 0.0
    %2480 = vmatpush1.msra.mxu0 %v2448
    %2481 = vmatprep.subr.mxu0 0.0
    %2482 = vmatpush1.msra.mxu0 %v2447
    %2483 = vmatprep.subr.mxu0 0.0
    %2484 = vmatpush1.msra.mxu0 %v2446
    %2485 = vmatprep.subr.mxu0 0.0
    %2486 = vmatpush1.msra.mxu0 %v2445
    %2487 = vmatprep.subr.mxu0 0.0
    %2488 = vmatpush1.msra.mxu0 %v2444
    %2489 = vmatprep.subr.mxu0 0.0
    %2490 = vmatpush1.msra.mxu0 %v2443
    %2491 = vmatprep.subr.mxu0 0.0
    %2492 = vmatpush2.msra.mxu0 0.0
    %2493 = vmatprep.subr.mxu0 0.0
    %2494 = vmatpush2.msra.mxu0 0.0
    %2495 = vmatprep.subr.mxu0 0.0
    %2496 = vmatpush2.msra.mxu0 0.0
    %2497 = vmatprep.subr.mxu0 0.0
    %2498 = vmatpush2.msra.mxu0 0.0
    %2499 = vmatprep.subr.mxu0 0.0
    %2500 = vmatpush2.msra.mxu0 0.0
    %2501 = vmatprep.subr.mxu0 0.0
    %2502 = vmatpush2.msra.mxu0 0.0
    %2503 = vmatprep.subr.mxu0 0.0
    %2504 = vmatpush2.msra.mxu0 0.0
    %2505 = vmatprep.subr.mxu0 0.0
    %2506 = vmatpush2.msra.mxu0 0.0
    %2507 = vmatprep.subr.mxu0 0.0
    %2508 = vmatpush2.msra.mxu0 0.0
    %2509 = vmatprep.subr.mxu0 0.0
    %2510 = vmatpush2.msra.mxu0 0.0
    %2511 = vmatprep.subr.mxu0 0.0
    %2512 = vmatpush2.msra.mxu0 0.0
    %2513 = vmatprep.subr.mxu0 0.0
    %2514 = vmatpush2.msra.mxu0 0.0
    %2515 = vmatprep.subr.mxu0 0.0
    %2516 = vmatpush2.msra.mxu0 0.0
    %2517 = vmatprep.subr.mxu0 0.0
    %2518 = vmatpush2.msra.mxu0 0.0
    %2519 = vmatprep.subr.mxu0 0.0
    %2520 = vmatpush2.msra.mxu0 0.0
    %2521 = vmatprep.subr.mxu0 0.0
    %2522 = vmatpush2.msra.mxu0 0.0
    %2523 = vmatprep.mubr.f32.mxu0 0.0
    %2524 = vmatmul.mubr.f32.gmra.mxu0 %v2234
    %v2525 = vpop.f32.mrf.mxu0
    %v2526 = vadd.f32 0.0, %v2525
    %v2527 = vpop.f32.mrf.mxu0
    %2528 = vmatprep.mubr.f32.mxu0 0.0
    %2529 = vmatmul.mubr.f32.gmra.mxu0 %v2235
    %v2530 = vpop.f32.mrf.mxu0
    %v2531 = vadd.f32 0.0, %v2530
    %v2532 = vpop.f32.mrf.mxu0
    %2533 = vmatprep.mubr.f32.mxu0 0.0
    %2534 = vmatmul.mubr.f32.gmra.mxu0 %v2236
    %v2535 = vpop.f32.mrf.mxu0
    %v2536 = vadd.f32 0.0, %v2535
    %v2537 = vpop.f32.mrf.mxu0
    %2538 = vmatprep.mubr.f32.mxu0 0.0
    %2539 = vmatmul.mubr.f32.gmra.mxu0 %v2237
    %v2540 = vpop.f32.mrf.mxu0
    %v2541 = vadd.f32 0.0, %v2540
    %v2542 = vpop.f32.mrf.mxu0
    %2543 = vmatprep.mubr.f32.mxu0 0.0
    %2544 = vmatmul.mubr.f32.gmra.mxu0 %v2238
    %v2545 = vpop.f32.mrf.mxu0
    %v2546 = vadd.f32 0.0, %v2545
    %v2547 = vpop.f32.mrf.mxu0
    %2548 = vmatprep.mubr.f32.mxu0 0.0
    %2549 = vmatmul.mubr.f32.gmra.mxu0 %v2239
    %v2550 = vpop.f32.mrf.mxu0
    %v2551 = vadd.f32 0.0, %v2550
    %v2552 = vpop.f32.mrf.mxu0
    %2553 = vmatprep.mubr.f32.mxu0 0.0
    %2554 = vmatmul.mubr.f32.gmra.mxu0 %v2240
    %v2555 = vpop.f32.mrf.mxu0
    %v2556 = vadd.f32 0.0, %v2555
    %v2557 = vpop.f32.mrf.mxu0
    %2558 = vmatprep.mubr.f32.mxu0 0.0
    %2559 = vmatmul.mubr.f32.gmra.mxu0 %v2241
    %v2560 = vpop.f32.mrf.mxu0
    %v2561 = vadd.f32 0.0, %v2560
    %v2562 = vpop.f32.mrf.mxu0
    %2563 = vmatprep.mubr.f32.mxu0 0.0
    %2564 = vmatmul.mubr.f32.gmra.mxu0 %v2242
    %v2565 = vpop.f32.mrf.mxu0
    %v2566 = vadd.f32 0.0, %v2565
    %v2567 = vpop.f32.mrf.mxu0
    %2568 = vmatprep.mubr.f32.mxu0 0.0
    %2569 = vmatmul.mubr.f32.gmra.mxu0 %v2243
    %v2570 = vpop.f32.mrf.mxu0
    %v2571 = vadd.f32 0.0, %v2570
    %v2572 = vpop.f32.mrf.mxu0
    %2573 = vmatprep.mubr.f32.mxu0 0.0
    %2574 = vmatmul.mubr.f32.gmra.mxu0 %v2244
    %v2575 = vpop.f32.mrf.mxu0
    %v2576 = vadd.f32 0.0, %v2575
    %v2577 = vpop.f32.mrf.mxu0
    %2578 = vmatprep.mubr.f32.mxu0 0.0
    %2579 = vmatmul.mubr.f32.gmra.mxu0 %v2245
    %v2580 = vpop.f32.mrf.mxu0
    %v2581 = vadd.f32 0.0, %v2580
    %v2582 = vpop.f32.mrf.mxu0
    %2583 = vmatprep.mubr.f32.mxu0 0.0
    %2584 = vmatmul.mubr.f32.gmra.mxu0 %v2246
    %v2585 = vpop.f32.mrf.mxu0
    %v2586 = vadd.f32 0.0, %v2585
    %v2587 = vpop.f32.mrf.mxu0
    %2588 = vmatprep.mubr.f32.mxu0 0.0
    %2589 = vmatmul.mubr.f32.gmra.mxu0 %v2247
    %v2590 = vpop.f32.mrf.mxu0
    %v2591 = vadd.f32 0.0, %v2590
    %v2592 = vpop.f32.mrf.mxu0
    %2593 = vmatprep.mubr.f32.mxu0 0.0
    %2594 = vmatmul.mubr.f32.gmra.mxu0 %v2248
    %v2595 = vpop.f32.mrf.mxu0
    %v2596 = vadd.f32 0.0, %v2595
    %v2597 = vpop.f32.mrf.mxu0
    %2598 = vmatprep.mubr.f32.mxu0 0.0
    %2599 = vmatmul.mubr.f32.gmra.mxu0 %v2249
    %v2600 = vpop.f32.mrf.mxu0
    %v2601 = vadd.f32 0.0, %v2600
    %v2602 = vpop.f32.mrf.mxu0
    %2603 = vmatprep.mubr.f32.mxu0 0.0
    %2604 = vmatmul.mubr.f32.gmra.mxu0 %v2250
    %v2605 = vpop.f32.mrf.mxu0
    %v2606 = vadd.f32 0.0, %v2605
    %v2607 = vpop.f32.mrf.mxu0
    %2608 = vmatprep.mubr.f32.mxu0 0.0
    %2609 = vmatmul.mubr.f32.gmra.mxu0 %v2251
    %v2610 = vpop.f32.mrf.mxu0
    %v2611 = vadd.f32 0.0, %v2610
    %v2612 = vpop.f32.mrf.mxu0
    %2613 = vmatprep.mubr.f32.mxu0 0.0
    %2614 = vmatmul.mubr.f32.gmra.mxu0 %v2252
    %v2615 = vpop.f32.mrf.mxu0
    %v2616 = vadd.f32 0.0, %v2615
    %v2617 = vpop.f32.mrf.mxu0
    %2618 = vmatprep.mubr.f32.mxu0 0.0
    %2619 = vmatmul.mubr.f32.gmra.mxu0 %v2253
    %v2620 = vpop.f32.mrf.mxu0
    %v2621 = vadd.f32 0.0, %v2620
    %v2622 = vpop.f32.mrf.mxu0
    %2623 = vmatprep.mubr.f32.mxu0 0.0
    %2624 = vmatmul.mubr.f32.gmra.mxu0 %v2254
    %v2625 = vpop.f32.mrf.mxu0
    %v2626 = vadd.f32 0.0, %v2625
    %v2627 = vpop.f32.mrf.mxu0
    %2628 = vmatprep.mubr.f32.mxu0 0.0
    %2629 = vmatmul.mubr.f32.gmra.mxu0 %v2255
    %v2630 = vpop.f32.mrf.mxu0
    %v2631 = vadd.f32 0.0, %v2630
    %v2632 = vpop.f32.mrf.mxu0
    %2633 = vmatprep.mubr.f32.mxu0 0.0
    %2634 = vmatmul.mubr.f32.gmra.mxu0 %v2256
    %v2635 = vpop.f32.mrf.mxu0
    %v2636 = vadd.f32 0.0, %v2635
    %v2637 = vpop.f32.mrf.mxu0
    %2638 = vmatprep.mubr.f32.mxu0 0.0
    %2639 = vmatmul.mubr.f32.gmra.mxu0 %v2257
    %v2640 = vpop.f32.mrf.mxu0
    %v2641 = vadd.f32 0.0, %v2640
    %v2642 = vpop.f32.mrf.mxu0
    %2643 = vmatprep.mubr.f32.mxu0 0.0
    %2644 = vmatmul.mubr.f32.gmra.mxu0 %v2258
    %v2645 = vpop.f32.mrf.mxu0
    %v2646 = vadd.f32 0.0, %v2645
    %v2647 = vpop.f32.mrf.mxu0
    %2648 = vmatprep.mubr.f32.mxu0 0.0
    %2649 = vmatmul.mubr.f32.gmra.mxu0 %v2259
    %v2650 = vpop.f32.mrf.mxu0
    %v2651 = vadd.f32 0.0, %v2650
    %v2652 = vpop.f32.mrf.mxu0
    %2653 = vmatprep.mubr.f32.mxu0 0.0
    %2654 = vmatmul.mubr.f32.gmra.mxu0 %v2260
    %v2655 = vpop.f32.mrf.mxu0
    %v2656 = vadd.f32 0.0, %v2655
    %v2657 = vpop.f32.mrf.mxu0
    %2658 = vmatprep.mubr.f32.mxu0 0.0
    %2659 = vmatmul.mubr.f32.gmra.mxu0 %v2261
    %v2660 = vpop.f32.mrf.mxu0
    %v2661 = vadd.f32 0.0, %v2660
    %v2662 = vpop.f32.mrf.mxu0
    %2663 = vmatprep.mubr.f32.mxu0 0.0
    %2664 = vmatmul.mubr.f32.gmra.mxu0 %v2262
    %v2665 = vpop.f32.mrf.mxu0
    %v2666 = vadd.f32 0.0, %v2665
    %v2667 = vpop.f32.mrf.mxu0
    %2668 = vmatprep.mubr.f32.mxu0 0.0
    %2669 = vmatmul.mubr.f32.gmra.mxu0 %v2263
    %v2670 = vpop.f32.mrf.mxu0
    %v2671 = vadd.f32 0.0, %v2670
    %v2672 = vpop.f32.mrf.mxu0
    %2673 = vmatprep.mubr.f32.mxu0 0.0
    %2674 = vmatmul.mubr.f32.gmra.mxu0 %v2264
    %v2675 = vpop.f32.mrf.mxu0
    %v2676 = vadd.f32 0.0, %v2675
    %v2677 = vpop.f32.mrf.mxu0
    %2678 = vmatprep.mubr.f32.mxu0 0.0
    %2679 = vmatmul.mubr.f32.gmra.mxu0 %v2265
    %v2680 = vpop.f32.mrf.mxu0
    %v2681 = vadd.f32 0.0, %v2680
    %v2682 = vpop.f32.mrf.mxu0
    %2683 = vdwg.mxu0
    %2684 = vmatprep.subr.mxu0 0.0
    %2685 = vmatpush1.msra.mxu0 %v2441
    %2686 = vmatprep.subr.mxu0 0.0
    %2687 = vmatpush1.msra.mxu0 %v2440
    %2688 = vmatprep.subr.mxu0 0.0
    %2689 = vmatpush1.msra.mxu0 %v2439
    %2690 = vmatprep.subr.mxu0 0.0
    %2691 = vmatpush1.msra.mxu0 %v2438
    %2692 = vmatprep.subr.mxu0 0.0
    %2693 = vmatpush1.msra.mxu0 %v2437
    %2694 = vmatprep.subr.mxu0 0.0
    %2695 = vmatpush1.msra.mxu0 %v2436
    %2696 = vmatprep.subr.mxu0 0.0
    %2697 = vmatpush1.msra.mxu0 %v2435
    %2698 = vmatprep.subr.mxu0 0.0
    %2699 = vmatpush1.msra.mxu0 %v2434
    %2700 = vmatprep.subr.mxu0 0.0
    %2701 = vmatpush1.msra.mxu0 %v2433
    %2702 = vmatprep.subr.mxu0 0.0
    %2703 = vmatpush1.msra.mxu0 %v2432
    %2704 = vmatprep.subr.mxu0 0.0
    %2705 = vmatpush1.msra.mxu0 %v2431
    %2706 = vmatprep.subr.mxu0 0.0
    %2707 = vmatpush1.msra.mxu0 %v2430
    %2708 = vmatprep.subr.mxu0 0.0
    %2709 = vmatpush1.msra.mxu0 %v2429
    %2710 = vmatprep.subr.mxu0 0.0
    %2711 = vmatpush1.msra.mxu0 %v2428
    %2712 = vmatprep.subr.mxu0 0.0
    %2713 = vmatpush1.msra.mxu0 %v2427
    %2714 = vmatprep.subr.mxu0 0.0
    %2715 = vmatpush1.msra.mxu0 %v2426
    %2716 = vmatprep.subr.mxu0 0.0
    %2717 = vmatpush2.msra.mxu0 0.0
    %2718 = vmatprep.subr.mxu0 0.0
    %2719 = vmatpush2.msra.mxu0 0.0
    %2720 = vmatprep.subr.mxu0 0.0
    %2721 = vmatpush2.msra.mxu0 0.0
    %2722 = vmatprep.subr.mxu0 0.0
    %2723 = vmatpush2.msra.mxu0 0.0
    %2724 = vmatprep.subr.mxu0 0.0
    %2725 = vmatpush2.msra.mxu0 0.0
    %2726 = vmatprep.subr.mxu0 0.0
    %2727 = vmatpush2.msra.mxu0 0.0
    %2728 = vmatprep.subr.mxu0 0.0
    %2729 = vmatpush2.msra.mxu0 0.0
    %2730 = vmatprep.subr.mxu0 0.0
    %2731 = vmatpush2.msra.mxu0 0.0
    %2732 = vmatprep.subr.mxu0 0.0
    %2733 = vmatpush2.msra.mxu0 0.0
    %2734 = vmatprep.subr.mxu0 0.0
    %2735 = vmatpush2.msra.mxu0 0.0
    %2736 = vmatprep.subr.mxu0 0.0
    %2737 = vmatpush2.msra.mxu0 0.0
    %2738 = vmatprep.subr.mxu0 0.0
    %2739 = vmatpush2.msra.mxu0 0.0
    %2740 = vmatprep.subr.mxu0 0.0
    %2741 = vmatpush2.msra.mxu0 0.0
    %2742 = vmatprep.subr.mxu0 0.0
    %2743 = vmatpush2.msra.mxu0 0.0
    %2744 = vmatprep.subr.mxu0 0.0
    %2745 = vmatpush2.msra.mxu0 0.0
    %2746 = vmatprep.subr.mxu0 0.0
    %2747 = vmatpush2.msra.mxu0 0.0
    %2748 = vmatprep.mubr.f32.mxu0 0.0
    %2749 = vmatmul.mubr.f32.gmra.mxu0 %v2330
    %v2750 = vpop.f32.mrf.mxu0
    %v2751 = vadd.f32 %v2526, %v2750
    %v2752 = vpop.f32.mrf.mxu0
    %2753 = vmatprep.mubr.f32.mxu0 0.0
    %2754 = vmatmul.mubr.f32.gmra.mxu0 %v2331
    %v2755 = vpop.f32.mrf.mxu0
    %v2756 = vadd.f32 %v2531, %v2755
    %v2757 = vpop.f32.mrf.mxu0
    %2758 = vmatprep.mubr.f32.mxu0 0.0
    %2759 = vmatmul.mubr.f32.gmra.mxu0 %v2332
    %v2760 = vpop.f32.mrf.mxu0
    %v2761 = vadd.f32 %v2536, %v2760
    %v2762 = vpop.f32.mrf.mxu0
    %2763 = vmatprep.mubr.f32.mxu0 0.0
    %2764 = vmatmul.mubr.f32.gmra.mxu0 %v2333
    %v2765 = vpop.f32.mrf.mxu0
    %v2766 = vadd.f32 %v2541, %v2765
    %v2767 = vpop.f32.mrf.mxu0
    %2768 = vmatprep.mubr.f32.mxu0 0.0
    %2769 = vmatmul.mubr.f32.gmra.mxu0 %v2334
    %v2770 = vpop.f32.mrf.mxu0
    %v2771 = vadd.f32 %v2546, %v2770
    %v2772 = vpop.f32.mrf.mxu0
    %2773 = vmatprep.mubr.f32.mxu0 0.0
    %2774 = vmatmul.mubr.f32.gmra.mxu0 %v2335
    %v2775 = vpop.f32.mrf.mxu0
    %v2776 = vadd.f32 %v2551, %v2775
    %v2777 = vpop.f32.mrf.mxu0
    %2778 = vmatprep.mubr.f32.mxu0 0.0
    %2779 = vmatmul.mubr.f32.gmra.mxu0 %v2336
    %v2780 = vpop.f32.mrf.mxu0
    %v2781 = vadd.f32 %v2556, %v2780
    %v2782 = vpop.f32.mrf.mxu0
    %2783 = vmatprep.mubr.f32.mxu0 0.0
    %2784 = vmatmul.mubr.f32.gmra.mxu0 %v2337
    %v2785 = vpop.f32.mrf.mxu0
    %v2786 = vadd.f32 %v2561, %v2785
    %v2787 = vpop.f32.mrf.mxu0
    %2788 = vmatprep.mubr.f32.mxu0 0.0
    %2789 = vmatmul.mubr.f32.gmra.mxu0 %v2338
    %v2790 = vpop.f32.mrf.mxu0
    %v2791 = vadd.f32 %v2566, %v2790
    %v2792 = vpop.f32.mrf.mxu0
    %2793 = vmatprep.mubr.f32.mxu0 0.0
    %2794 = vmatmul.mubr.f32.gmra.mxu0 %v2339
    %v2795 = vpop.f32.mrf.mxu0
    %v2796 = vadd.f32 %v2571, %v2795
    %v2797 = vpop.f32.mrf.mxu0
    %2798 = vmatprep.mubr.f32.mxu0 0.0
    %2799 = vmatmul.mubr.f32.gmra.mxu0 %v2340
    %v2800 = vpop.f32.mrf.mxu0
    %v2801 = vadd.f32 %v2576, %v2800
    %v2802 = vpop.f32.mrf.mxu0
    %2803 = vmatprep.mubr.f32.mxu0 0.0
    %2804 = vmatmul.mubr.f32.gmra.mxu0 %v2341
    %v2805 = vpop.f32.mrf.mxu0
    %v2806 = vadd.f32 %v2581, %v2805
    %v2807 = vpop.f32.mrf.mxu0
    %2808 = vmatprep.mubr.f32.mxu0 0.0
    %2809 = vmatmul.mubr.f32.gmra.mxu0 %v2342
    %v2810 = vpop.f32.mrf.mxu0
    %v2811 = vadd.f32 %v2586, %v2810
    %v2812 = vpop.f32.mrf.mxu0
    %2813 = vmatprep.mubr.f32.mxu0 0.0
    %2814 = vmatmul.mubr.f32.gmra.mxu0 %v2343
    %v2815 = vpop.f32.mrf.mxu0
    %v2816 = vadd.f32 %v2591, %v2815
    %v2817 = vpop.f32.mrf.mxu0
    %2818 = vmatprep.mubr.f32.mxu0 0.0
    %2819 = vmatmul.mubr.f32.gmra.mxu0 %v2344
    %v2820 = vpop.f32.mrf.mxu0
    %v2821 = vadd.f32 %v2596, %v2820
    %v2822 = vpop.f32.mrf.mxu0
    %2823 = vmatprep.mubr.f32.mxu0 0.0
    %2824 = vmatmul.mubr.f32.gmra.mxu0 %v2345
    %v2825 = vpop.f32.mrf.mxu0
    %v2826 = vadd.f32 %v2601, %v2825
    %v2827 = vpop.f32.mrf.mxu0
    %2828 = vmatprep.mubr.f32.mxu0 0.0
    %2829 = vmatmul.mubr.f32.gmra.mxu0 %v2346
    %v2830 = vpop.f32.mrf.mxu0
    %v2831 = vadd.f32 %v2606, %v2830
    %v2832 = vpop.f32.mrf.mxu0
    %2833 = vmatprep.mubr.f32.mxu0 0.0
    %2834 = vmatmul.mubr.f32.gmra.mxu0 %v2347
    %v2835 = vpop.f32.mrf.mxu0
    %v2836 = vadd.f32 %v2611, %v2835
    %v2837 = vpop.f32.mrf.mxu0
    %2838 = vmatprep.mubr.f32.mxu0 0.0
    %2839 = vmatmul.mubr.f32.gmra.mxu0 %v2348
    %v2840 = vpop.f32.mrf.mxu0
    %v2841 = vadd.f32 %v2616, %v2840
    %v2842 = vpop.f32.mrf.mxu0
    %2843 = vmatprep.mubr.f32.mxu0 0.0
    %2844 = vmatmul.mubr.f32.gmra.mxu0 %v2349
    %v2845 = vpop.f32.mrf.mxu0
    %v2846 = vadd.f32 %v2621, %v2845
    %v2847 = vpop.f32.mrf.mxu0
    %2848 = vmatprep.mubr.f32.mxu0 0.0
    %2849 = vmatmul.mubr.f32.gmra.mxu0 %v2350
    %v2850 = vpop.f32.mrf.mxu0
    %v2851 = vadd.f32 %v2626, %v2850
    %v2852 = vpop.f32.mrf.mxu0
    %2853 = vmatprep.mubr.f32.mxu0 0.0
    %2854 = vmatmul.mubr.f32.gmra.mxu0 %v2351
    %v2855 = vpop.f32.mrf.mxu0
    %v2856 = vadd.f32 %v2631, %v2855
    %v2857 = vpop.f32.mrf.mxu0
    %2858 = vmatprep.mubr.f32.mxu0 0.0
    %2859 = vmatmul.mubr.f32.gmra.mxu0 %v2352
    %v2860 = vpop.f32.mrf.mxu0
    %v2861 = vadd.f32 %v2636, %v2860
    %v2862 = vpop.f32.mrf.mxu0
    %2863 = vmatprep.mubr.f32.mxu0 0.0
    %2864 = vmatmul.mubr.f32.gmra.mxu0 %v2353
    %v2865 = vpop.f32.mrf.mxu0
    %v2866 = vadd.f32 %v2641, %v2865
    %v2867 = vpop.f32.mrf.mxu0
    %2868 = vmatprep.mubr.f32.mxu0 0.0
    %2869 = vmatmul.mubr.f32.gmra.mxu0 %v2354
    %v2870 = vpop.f32.mrf.mxu0
    %v2871 = vadd.f32 %v2646, %v2870
    %v2872 = vpop.f32.mrf.mxu0
    %2873 = vmatprep.mubr.f32.mxu0 0.0
    %2874 = vmatmul.mubr.f32.gmra.mxu0 %v2355
    %v2875 = vpop.f32.mrf.mxu0
    %v2876 = vadd.f32 %v2651, %v2875
    %v2877 = vpop.f32.mrf.mxu0
    %2878 = vmatprep.mubr.f32.mxu0 0.0
    %2879 = vmatmul.mubr.f32.gmra.mxu0 %v2356
    %v2880 = vpop.f32.mrf.mxu0
    %v2881 = vadd.f32 %v2656, %v2880
    %v2882 = vpop.f32.mrf.mxu0
    %2883 = vmatprep.mubr.f32.mxu0 0.0
    %2884 = vmatmul.mubr.f32.gmra.mxu0 %v2357
    %v2885 = vpop.f32.mrf.mxu0
    %v2886 = vadd.f32 %v2661, %v2885
    %v2887 = vpop.f32.mrf.mxu0
    %2888 = vmatprep.mubr.f32.mxu0 0.0
    %2889 = vmatmul.mubr.f32.gmra.mxu0 %v2358
    %v2890 = vpop.f32.mrf.mxu0
    %v2891 = vadd.f32 %v2666, %v2890
    %v2892 = vpop.f32.mrf.mxu0
    %2893 = vmatprep.mubr.f32.mxu0 0.0
    %2894 = vmatmul.mubr.f32.gmra.mxu0 %v2359
    %v2895 = vpop.f32.mrf.mxu0
    %v2896 = vadd.f32 %v2671, %v2895
    %v2897 = vpop.f32.mrf.mxu0
    %2898 = vmatprep.mubr.f32.mxu0 0.0
    %2899 = vmatmul.mubr.f32.gmra.mxu0 %v2360
    %v2900 = vpop.f32.mrf.mxu0
    %v2901 = vadd.f32 %v2676, %v2900
    %v2902 = vpop.f32.mrf.mxu0
    %2903 = vmatprep.mubr.f32.mxu0 0.0
    %2904 = vmatmul.mubr.f32.gmra.mxu0 %v2361
    %v2905 = vpop.f32.mrf.mxu0
    %v2906 = vadd.f32 %v2681, %v2905
    %v2907 = vpop.f32.mrf.mxu0
    %2908 = vdwg.mxu0
    %s2909 = scalar_lea.vmem %s9, 256
    %v2910 = vld [vmem:[%s2909] sm:$0xff]
    %v2911 = vld [vmem:[%s2909 + $0x8] sm:$0xff]
    %v2912 = vld [vmem:[%s2909 + $0x10] sm:$0xff]
    %v2913 = vld [vmem:[%s2909 + $0x18] sm:$0xff]
    %v2914 = vld [vmem:[%s2909 + $0x20] sm:$0xff]
    %v2915 = vld [vmem:[%s2909 + $0x28] sm:$0xff]
    %v2916 = vld [vmem:[%s2909 + $0x30] sm:$0xff]
    %v2917 = vld [vmem:[%s2909 + $0x38] sm:$0xff]
    %v2918 = vld [vmem:[%s2909 + $0x40] sm:$0xff]
    %v2919 = vld [vmem:[%s2909 + $0x48] sm:$0xff]
    %v2920 = vld [vmem:[%s2909 + $0x50] sm:$0xff]
    %v2921 = vld [vmem:[%s2909 + $0x58] sm:$0xff]
    %v2922 = vld [vmem:[%s2909 + $0x60] sm:$0xff]
    %v2923 = vld [vmem:[%s2909 + $0x68] sm:$0xff]
    %v2924 = vld [vmem:[%s2909 + $0x70] sm:$0xff]
    %v2925 = vld [vmem:[%s2909 + $0x78] sm:$0xff]
    %2926 = vmatprep.subr.mxu0 0.0
    %2927 = vmatpush1.msra.mxu0 %v2925
    %2928 = vmatprep.subr.mxu0 0.0
    %2929 = vmatpush1.msra.mxu0 %v2924
    %2930 = vmatprep.subr.mxu0 0.0
    %2931 = vmatpush1.msra.mxu0 %v2923
    %2932 = vmatprep.subr.mxu0 0.0
    %2933 = vmatpush1.msra.mxu0 %v2922
    %2934 = vmatprep.subr.mxu0 0.0
    %2935 = vmatpush1.msra.mxu0 %v2921
    %2936 = vmatprep.subr.mxu0 0.0
    %2937 = vmatpush1.msra.mxu0 %v2920
    %2938 = vmatprep.subr.mxu0 0.0
    %2939 = vmatpush1.msra.mxu0 %v2919
    %2940 = vmatprep.subr.mxu0 0.0
    %2941 = vmatpush1.msra.mxu0 %v2918
    %2942 = vmatprep.subr.mxu0 0.0
    %2943 = vmatpush1.msra.mxu0 %v2917
    %2944 = vmatprep.subr.mxu0 0.0
    %2945 = vmatpush1.msra.mxu0 %v2916
    %2946 = vmatprep.subr.mxu0 0.0
    %2947 = vmatpush1.msra.mxu0 %v2915
    %2948 = vmatprep.subr.mxu0 0.0
    %2949 = vmatpush1.msra.mxu0 %v2914
    %2950 = vmatprep.subr.mxu0 0.0
    %2951 = vmatpush1.msra.mxu0 %v2913
    %2952 = vmatprep.subr.mxu0 0.0
    %2953 = vmatpush1.msra.mxu0 %v2912
    %2954 = vmatprep.subr.mxu0 0.0
    %2955 = vmatpush1.msra.mxu0 %v2911
    %2956 = vmatprep.subr.mxu0 0.0
    %2957 = vmatpush1.msra.mxu0 %v2910
    %2958 = vmatprep.subr.mxu0 0.0
    %2959 = vmatpush2.msra.mxu0 0.0
    %2960 = vmatprep.subr.mxu0 0.0
    %2961 = vmatpush2.msra.mxu0 0.0
    %2962 = vmatprep.subr.mxu0 0.0
    %2963 = vmatpush2.msra.mxu0 0.0
    %2964 = vmatprep.subr.mxu0 0.0
    %2965 = vmatpush2.msra.mxu0 0.0
    %2966 = vmatprep.subr.mxu0 0.0
    %2967 = vmatpush2.msra.mxu0 0.0
    %2968 = vmatprep.subr.mxu0 0.0
    %2969 = vmatpush2.msra.mxu0 0.0
    %2970 = vmatprep.subr.mxu0 0.0
    %2971 = vmatpush2.msra.mxu0 0.0
    %2972 = vmatprep.subr.mxu0 0.0
    %2973 = vmatpush2.msra.mxu0 0.0
    %2974 = vmatprep.subr.mxu0 0.0
    %2975 = vmatpush2.msra.mxu0 0.0
    %2976 = vmatprep.subr.mxu0 0.0
    %2977 = vmatpush2.msra.mxu0 0.0
    %2978 = vmatprep.subr.mxu0 0.0
    %2979 = vmatpush2.msra.mxu0 0.0
    %2980 = vmatprep.subr.mxu0 0.0
    %2981 = vmatpush2.msra.mxu0 0.0
    %2982 = vmatprep.subr.mxu0 0.0
    %2983 = vmatpush2.msra.mxu0 0.0
    %2984 = vmatprep.subr.mxu0 0.0
    %2985 = vmatpush2.msra.mxu0 0.0
    %2986 = vmatprep.subr.mxu0 0.0
    %2987 = vmatpush2.msra.mxu0 0.0
    %2988 = vmatprep.subr.mxu0 0.0
    %2989 = vmatpush2.msra.mxu0 0.0
    %2990 = vmatprep.mubr.f32.mxu0 0.0
    %2991 = vmatmul.mubr.f32.gmra.mxu0 %v2394
    %v2992 = vpop.f32.mrf.mxu0
    %v2993 = vadd.f32 0.0, %v2992
    %v2994 = vpop.f32.mrf.mxu0
    %2995 = vmatprep.mubr.f32.mxu0 0.0
    %2996 = vmatmul.mubr.f32.gmra.mxu0 %v2395
    %v2997 = vpop.f32.mrf.mxu0
    %v2998 = vadd.f32 0.0, %v2997
    %v2999 = vpop.f32.mrf.mxu0
    %3000 = vmatprep.mubr.f32.mxu0 0.0
    %3001 = vmatmul.mubr.f32.gmra.mxu0 %v2396
    %v3002 = vpop.f32.mrf.mxu0
    %v3003 = vadd.f32 0.0, %v3002
    %v3004 = vpop.f32.mrf.mxu0
    %3005 = vmatprep.mubr.f32.mxu0 0.0
    %3006 = vmatmul.mubr.f32.gmra.mxu0 %v2397
    %v3007 = vpop.f32.mrf.mxu0
    %v3008 = vadd.f32 0.0, %v3007
    %v3009 = vpop.f32.mrf.mxu0
    %3010 = vmatprep.mubr.f32.mxu0 0.0
    %3011 = vmatmul.mubr.f32.gmra.mxu0 %v2398
    %v3012 = vpop.f32.mrf.mxu0
    %v3013 = vadd.f32 0.0, %v3012
    %v3014 = vpop.f32.mrf.mxu0
    %3015 = vmatprep.mubr.f32.mxu0 0.0
    %3016 = vmatmul.mubr.f32.gmra.mxu0 %v2399
    %v3017 = vpop.f32.mrf.mxu0
    %v3018 = vadd.f32 0.0, %v3017
    %v3019 = vpop.f32.mrf.mxu0
    %3020 = vmatprep.mubr.f32.mxu0 0.0
    %3021 = vmatmul.mubr.f32.gmra.mxu0 %v2400
    %v3022 = vpop.f32.mrf.mxu0
    %v3023 = vadd.f32 0.0, %v3022
    %v3024 = vpop.f32.mrf.mxu0
    %3025 = vmatprep.mubr.f32.mxu0 0.0
    %3026 = vmatmul.mubr.f32.gmra.mxu0 %v2401
    %v3027 = vpop.f32.mrf.mxu0
    %v3028 = vadd.f32 0.0, %v3027
    %v3029 = vpop.f32.mrf.mxu0
    %3030 = vmatprep.mubr.f32.mxu0 0.0
    %3031 = vmatmul.mubr.f32.gmra.mxu0 %v2402
    %v3032 = vpop.f32.mrf.mxu0
    %v3033 = vadd.f32 0.0, %v3032
    %v3034 = vpop.f32.mrf.mxu0
    %3035 = vmatprep.mubr.f32.mxu0 0.0
    %3036 = vmatmul.mubr.f32.gmra.mxu0 %v2403
    %v3037 = vpop.f32.mrf.mxu0
    %v3038 = vadd.f32 0.0, %v3037
    %v3039 = vpop.f32.mrf.mxu0
    %3040 = vmatprep.mubr.f32.mxu0 0.0
    %3041 = vmatmul.mubr.f32.gmra.mxu0 %v2404
    %v3042 = vpop.f32.mrf.mxu0
    %v3043 = vadd.f32 0.0, %v3042
    %v3044 = vpop.f32.mrf.mxu0
    %3045 = vmatprep.mubr.f32.mxu0 0.0
    %3046 = vmatmul.mubr.f32.gmra.mxu0 %v2405
    %v3047 = vpop.f32.mrf.mxu0
    %v3048 = vadd.f32 0.0, %v3047
    %v3049 = vpop.f32.mrf.mxu0
    %3050 = vmatprep.mubr.f32.mxu0 0.0
    %3051 = vmatmul.mubr.f32.gmra.mxu0 %v2406
    %v3052 = vpop.f32.mrf.mxu0
    %v3053 = vadd.f32 0.0, %v3052
    %v3054 = vpop.f32.mrf.mxu0
    %3055 = vmatprep.mubr.f32.mxu0 0.0
    %3056 = vmatmul.mubr.f32.gmra.mxu0 %v2407
    %v3057 = vpop.f32.mrf.mxu0
    %v3058 = vadd.f32 0.0, %v3057
    %v3059 = vpop.f32.mrf.mxu0
    %3060 = vmatprep.mubr.f32.mxu0 0.0
    %3061 = vmatmul.mubr.f32.gmra.mxu0 %v2408
    %v3062 = vpop.f32.mrf.mxu0
    %v3063 = vadd.f32 0.0, %v3062
    %v3064 = vpop.f32.mrf.mxu0
    %3065 = vmatprep.mubr.f32.mxu0 0.0
    %3066 = vmatmul.mubr.f32.gmra.mxu0 %v2409
    %v3067 = vpop.f32.mrf.mxu0
    %v3068 = vadd.f32 0.0, %v3067
    %v3069 = vpop.f32.mrf.mxu0
    %3070 = vmatprep.mubr.f32.mxu0 0.0
    %3071 = vmatmul.mubr.f32.gmra.mxu0 %v2410
    %v3072 = vpop.f32.mrf.mxu0
    %v3073 = vadd.f32 0.0, %v3072
    %v3074 = vpop.f32.mrf.mxu0
    %3075 = vmatprep.mubr.f32.mxu0 0.0
    %3076 = vmatmul.mubr.f32.gmra.mxu0 %v2411
    %v3077 = vpop.f32.mrf.mxu0
    %v3078 = vadd.f32 0.0, %v3077
    %v3079 = vpop.f32.mrf.mxu0
    %3080 = vmatprep.mubr.f32.mxu0 0.0
    %3081 = vmatmul.mubr.f32.gmra.mxu0 %v2412
    %v3082 = vpop.f32.mrf.mxu0
    %v3083 = vadd.f32 0.0, %v3082
    %v3084 = vpop.f32.mrf.mxu0
    %3085 = vmatprep.mubr.f32.mxu0 0.0
    %3086 = vmatmul.mubr.f32.gmra.mxu0 %v2413
    %v3087 = vpop.f32.mrf.mxu0
    %v3088 = vadd.f32 0.0, %v3087
    %v3089 = vpop.f32.mrf.mxu0
    %3090 = vmatprep.mubr.f32.mxu0 0.0
    %3091 = vmatmul.mubr.f32.gmra.mxu0 %v2414
    %v3092 = vpop.f32.mrf.mxu0
    %v3093 = vadd.f32 0.0, %v3092
    %v3094 = vpop.f32.mrf.mxu0
    %3095 = vmatprep.mubr.f32.mxu0 0.0
    %3096 = vmatmul.mubr.f32.gmra.mxu0 %v2415
    %v3097 = vpop.f32.mrf.mxu0
    %v3098 = vadd.f32 0.0, %v3097
    %v3099 = vpop.f32.mrf.mxu0
    %3100 = vmatprep.mubr.f32.mxu0 0.0
    %3101 = vmatmul.mubr.f32.gmra.mxu0 %v2416
    %v3102 = vpop.f32.mrf.mxu0
    %v3103 = vadd.f32 0.0, %v3102
    %v3104 = vpop.f32.mrf.mxu0
    %3105 = vmatprep.mubr.f32.mxu0 0.0
    %3106 = vmatmul.mubr.f32.gmra.mxu0 %v2417
    %v3107 = vpop.f32.mrf.mxu0
    %v3108 = vadd.f32 0.0, %v3107
    %v3109 = vpop.f32.mrf.mxu0
    %3110 = vmatprep.mubr.f32.mxu0 0.0
    %3111 = vmatmul.mubr.f32.gmra.mxu0 %v2418
    %v3112 = vpop.f32.mrf.mxu0
    %v3113 = vadd.f32 0.0, %v3112
    %v3114 = vpop.f32.mrf.mxu0
    %3115 = vmatprep.mubr.f32.mxu0 0.0
    %3116 = vmatmul.mubr.f32.gmra.mxu0 %v2419
    %v3117 = vpop.f32.mrf.mxu0
    %v3118 = vadd.f32 0.0, %v3117
    %v3119 = vpop.f32.mrf.mxu0
    %3120 = vmatprep.mubr.f32.mxu0 0.0
    %3121 = vmatmul.mubr.f32.gmra.mxu0 %v2420
    %v3122 = vpop.f32.mrf.mxu0
    %v3123 = vadd.f32 0.0, %v3122
    %v3124 = vpop.f32.mrf.mxu0
    %3125 = vmatprep.mubr.f32.mxu0 0.0
    %3126 = vmatmul.mubr.f32.gmra.mxu0 %v2421
    %v3127 = vpop.f32.mrf.mxu0
    %v3128 = vadd.f32 0.0, %v3127
    %v3129 = vpop.f32.mrf.mxu0
    %3130 = vmatprep.mubr.f32.mxu0 0.0
    %3131 = vmatmul.mubr.f32.gmra.mxu0 %v2422
    %v3132 = vpop.f32.mrf.mxu0
    %v3133 = vadd.f32 0.0, %v3132
    %v3134 = vpop.f32.mrf.mxu0
    %3135 = vmatprep.mubr.f32.mxu0 0.0
    %3136 = vmatmul.mubr.f32.gmra.mxu0 %v2423
    %v3137 = vpop.f32.mrf.mxu0
    %v3138 = vadd.f32 0.0, %v3137
    %v3139 = vpop.f32.mrf.mxu0
    %3140 = vmatprep.mubr.f32.mxu0 0.0
    %3141 = vmatmul.mubr.f32.gmra.mxu0 %v2424
    %v3142 = vpop.f32.mrf.mxu0
    %v3143 = vadd.f32 0.0, %v3142
    %v3144 = vpop.f32.mrf.mxu0
    %3145 = vmatprep.mubr.f32.mxu0 0.0
    %3146 = vmatmul.mubr.f32.gmra.mxu0 %v2425
    %v3147 = vpop.f32.mrf.mxu0
    %v3148 = vadd.f32 0.0, %v3147
    %v3149 = vpop.f32.mrf.mxu0
    %3150 = vdwg.mxu0
    %v3151 = vadd.f32 %v2751, %v2993
    %v3152 = vadd.f32 %v2756, %v2998
    %v3153 = vadd.f32 %v2761, %v3003
    %v3154 = vadd.f32 %v2766, %v3008
    %v3155 = vadd.f32 %v2771, %v3013
    %v3156 = vadd.f32 %v2776, %v3018
    %v3157 = vadd.f32 %v2781, %v3023
    %v3158 = vadd.f32 %v2786, %v3028
    %v3159 = vadd.f32 %v2791, %v3033
    %v3160 = vadd.f32 %v2796, %v3038
    %v3161 = vadd.f32 %v2801, %v3043
    %v3162 = vadd.f32 %v2806, %v3048
    %v3163 = vadd.f32 %v2811, %v3053
    %v3164 = vadd.f32 %v2816, %v3058
    %v3165 = vadd.f32 %v2821, %v3063
    %v3166 = vadd.f32 %v2826, %v3068
    %v3167 = vadd.f32 %v2831, %v3073
    %v3168 = vadd.f32 %v2836, %v3078
    %v3169 = vadd.f32 %v2841, %v3083
    %v3170 = vadd.f32 %v2846, %v3088
    %v3171 = vadd.f32 %v2851, %v3093
    %v3172 = vadd.f32 %v2856, %v3098
    %v3173 = vadd.f32 %v2861, %v3103
    %v3174 = vadd.f32 %v2866, %v3108
    %v3175 = vadd.f32 %v2871, %v3113
    %v3176 = vadd.f32 %v2876, %v3118
    %v3177 = vadd.f32 %v2881, %v3123
    %v3178 = vadd.f32 %v2886, %v3128
    %v3179 = vadd.f32 %v2891, %v3133
    %v3180 = vadd.f32 %v2896, %v3138
    %v3181 = vadd.f32 %v2901, %v3143
    %v3182 = vadd.f32 %v2906, %v3148
    %v3183 = vld [vmem:[%s10] sm:$0x1]
    %v3185 = vlaneseq
    %v3186 = vshrl.u32 %v3185, 7
    %v3187 = vsub.s32 0, %v3186
    %v3188 = vrot.slane %v3183, %v3187
    %v3190 = vmul.f32 %v3151, %v3188
    %v3191 = vmul.f32 %v3152, %v3188
    %v3192 = vmul.f32 %v3153, %v3188
    %v3193 = vmul.f32 %v3154, %v3188
    %v3194 = vmul.f32 %v3155, %v3188
    %v3195 = vmul.f32 %v3156, %v3188
    %v3196 = vmul.f32 %v3157, %v3188
    %v3197 = vmul.f32 %v3158, %v3188
    %v3198 = vmul.f32 %v3159, %v3188
    %v3199 = vmul.f32 %v3160, %v3188
    %v3200 = vmul.f32 %v3161, %v3188
    %v3201 = vmul.f32 %v3162, %v3188
    %v3202 = vmul.f32 %v3163, %v3188
    %v3203 = vmul.f32 %v3164, %v3188
    %v3204 = vmul.f32 %v3165, %v3188
    %v3205 = vmul.f32 %v3166, %v3188
    %v3206 = vmul.f32 %v3167, %v3188
    %v3207 = vmul.f32 %v3168, %v3188
    %v3208 = vmul.f32 %v3169, %v3188
    %v3209 = vmul.f32 %v3170, %v3188
    %v3210 = vmul.f32 %v3171, %v3188
    %v3211 = vmul.f32 %v3172, %v3188
    %v3212 = vmul.f32 %v3173, %v3188
    %v3213 = vmul.f32 %v3174, %v3188
    %v3214 = vmul.f32 %v3175, %v3188
    %v3215 = vmul.f32 %v3176, %v3188
    %v3216 = vmul.f32 %v3177, %v3188
    %v3217 = vmul.f32 %v3178, %v3188
    %v3218 = vmul.f32 %v3179, %v3188
    %v3219 = vmul.f32 %v3180, %v3188
    %v3220 = vmul.f32 %v3181, %v3188
    %v3221 = vmul.f32 %v3182, %v3188
    %v3222 = vld [vmem:[%s11] sm:$0x1]
    %v3224 = vlaneseq
    %v3225 = vshrl.u32 %v3224, 7
    %v3226 = vsub.s32 0, %v3225
    %v3227 = vrot.slane %v3222, %v3226
    %v3229 = vadd.f32 %v3190, %v3227
    %v3230 = vadd.f32 %v3191, %v3227
    %v3231 = vadd.f32 %v3192, %v3227
    %v3232 = vadd.f32 %v3193, %v3227
    %v3233 = vadd.f32 %v3194, %v3227
    %v3234 = vadd.f32 %v3195, %v3227
    %v3235 = vadd.f32 %v3196, %v3227
    %v3236 = vadd.f32 %v3197, %v3227
    %v3237 = vadd.f32 %v3198, %v3227
    %v3238 = vadd.f32 %v3199, %v3227
    %v3239 = vadd.f32 %v3200, %v3227
    %v3240 = vadd.f32 %v3201, %v3227
    %v3241 = vadd.f32 %v3202, %v3227
    %v3242 = vadd.f32 %v3203, %v3227
    %v3243 = vadd.f32 %v3204, %v3227
    %v3244 = vadd.f32 %v3205, %v3227
    %v3245 = vadd.f32 %v3206, %v3227
    %v3246 = vadd.f32 %v3207, %v3227
    %v3247 = vadd.f32 %v3208, %v3227
    %v3248 = vadd.f32 %v3209, %v3227
    %v3249 = vadd.f32 %v3210, %v3227
    %v3250 = vadd.f32 %v3211, %v3227
    %v3251 = vadd.f32 %v3212, %v3227
    %v3252 = vadd.f32 %v3213, %v3227
    %v3253 = vadd.f32 %v3214, %v3227
    %v3254 = vadd.f32 %v3215, %v3227
    %v3255 = vadd.f32 %v3216, %v3227
    %v3256 = vadd.f32 %v3217, %v3227
    %v3257 = vadd.f32 %v3218, %v3227
    %v3258 = vadd.f32 %v3219, %v3227
    %v3259 = vadd.f32 %v3220, %v3227
    %v3260 = vadd.f32 %v3221, %v3227
    %v3261 = vmax.f32 %v3229, 0.0
    %v3262 = vmax.f32 %v3230, 0.0
    %v3263 = vmax.f32 %v3231, 0.0
    %v3264 = vmax.f32 %v3232, 0.0
    %v3265 = vmax.f32 %v3233, 0.0
    %v3266 = vmax.f32 %v3234, 0.0
    %v3267 = vmax.f32 %v3235, 0.0
    %v3268 = vmax.f32 %v3236, 0.0
    %v3269 = vmax.f32 %v3237, 0.0
    %v3270 = vmax.f32 %v3238, 0.0
    %v3271 = vmax.f32 %v3239, 0.0
    %v3272 = vmax.f32 %v3240, 0.0
    %v3273 = vmax.f32 %v3241, 0.0
    %v3274 = vmax.f32 %v3242, 0.0
    %v3275 = vmax.f32 %v3243, 0.0
    %v3276 = vmax.f32 %v3244, 0.0
    %v3277 = vmax.f32 %v3245, 0.0
    %v3278 = vmax.f32 %v3246, 0.0
    %v3279 = vmax.f32 %v3247, 0.0
    %v3280 = vmax.f32 %v3248, 0.0
    %v3281 = vmax.f32 %v3249, 0.0
    %v3282 = vmax.f32 %v3250, 0.0
    %v3283 = vmax.f32 %v3251, 0.0
    %v3284 = vmax.f32 %v3252, 0.0
    %v3285 = vmax.f32 %v3253, 0.0
    %v3286 = vmax.f32 %v3254, 0.0
    %v3287 = vmax.f32 %v3255, 0.0
    %v3288 = vmax.f32 %v3256, 0.0
    %v3289 = vmax.f32 %v3257, 0.0
    %v3290 = vmax.f32 %v3258, 0.0
    %v3291 = vmax.f32 %v3259, 0.0
    %v3292 = vmax.f32 %v3260, 0.0
    %v3293 = vld [vmem:[%s12] sm:$0xff]
    %v3294 = vld [vmem:[%s12 + $0x8] sm:$0xff]
    %v3295 = vld [vmem:[%s12 + $0x10] sm:$0xff]
    %v3296 = vld [vmem:[%s12 + $0x18] sm:$0xff]
    %v3297 = vld [vmem:[%s12 + $0x20] sm:$0xff]
    %v3298 = vld [vmem:[%s12 + $0x28] sm:$0xff]
    %v3299 = vld [vmem:[%s12 + $0x30] sm:$0xff]
    %v3300 = vld [vmem:[%s12 + $0x38] sm:$0xff]
    %v3302 = vsel %vm654, %v3261, 0
    %v3305 = vsel %vm654, %v3262, 0
    %v3308 = vsel %vm654, %v3263, 0
    %v3311 = vsel %vm654, %v3264, 0
    %v3314 = vsel %vm654, %v3265, 0
    %v3317 = vsel %vm654, %v3266, 0
    %v3320 = vsel %vm654, %v3267, 0
    %v3323 = vsel %vm654, %v3268, 0
    %v3326 = vsel %vm654, %v3269, 0
    %v3329 = vsel %vm654, %v3270, 0
    %v3332 = vsel %vm654, %v3271, 0
    %v3335 = vsel %vm654, %v3272, 0
    %v3338 = vsel %vm654, %v3273, 0
    %v3341 = vsel %vm654, %v3274, 0
    %v3344 = vsel %vm654, %v3275, 0
    %v3347 = vsel %vm654, %v3276, 0
    %v3350 = vsel %vm654, %v3277, 0
    %v3353 = vsel %vm654, %v3278, 0
    %v3356 = vsel %vm654, %v3279, 0
    %v3359 = vsel %vm654, %v3280, 0
    %v3362 = vsel %vm654, %v3281, 0
    %v3365 = vsel %vm654, %v3282, 0
    %v3368 = vsel %vm654, %v3283, 0
    %v3371 = vsel %vm654, %v3284, 0
    %v3374 = vsel %vm654, %v3285, 0
    %v3377 = vsel %vm654, %v3286, 0
    %v3380 = vsel %vm654, %v3287, 0
    %v3383 = vsel %vm654, %v3288, 0
    %v3386 = vsel %vm654, %v3289, 0
    %v3389 = vsel %vm654, %v3290, 0
    %v3392 = vsel %vm654, %v3291, 0
    %v3395 = vsel %vm654, %v3292, 0
    %3397 = vmatprep.subr.mxu0 0.0
    %3398 = vmatpush1.msra.mxu0 0.0
    %3399 = vmatprep.subr.mxu0 0.0
    %3400 = vmatpush1.msra.mxu0 0.0
    %3401 = vmatprep.subr.mxu0 0.0
    %3402 = vmatpush1.msra.mxu0 0.0
    %3403 = vmatprep.subr.mxu0 0.0
    %3404 = vmatpush1.msra.mxu0 0.0
    %3405 = vmatprep.subr.mxu0 0.0
    %3406 = vmatpush1.msra.mxu0 0.0
    %3407 = vmatprep.subr.mxu0 0.0
    %3408 = vmatpush1.msra.mxu0 0.0
    %3409 = vmatprep.subr.mxu0 0.0
    %3410 = vmatpush1.msra.mxu0 0.0
    %3411 = vmatprep.subr.mxu0 0.0
    %3412 = vmatpush1.msra.mxu0 0.0
    %3413 = vmatprep.subr.mxu0 0.0
    %3414 = vmatpush1.msra.mxu0 %v3300
    %3415 = vmatprep.subr.mxu0 0.0
    %3416 = vmatpush1.msra.mxu0 %v3299
    %3417 = vmatprep.subr.mxu0 0.0
    %3418 = vmatpush1.msra.mxu0 %v3298
    %3419 = vmatprep.subr.mxu0 0.0
    %3420 = vmatpush1.msra.mxu0 %v3297
    %3421 = vmatprep.subr.mxu0 0.0
    %3422 = vmatpush1.msra.mxu0 %v3296
    %3423 = vmatprep.subr.mxu0 0.0
    %3424 = vmatpush1.msra.mxu0 %v3295
    %3425 = vmatprep.subr.mxu0 0.0
    %3426 = vmatpush1.msra.mxu0 %v3294
    %3427 = vmatprep.subr.mxu0 0.0
    %3428 = vmatpush1.msra.mxu0 %v3293
    %3429 = vmatprep.subr.mxu0 0.0
    %3430 = vmatpush2.msra.mxu0 0.0
    %3431 = vmatprep.subr.mxu0 0.0
    %3432 = vmatpush2.msra.mxu0 0.0
    %3433 = vmatprep.subr.mxu0 0.0
    %3434 = vmatpush2.msra.mxu0 0.0
    %3435 = vmatprep.subr.mxu0 0.0
    %3436 = vmatpush2.msra.mxu0 0.0
    %3437 = vmatprep.subr.mxu0 0.0
    %3438 = vmatpush2.msra.mxu0 0.0
    %3439 = vmatprep.subr.mxu0 0.0
    %3440 = vmatpush2.msra.mxu0 0.0
    %3441 = vmatprep.subr.mxu0 0.0
    %3442 = vmatpush2.msra.mxu0 0.0
    %3443 = vmatprep.subr.mxu0 0.0
    %3444 = vmatpush2.msra.mxu0 0.0
    %3445 = vmatprep.subr.mxu0 0.0
    %3446 = vmatpush2.msra.mxu0 0.0
    %3447 = vmatprep.subr.mxu0 0.0
    %3448 = vmatpush2.msra.mxu0 0.0
    %3449 = vmatprep.subr.mxu0 0.0
    %3450 = vmatpush2.msra.mxu0 0.0
    %3451 = vmatprep.subr.mxu0 0.0
    %3452 = vmatpush2.msra.mxu0 0.0
    %3453 = vmatprep.subr.mxu0 0.0
    %3454 = vmatpush2.msra.mxu0 0.0
    %3455 = vmatprep.subr.mxu0 0.0
    %3456 = vmatpush2.msra.mxu0 0.0
    %3457 = vmatprep.subr.mxu0 0.0
    %3458 = vmatpush2.msra.mxu0 0.0
    %3459 = vmatprep.subr.mxu0 0.0
    %3460 = vmatpush2.msra.mxu0 0.0
    %3461 = vmatprep.mubr.f32.mxu0 0.0
    %3462 = vmatmul.mubr.f32.gmra.mxu0 %v3302
    %v3463 = vpop.f32.mrf.mxu0
    %v3464 = vadd.f32 0.0, %v3463
    %v3465 = vpop.f32.mrf.mxu0
    %3466 = vmatprep.mubr.f32.mxu0 0.0
    %3467 = vmatmul.mubr.f32.gmra.mxu0 %v3305
    %v3468 = vpop.f32.mrf.mxu0
    %v3469 = vadd.f32 0.0, %v3468
    %v3470 = vpop.f32.mrf.mxu0
    %3471 = vmatprep.mubr.f32.mxu0 0.0
    %3472 = vmatmul.mubr.f32.gmra.mxu0 %v3308
    %v3473 = vpop.f32.mrf.mxu0
    %v3474 = vadd.f32 0.0, %v3473
    %v3475 = vpop.f32.mrf.mxu0
    %3476 = vmatprep.mubr.f32.mxu0 0.0
    %3477 = vmatmul.mubr.f32.gmra.mxu0 %v3311
    %v3478 = vpop.f32.mrf.mxu0
    %v3479 = vadd.f32 0.0, %v3478
    %v3480 = vpop.f32.mrf.mxu0
    %3481 = vmatprep.mubr.f32.mxu0 0.0
    %3482 = vmatmul.mubr.f32.gmra.mxu0 %v3314
    %v3483 = vpop.f32.mrf.mxu0
    %v3484 = vadd.f32 0.0, %v3483
    %v3485 = vpop.f32.mrf.mxu0
    %3486 = vmatprep.mubr.f32.mxu0 0.0
    %3487 = vmatmul.mubr.f32.gmra.mxu0 %v3317
    %v3488 = vpop.f32.mrf.mxu0
    %v3489 = vadd.f32 0.0, %v3488
    %v3490 = vpop.f32.mrf.mxu0
    %3491 = vmatprep.mubr.f32.mxu0 0.0
    %3492 = vmatmul.mubr.f32.gmra.mxu0 %v3320
    %v3493 = vpop.f32.mrf.mxu0
    %v3494 = vadd.f32 0.0, %v3493
    %v3495 = vpop.f32.mrf.mxu0
    %3496 = vmatprep.mubr.f32.mxu0 0.0
    %3497 = vmatmul.mubr.f32.gmra.mxu0 %v3323
    %v3498 = vpop.f32.mrf.mxu0
    %v3499 = vadd.f32 0.0, %v3498
    %v3500 = vpop.f32.mrf.mxu0
    %3501 = vmatprep.mubr.f32.mxu0 0.0
    %3502 = vmatmul.mubr.f32.gmra.mxu0 %v3326
    %v3503 = vpop.f32.mrf.mxu0
    %v3504 = vadd.f32 0.0, %v3503
    %v3505 = vpop.f32.mrf.mxu0
    %3506 = vmatprep.mubr.f32.mxu0 0.0
    %3507 = vmatmul.mubr.f32.gmra.mxu0 %v3329
    %v3508 = vpop.f32.mrf.mxu0
    %v3509 = vadd.f32 0.0, %v3508
    %v3510 = vpop.f32.mrf.mxu0
    %3511 = vmatprep.mubr.f32.mxu0 0.0
    %3512 = vmatmul.mubr.f32.gmra.mxu0 %v3332
    %v3513 = vpop.f32.mrf.mxu0
    %v3514 = vadd.f32 0.0, %v3513
    %v3515 = vpop.f32.mrf.mxu0
    %3516 = vmatprep.mubr.f32.mxu0 0.0
    %3517 = vmatmul.mubr.f32.gmra.mxu0 %v3335
    %v3518 = vpop.f32.mrf.mxu0
    %v3519 = vadd.f32 0.0, %v3518
    %v3520 = vpop.f32.mrf.mxu0
    %3521 = vmatprep.mubr.f32.mxu0 0.0
    %3522 = vmatmul.mubr.f32.gmra.mxu0 %v3338
    %v3523 = vpop.f32.mrf.mxu0
    %v3524 = vadd.f32 0.0, %v3523
    %v3525 = vpop.f32.mrf.mxu0
    %3526 = vmatprep.mubr.f32.mxu0 0.0
    %3527 = vmatmul.mubr.f32.gmra.mxu0 %v3341
    %v3528 = vpop.f32.mrf.mxu0
    %v3529 = vadd.f32 0.0, %v3528
    %v3530 = vpop.f32.mrf.mxu0
    %3531 = vmatprep.mubr.f32.mxu0 0.0
    %3532 = vmatmul.mubr.f32.gmra.mxu0 %v3344
    %v3533 = vpop.f32.mrf.mxu0
    %v3534 = vadd.f32 0.0, %v3533
    %v3535 = vpop.f32.mrf.mxu0
    %3536 = vmatprep.mubr.f32.mxu0 0.0
    %3537 = vmatmul.mubr.f32.gmra.mxu0 %v3347
    %v3538 = vpop.f32.mrf.mxu0
    %v3539 = vadd.f32 0.0, %v3538
    %v3540 = vpop.f32.mrf.mxu0
    %3541 = vmatprep.mubr.f32.mxu0 0.0
    %3542 = vmatmul.mubr.f32.gmra.mxu0 %v3350
    %v3543 = vpop.f32.mrf.mxu0
    %v3544 = vadd.f32 0.0, %v3543
    %v3545 = vpop.f32.mrf.mxu0
    %3546 = vmatprep.mubr.f32.mxu0 0.0
    %3547 = vmatmul.mubr.f32.gmra.mxu0 %v3353
    %v3548 = vpop.f32.mrf.mxu0
    %v3549 = vadd.f32 0.0, %v3548
    %v3550 = vpop.f32.mrf.mxu0
    %3551 = vmatprep.mubr.f32.mxu0 0.0
    %3552 = vmatmul.mubr.f32.gmra.mxu0 %v3356
    %v3553 = vpop.f32.mrf.mxu0
    %v3554 = vadd.f32 0.0, %v3553
    %v3555 = vpop.f32.mrf.mxu0
    %3556 = vmatprep.mubr.f32.mxu0 0.0
    %3557 = vmatmul.mubr.f32.gmra.mxu0 %v3359
    %v3558 = vpop.f32.mrf.mxu0
    %v3559 = vadd.f32 0.0, %v3558
    %v3560 = vpop.f32.mrf.mxu0
    %3561 = vmatprep.mubr.f32.mxu0 0.0
    %3562 = vmatmul.mubr.f32.gmra.mxu0 %v3362
    %v3563 = vpop.f32.mrf.mxu0
    %v3564 = vadd.f32 0.0, %v3563
    %v3565 = vpop.f32.mrf.mxu0
    %3566 = vmatprep.mubr.f32.mxu0 0.0
    %3567 = vmatmul.mubr.f32.gmra.mxu0 %v3365
    %v3568 = vpop.f32.mrf.mxu0
    %v3569 = vadd.f32 0.0, %v3568
    %v3570 = vpop.f32.mrf.mxu0
    %3571 = vmatprep.mubr.f32.mxu0 0.0
    %3572 = vmatmul.mubr.f32.gmra.mxu0 %v3368
    %v3573 = vpop.f32.mrf.mxu0
    %v3574 = vadd.f32 0.0, %v3573
    %v3575 = vpop.f32.mrf.mxu0
    %3576 = vmatprep.mubr.f32.mxu0 0.0
    %3577 = vmatmul.mubr.f32.gmra.mxu0 %v3371
    %v3578 = vpop.f32.mrf.mxu0
    %v3579 = vadd.f32 0.0, %v3578
    %v3580 = vpop.f32.mrf.mxu0
    %3581 = vmatprep.mubr.f32.mxu0 0.0
    %3582 = vmatmul.mubr.f32.gmra.mxu0 %v3374
    %v3583 = vpop.f32.mrf.mxu0
    %v3584 = vadd.f32 0.0, %v3583
    %v3585 = vpop.f32.mrf.mxu0
    %3586 = vmatprep.mubr.f32.mxu0 0.0
    %3587 = vmatmul.mubr.f32.gmra.mxu0 %v3377
    %v3588 = vpop.f32.mrf.mxu0
    %v3589 = vadd.f32 0.0, %v3588
    %v3590 = vpop.f32.mrf.mxu0
    %3591 = vmatprep.mubr.f32.mxu0 0.0
    %3592 = vmatmul.mubr.f32.gmra.mxu0 %v3380
    %v3593 = vpop.f32.mrf.mxu0
    %v3594 = vadd.f32 0.0, %v3593
    %v3595 = vpop.f32.mrf.mxu0
    %3596 = vmatprep.mubr.f32.mxu0 0.0
    %3597 = vmatmul.mubr.f32.gmra.mxu0 %v3383
    %v3598 = vpop.f32.mrf.mxu0
    %v3599 = vadd.f32 0.0, %v3598
    %v3600 = vpop.f32.mrf.mxu0
    %3601 = vmatprep.mubr.f32.mxu0 0.0
    %3602 = vmatmul.mubr.f32.gmra.mxu0 %v3386
    %v3603 = vpop.f32.mrf.mxu0
    %v3604 = vadd.f32 0.0, %v3603
    %v3605 = vpop.f32.mrf.mxu0
    %3606 = vmatprep.mubr.f32.mxu0 0.0
    %3607 = vmatmul.mubr.f32.gmra.mxu0 %v3389
    %v3608 = vpop.f32.mrf.mxu0
    %v3609 = vadd.f32 0.0, %v3608
    %v3610 = vpop.f32.mrf.mxu0
    %3611 = vmatprep.mubr.f32.mxu0 0.0
    %3612 = vmatmul.mubr.f32.gmra.mxu0 %v3392
    %v3613 = vpop.f32.mrf.mxu0
    %v3614 = vadd.f32 0.0, %v3613
    %v3615 = vpop.f32.mrf.mxu0
    %3616 = vmatprep.mubr.f32.mxu0 0.0
    %3617 = vmatmul.mubr.f32.gmra.mxu0 %v3395
    %v3618 = vpop.f32.mrf.mxu0
    %v3619 = vadd.f32 0.0, %v3618
    %v3620 = vpop.f32.mrf.mxu0
    %3621 = vdwg.mxu0
    %v3622 = vld [vmem:[%s13] sm:$0xff]
    %v3623 = vld [vmem:[%s13 + $0x8] sm:$0xff]
    %v3624 = vld [vmem:[%s13 + $0x10] sm:$0xff]
    %v3625 = vld [vmem:[%s13 + $0x18] sm:$0xff]
    %v3626 = vld [vmem:[%s13 + $0x20] sm:$0xff]
    %v3627 = vld [vmem:[%s13 + $0x28] sm:$0xff]
    %v3628 = vld [vmem:[%s13 + $0x30] sm:$0xff]
    %v3629 = vld [vmem:[%s13 + $0x38] sm:$0xff]
    %v3630 = vld [vmem:[%s13 + $0x40] sm:$0xff]
    %v3631 = vld [vmem:[%s13 + $0x48] sm:$0xff]
    %v3632 = vld [vmem:[%s13 + $0x50] sm:$0xff]
    %v3633 = vld [vmem:[%s13 + $0x58] sm:$0xff]
    %v3634 = vld [vmem:[%s13 + $0x60] sm:$0xff]
    %v3635 = vld [vmem:[%s13 + $0x68] sm:$0xff]
    %v3636 = vld [vmem:[%s13 + $0x70] sm:$0xff]
    %v3637 = vld [vmem:[%s13 + $0x78] sm:$0xff]
    %v3638 = vld [vmem:[%s13 + $0x80] sm:$0xff]
    %v3639 = vld [vmem:[%s13 + $0x88] sm:$0xff]
    %v3640 = vld [vmem:[%s13 + $0x90] sm:$0xff]
    %v3641 = vld [vmem:[%s13 + $0x98] sm:$0xff]
    %v3642 = vld [vmem:[%s13 + $0xa0] sm:$0xff]
    %v3643 = vld [vmem:[%s13 + $0xa8] sm:$0xff]
    %v3644 = vld [vmem:[%s13 + $0xb0] sm:$0xff]
    %v3645 = vld [vmem:[%s13 + $0xb8] sm:$0xff]
    %v3646 = vld [vmem:[%s13 + $0xc0] sm:$0xff]
    %v3647 = vld [vmem:[%s13 + $0xc8] sm:$0xff]
    %v3648 = vld [vmem:[%s13 + $0xd0] sm:$0xff]
    %v3649 = vld [vmem:[%s13 + $0xd8] sm:$0xff]
    %v3650 = vld [vmem:[%s13 + $0xe0] sm:$0xff]
    %v3651 = vld [vmem:[%s13 + $0xe8] sm:$0xff]
    %v3652 = vld [vmem:[%s13 + $0xf0] sm:$0xff]
    %v3653 = vld [vmem:[%s13 + $0xf8] sm:$0xff]
    %v3654 = vmul.f32 %v3464, %v3622
    %v3655 = vmul.f32 %v3469, %v3623
    %v3656 = vmul.f32 %v3474, %v3624
    %v3657 = vmul.f32 %v3479, %v3625
    %v3658 = vmul.f32 %v3484, %v3626
    %v3659 = vmul.f32 %v3489, %v3627
    %v3660 = vmul.f32 %v3494, %v3628
    %v3661 = vmul.f32 %v3499, %v3629
    %v3662 = vmul.f32 %v3504, %v3630
    %v3663 = vmul.f32 %v3509, %v3631
    %v3664 = vmul.f32 %v3514, %v3632
    %v3665 = vmul.f32 %v3519, %v3633
    %v3666 = vmul.f32 %v3524, %v3634
    %v3667 = vmul.f32 %v3529, %v3635
    %v3668 = vmul.f32 %v3534, %v3636
    %v3669 = vmul.f32 %v3539, %v3637
    %v3670 = vmul.f32 %v3544, %v3638
    %v3671 = vmul.f32 %v3549, %v3639
    %v3672 = vmul.f32 %v3554, %v3640
    %v3673 = vmul.f32 %v3559, %v3641
    %v3674 = vmul.f32 %v3564, %v3642
    %v3675 = vmul.f32 %v3569, %v3643
    %v3676 = vmul.f32 %v3574, %v3644
    %v3677 = vmul.f32 %v3579, %v3645
    %v3678 = vmul.f32 %v3584, %v3646
    %v3679 = vmul.f32 %v3589, %v3647
    %v3680 = vmul.f32 %v3594, %v3648
    %v3681 = vmul.f32 %v3599, %v3649
    %v3682 = vmul.f32 %v3604, %v3650
    %v3683 = vmul.f32 %v3609, %v3651
    %v3684 = vmul.f32 %v3614, %v3652
    %v3685 = vmul.f32 %v3619, %v3653
    %v3686 = vld [vmem:[%s14] sm:$0xff]
    %v3687 = vld [vmem:[%s14 + $0x8] sm:$0xff]
    %v3688 = vld [vmem:[%s14 + $0x10] sm:$0xff]
    %v3689 = vld [vmem:[%s14 + $0x18] sm:$0xff]
    %v3690 = vld [vmem:[%s14 + $0x20] sm:$0xff]
    %v3691 = vld [vmem:[%s14 + $0x28] sm:$0xff]
    %v3692 = vld [vmem:[%s14 + $0x30] sm:$0xff]
    %v3693 = vld [vmem:[%s14 + $0x38] sm:$0xff]
    %v3695 = vsel %vm654, %v3654, 0
    %v3698 = vsel %vm654, %v3655, 0
    %v3701 = vsel %vm654, %v3656, 0
    %v3704 = vsel %vm654, %v3657, 0
    %v3707 = vsel %vm654, %v3658, 0
    %v3710 = vsel %vm654, %v3659, 0
    %v3713 = vsel %vm654, %v3660, 0
    %v3716 = vsel %vm654, %v3661, 0
    %v3719 = vsel %vm654, %v3662, 0
    %v3722 = vsel %vm654, %v3663, 0
    %v3725 = vsel %vm654, %v3664, 0
    %v3728 = vsel %vm654, %v3665, 0
    %v3731 = vsel %vm654, %v3666, 0
    %v3734 = vsel %vm654, %v3667, 0
    %v3737 = vsel %vm654, %v3668, 0
    %v3740 = vsel %vm654, %v3669, 0
    %v3743 = vsel %vm654, %v3670, 0
    %v3746 = vsel %vm654, %v3671, 0
    %v3749 = vsel %vm654, %v3672, 0
    %v3752 = vsel %vm654, %v3673, 0
    %v3755 = vsel %vm654, %v3674, 0
    %v3758 = vsel %vm654, %v3675, 0
    %v3761 = vsel %vm654, %v3676, 0
    %v3764 = vsel %vm654, %v3677, 0
    %v3767 = vsel %vm654, %v3678, 0
    %v3770 = vsel %vm654, %v3679, 0
    %v3773 = vsel %vm654, %v3680, 0
    %v3776 = vsel %vm654, %v3681, 0
    %v3779 = vsel %vm654, %v3682, 0
    %v3782 = vsel %vm654, %v3683, 0
    %v3785 = vsel %vm654, %v3684, 0
    %v3788 = vsel %vm654, %v3685, 0
    %3790 = vmatprep.subr.mxu0 0.0
    %3791 = vmatpush1.msra.mxu0 0.0
    %3792 = vmatprep.subr.mxu0 0.0
    %3793 = vmatpush1.msra.mxu0 0.0
    %3794 = vmatprep.subr.mxu0 0.0
    %3795 = vmatpush1.msra.mxu0 0.0
    %3796 = vmatprep.subr.mxu0 0.0
    %3797 = vmatpush1.msra.mxu0 0.0
    %3798 = vmatprep.subr.mxu0 0.0
    %3799 = vmatpush1.msra.mxu0 0.0
    %3800 = vmatprep.subr.mxu0 0.0
    %3801 = vmatpush1.msra.mxu0 0.0
    %3802 = vmatprep.subr.mxu0 0.0
    %3803 = vmatpush1.msra.mxu0 0.0
    %3804 = vmatprep.subr.mxu0 0.0
    %3805 = vmatpush1.msra.mxu0 0.0
    %3806 = vmatprep.subr.mxu0 0.0
    %3807 = vmatpush1.msra.mxu0 %v3693
    %3808 = vmatprep.subr.mxu0 0.0
    %3809 = vmatpush1.msra.mxu0 %v3692
    %3810 = vmatprep.subr.mxu0 0.0
    %3811 = vmatpush1.msra.mxu0 %v3691
    %3812 = vmatprep.subr.mxu0 0.0
    %3813 = vmatpush1.msra.mxu0 %v3690
    %3814 = vmatprep.subr.mxu0 0.0
    %3815 = vmatpush1.msra.mxu0 %v3689
    %3816 = vmatprep.subr.mxu0 0.0
    %3817 = vmatpush1.msra.mxu0 %v3688
    %3818 = vmatprep.subr.mxu0 0.0
    %3819 = vmatpush1.msra.mxu0 %v3687
    %3820 = vmatprep.subr.mxu0 0.0
    %3821 = vmatpush1.msra.mxu0 %v3686
    %3822 = vmatprep.subr.mxu0 0.0
    %3823 = vmatpush2.msra.mxu0 0.0
    %3824 = vmatprep.subr.mxu0 0.0
    %3825 = vmatpush2.msra.mxu0 0.0
    %3826 = vmatprep.subr.mxu0 0.0
    %3827 = vmatpush2.msra.mxu0 0.0
    %3828 = vmatprep.subr.mxu0 0.0
    %3829 = vmatpush2.msra.mxu0 0.0
    %3830 = vmatprep.subr.mxu0 0.0
    %3831 = vmatpush2.msra.mxu0 0.0
    %3832 = vmatprep.subr.mxu0 0.0
    %3833 = vmatpush2.msra.mxu0 0.0
    %3834 = vmatprep.subr.mxu0 0.0
    %3835 = vmatpush2.msra.mxu0 0.0
    %3836 = vmatprep.subr.mxu0 0.0
    %3837 = vmatpush2.msra.mxu0 0.0
    %3838 = vmatprep.subr.mxu0 0.0
    %3839 = vmatpush2.msra.mxu0 0.0
    %3840 = vmatprep.subr.mxu0 0.0
    %3841 = vmatpush2.msra.mxu0 0.0
    %3842 = vmatprep.subr.mxu0 0.0
    %3843 = vmatpush2.msra.mxu0 0.0
    %3844 = vmatprep.subr.mxu0 0.0
    %3845 = vmatpush2.msra.mxu0 0.0
    %3846 = vmatprep.subr.mxu0 0.0
    %3847 = vmatpush2.msra.mxu0 0.0
    %3848 = vmatprep.subr.mxu0 0.0
    %3849 = vmatpush2.msra.mxu0 0.0
    %3850 = vmatprep.subr.mxu0 0.0
    %3851 = vmatpush2.msra.mxu0 0.0
    %3852 = vmatprep.subr.mxu0 0.0
    %3853 = vmatpush2.msra.mxu0 0.0
    %3854 = vmatprep.mubr.f32.mxu0 0.0
    %3855 = vmatmul.mubr.f32.gmra.mxu0 %v3695
    %v3856 = vpop.f32.mrf.mxu0
    %v3857 = vadd.f32 0.0, %v3856
    %v3858 = vpop.f32.mrf.mxu0
    %3859 = vmatprep.mubr.f32.mxu0 0.0
    %3860 = vmatmul.mubr.f32.gmra.mxu0 %v3698
    %v3861 = vpop.f32.mrf.mxu0
    %v3862 = vadd.f32 0.0, %v3861
    %v3863 = vpop.f32.mrf.mxu0
    %3864 = vmatprep.mubr.f32.mxu0 0.0
    %3865 = vmatmul.mubr.f32.gmra.mxu0 %v3701
    %v3866 = vpop.f32.mrf.mxu0
    %v3867 = vadd.f32 0.0, %v3866
    %v3868 = vpop.f32.mrf.mxu0
    %3869 = vmatprep.mubr.f32.mxu0 0.0
    %3870 = vmatmul.mubr.f32.gmra.mxu0 %v3704
    %v3871 = vpop.f32.mrf.mxu0
    %v3872 = vadd.f32 0.0, %v3871
    %v3873 = vpop.f32.mrf.mxu0
    %3874 = vmatprep.mubr.f32.mxu0 0.0
    %3875 = vmatmul.mubr.f32.gmra.mxu0 %v3707
    %v3876 = vpop.f32.mrf.mxu0
    %v3877 = vadd.f32 0.0, %v3876
    %v3878 = vpop.f32.mrf.mxu0
    %3879 = vmatprep.mubr.f32.mxu0 0.0
    %3880 = vmatmul.mubr.f32.gmra.mxu0 %v3710
    %v3881 = vpop.f32.mrf.mxu0
    %v3882 = vadd.f32 0.0, %v3881
    %v3883 = vpop.f32.mrf.mxu0
    %3884 = vmatprep.mubr.f32.mxu0 0.0
    %3885 = vmatmul.mubr.f32.gmra.mxu0 %v3713
    %v3886 = vpop.f32.mrf.mxu0
    %v3887 = vadd.f32 0.0, %v3886
    %v3888 = vpop.f32.mrf.mxu0
    %3889 = vmatprep.mubr.f32.mxu0 0.0
    %3890 = vmatmul.mubr.f32.gmra.mxu0 %v3716
    %v3891 = vpop.f32.mrf.mxu0
    %v3892 = vadd.f32 0.0, %v3891
    %v3893 = vpop.f32.mrf.mxu0
    %3894 = vmatprep.mubr.f32.mxu0 0.0
    %3895 = vmatmul.mubr.f32.gmra.mxu0 %v3719
    %v3896 = vpop.f32.mrf.mxu0
    %v3897 = vadd.f32 0.0, %v3896
    %v3898 = vpop.f32.mrf.mxu0
    %3899 = vmatprep.mubr.f32.mxu0 0.0
    %3900 = vmatmul.mubr.f32.gmra.mxu0 %v3722
    %v3901 = vpop.f32.mrf.mxu0
    %v3902 = vadd.f32 0.0, %v3901
    %v3903 = vpop.f32.mrf.mxu0
    %3904 = vmatprep.mubr.f32.mxu0 0.0
    %3905 = vmatmul.mubr.f32.gmra.mxu0 %v3725
    %v3906 = vpop.f32.mrf.mxu0
    %v3907 = vadd.f32 0.0, %v3906
    %v3908 = vpop.f32.mrf.mxu0
    %3909 = vmatprep.mubr.f32.mxu0 0.0
    %3910 = vmatmul.mubr.f32.gmra.mxu0 %v3728
    %v3911 = vpop.f32.mrf.mxu0
    %v3912 = vadd.f32 0.0, %v3911
    %v3913 = vpop.f32.mrf.mxu0
    %3914 = vmatprep.mubr.f32.mxu0 0.0
    %3915 = vmatmul.mubr.f32.gmra.mxu0 %v3731
    %v3916 = vpop.f32.mrf.mxu0
    %v3917 = vadd.f32 0.0, %v3916
    %v3918 = vpop.f32.mrf.mxu0
    %3919 = vmatprep.mubr.f32.mxu0 0.0
    %3920 = vmatmul.mubr.f32.gmra.mxu0 %v3734
    %v3921 = vpop.f32.mrf.mxu0
    %v3922 = vadd.f32 0.0, %v3921
    %v3923 = vpop.f32.mrf.mxu0
    %3924 = vmatprep.mubr.f32.mxu0 0.0
    %3925 = vmatmul.mubr.f32.gmra.mxu0 %v3737
    %v3926 = vpop.f32.mrf.mxu0
    %v3927 = vadd.f32 0.0, %v3926
    %v3928 = vpop.f32.mrf.mxu0
    %3929 = vmatprep.mubr.f32.mxu0 0.0
    %3930 = vmatmul.mubr.f32.gmra.mxu0 %v3740
    %v3931 = vpop.f32.mrf.mxu0
    %v3932 = vadd.f32 0.0, %v3931
    %v3933 = vpop.f32.mrf.mxu0
    %3934 = vmatprep.mubr.f32.mxu0 0.0
    %3935 = vmatmul.mubr.f32.gmra.mxu0 %v3743
    %v3936 = vpop.f32.mrf.mxu0
    %v3937 = vadd.f32 0.0, %v3936
    %v3938 = vpop.f32.mrf.mxu0
    %3939 = vmatprep.mubr.f32.mxu0 0.0
    %3940 = vmatmul.mubr.f32.gmra.mxu0 %v3746
    %v3941 = vpop.f32.mrf.mxu0
    %v3942 = vadd.f32 0.0, %v3941
    %v3943 = vpop.f32.mrf.mxu0
    %3944 = vmatprep.mubr.f32.mxu0 0.0
    %3945 = vmatmul.mubr.f32.gmra.mxu0 %v3749
    %v3946 = vpop.f32.mrf.mxu0
    %v3947 = vadd.f32 0.0, %v3946
    %v3948 = vpop.f32.mrf.mxu0
    %3949 = vmatprep.mubr.f32.mxu0 0.0
    %3950 = vmatmul.mubr.f32.gmra.mxu0 %v3752
    %v3951 = vpop.f32.mrf.mxu0
    %v3952 = vadd.f32 0.0, %v3951
    %v3953 = vpop.f32.mrf.mxu0
    %3954 = vmatprep.mubr.f32.mxu0 0.0
    %3955 = vmatmul.mubr.f32.gmra.mxu0 %v3755
    %v3956 = vpop.f32.mrf.mxu0
    %v3957 = vadd.f32 0.0, %v3956
    %v3958 = vpop.f32.mrf.mxu0
    %3959 = vmatprep.mubr.f32.mxu0 0.0
    %3960 = vmatmul.mubr.f32.gmra.mxu0 %v3758
    %v3961 = vpop.f32.mrf.mxu0
    %v3962 = vadd.f32 0.0, %v3961
    %v3963 = vpop.f32.mrf.mxu0
    %3964 = vmatprep.mubr.f32.mxu0 0.0
    %3965 = vmatmul.mubr.f32.gmra.mxu0 %v3761
    %v3966 = vpop.f32.mrf.mxu0
    %v3967 = vadd.f32 0.0, %v3966
    %v3968 = vpop.f32.mrf.mxu0
    %3969 = vmatprep.mubr.f32.mxu0 0.0
    %3970 = vmatmul.mubr.f32.gmra.mxu0 %v3764
    %v3971 = vpop.f32.mrf.mxu0
    %v3972 = vadd.f32 0.0, %v3971
    %v3973 = vpop.f32.mrf.mxu0
    %3974 = vmatprep.mubr.f32.mxu0 0.0
    %3975 = vmatmul.mubr.f32.gmra.mxu0 %v3767
    %v3976 = vpop.f32.mrf.mxu0
    %v3977 = vadd.f32 0.0, %v3976
    %v3978 = vpop.f32.mrf.mxu0
    %3979 = vmatprep.mubr.f32.mxu0 0.0
    %3980 = vmatmul.mubr.f32.gmra.mxu0 %v3770
    %v3981 = vpop.f32.mrf.mxu0
    %v3982 = vadd.f32 0.0, %v3981
    %v3983 = vpop.f32.mrf.mxu0
    %3984 = vmatprep.mubr.f32.mxu0 0.0
    %3985 = vmatmul.mubr.f32.gmra.mxu0 %v3773
    %v3986 = vpop.f32.mrf.mxu0
    %v3987 = vadd.f32 0.0, %v3986
    %v3988 = vpop.f32.mrf.mxu0
    %3989 = vmatprep.mubr.f32.mxu0 0.0
    %3990 = vmatmul.mubr.f32.gmra.mxu0 %v3776
    %v3991 = vpop.f32.mrf.mxu0
    %v3992 = vadd.f32 0.0, %v3991
    %v3993 = vpop.f32.mrf.mxu0
    %3994 = vmatprep.mubr.f32.mxu0 0.0
    %3995 = vmatmul.mubr.f32.gmra.mxu0 %v3779
    %v3996 = vpop.f32.mrf.mxu0
    %v3997 = vadd.f32 0.0, %v3996
    %v3998 = vpop.f32.mrf.mxu0
    %3999 = vmatprep.mubr.f32.mxu0 0.0
    %4000 = vmatmul.mubr.f32.gmra.mxu0 %v3782
    %v4001 = vpop.f32.mrf.mxu0
    %v4002 = vadd.f32 0.0, %v4001
    %v4003 = vpop.f32.mrf.mxu0
    %4004 = vmatprep.mubr.f32.mxu0 0.0
    %4005 = vmatmul.mubr.f32.gmra.mxu0 %v3785
    %v4006 = vpop.f32.mrf.mxu0
    %v4007 = vadd.f32 0.0, %v4006
    %v4008 = vpop.f32.mrf.mxu0
    %4009 = vmatprep.mubr.f32.mxu0 0.0
    %4010 = vmatmul.mubr.f32.gmra.mxu0 %v3788
    %v4011 = vpop.f32.mrf.mxu0
    %v4012 = vadd.f32 0.0, %v4011
    %v4013 = vpop.f32.mrf.mxu0
    %4014 = vdwg.mxu0
    %v4015 = vld [vmem:[%s15] sm:$0xff]
    %v4016 = vld [vmem:[%s15 + $0x8] sm:$0xff]
    %v4017 = vld [vmem:[%s15 + $0x10] sm:$0xff]
    %v4018 = vld [vmem:[%s15 + $0x18] sm:$0xff]
    %v4019 = vld [vmem:[%s16] sm:$0x1]
    %v4021 = vlaneseq
    %v4022 = vshrl.u32 %v4021, 7
    %v4023 = vsub.s32 0, %v4022
    %v4024 = vrot.slane %v4019, %v4023
    %4026 = vmatprep.subr.mxu0 0.0
    %4027 = vmatpush1.msra.mxu0 %v3932
    %4028 = vmatprep.subr.mxu0 0.0
    %4029 = vmatpush1.msra.mxu0 %v3927
    %4030 = vmatprep.subr.mxu0 0.0
    %4031 = vmatpush1.msra.mxu0 %v3922
    %4032 = vmatprep.subr.mxu0 0.0
    %4033 = vmatpush1.msra.mxu0 %v3917
    %4034 = vmatprep.subr.mxu0 0.0
    %4035 = vmatpush1.msra.mxu0 %v3912
    %4036 = vmatprep.subr.mxu0 0.0
    %4037 = vmatpush1.msra.mxu0 %v3907
    %4038 = vmatprep.subr.mxu0 0.0
    %4039 = vmatpush1.msra.mxu0 %v3902
    %4040 = vmatprep.subr.mxu0 0.0
    %4041 = vmatpush1.msra.mxu0 %v3897
    %4042 = vmatprep.subr.mxu0 0.0
    %4043 = vmatpush1.msra.mxu0 %v3892
    %4044 = vmatprep.subr.mxu0 0.0
    %4045 = vmatpush1.msra.mxu0 %v3887
    %4046 = vmatprep.subr.mxu0 0.0
    %4047 = vmatpush1.msra.mxu0 %v3882
    %4048 = vmatprep.subr.mxu0 0.0
    %4049 = vmatpush1.msra.mxu0 %v3877
    %4050 = vmatprep.subr.mxu0 0.0
    %4051 = vmatpush1.msra.mxu0 %v3872
    %4052 = vmatprep.subr.mxu0 0.0
    %4053 = vmatpush1.msra.mxu0 %v3867
    %4054 = vmatprep.subr.mxu0 0.0
    %4055 = vmatpush1.msra.mxu0 %v3862
    %4056 = vmatprep.subr.mxu0 0.0
    %4057 = vmatpush1.msra.mxu0 %v3857
    %4058 = vmatprep.subr.mxu0 0.0
    %4059 = vmatpush2.msra.mxu0 %v4012
    %4060 = vmatprep.subr.mxu0 0.0
    %4061 = vmatpush2.msra.mxu0 %v4007
    %4062 = vmatprep.subr.mxu0 0.0
    %4063 = vmatpush2.msra.mxu0 %v4002
    %4064 = vmatprep.subr.mxu0 0.0
    %4065 = vmatpush2.msra.mxu0 %v3997
    %4066 = vmatprep.subr.mxu0 0.0
    %4067 = vmatpush2.msra.mxu0 %v3992
    %4068 = vmatprep.subr.mxu0 0.0
    %4069 = vmatpush2.msra.mxu0 %v3987
    %4070 = vmatprep.subr.mxu0 0.0
    %4071 = vmatpush2.msra.mxu0 %v3982
    %4072 = vmatprep.subr.mxu0 0.0
    %4073 = vmatpush2.msra.mxu0 %v3977
    %4074 = vmatprep.subr.mxu0 0.0
    %4075 = vmatpush2.msra.mxu0 %v3972
    %4076 = vmatprep.subr.mxu0 0.0
    %4077 = vmatpush2.msra.mxu0 %v3967
    %4078 = vmatprep.subr.mxu0 0.0
    %4079 = vmatpush2.msra.mxu0 %v3962
    %4080 = vmatprep.subr.mxu0 0.0
    %4081 = vmatpush2.msra.mxu0 %v3957
    %4082 = vmatprep.subr.mxu0 0.0
    %4083 = vmatpush2.msra.mxu0 %v3952
    %4084 = vmatprep.subr.mxu0 0.0
    %4085 = vmatpush2.msra.mxu0 %v3947
    %4086 = vmatprep.subr.mxu0 0.0
    %4087 = vmatpush2.msra.mxu0 %v3942
    %4088 = vmatprep.subr.mxu0 0.0
    %4089 = vmatpush2.msra.mxu0 %v3937
    %4090 = vmatprep.mubr.f32.mxu0 %v4016
    %4091 = vmatmul.mubr.f32.gmra.mxu0 %v4015
    %v4092 = vpop.f32.mrf.mxu0
    %v4093 = vadd.f32 %v4024, %v4092
    %v4094 = vpop.f32.mrf.mxu0
    %4095 = vmatprep.mubr.f32.mxu0 %v4018
    %4096 = vmatmul.mubr.f32.gmra.mxu0 %v4017
    %v4097 = vpop.f32.mrf.mxu0
    %v4098 = vadd.f32 %v4024, %v4097
    %v4099 = vpop.f32.mrf.mxu0
    %4100 = vdwg.mxu0
    %4101 = vst [vmem:[#allocation4] sm:$0xff] %v4093
    %4102 = vst [vmem:[#allocation4 + $0x8] sm:$0xff] %v4098
    // Predicated region
    $region70: #{tpu_custom_call.1} parent=1 // pred_check
      _
    $region71: #{tpu_custom_call.1} parent=1 // pred_check_branch
      %4104 = sbr.rel (0) target = $region73
    $region72: #{tpu_custom_call.1} parent=1 // pred_region
      %s4106 = ssub.s32 256, 256
      %4107 = vsyncadd [#allocation5], %s4106
      %s4108 = sshll.u32 [#allocation4], 4
      %s4109 = int_to_ptr.vmem [resolvable:$true] %s4108
      %4114 = dma.vmem_to_hbm [thread:$0]  %s4109, 256, %s17, [#allocation5], 128, 128, 8
    $region73: #{tpu_custom_call.1} parent=1 // pred_fallthru
      _
    // Predicated region
    $region74: #{tpu_custom_call.1} parent=1 // pred_check
      _
    $region75: #{tpu_custom_call.1} parent=1 // pred_check_branch
      %4116 = sbr.rel (0) target = $region77
    $region76: #{tpu_custom_call.1} parent=1 // pred_region
      %4117 = dma.done [#allocation5], 256
    $region77: #{tpu_custom_call.1} parent=1 // pred_fallthru
      _
    %4118 = vsyncpa [#allocation5], 1

</llo_original>
